<compile_context>
chip_gen: v6e
topology: v6e:2x2x1
jax: 0.10.0
libtpu: 0.0.40
codegen_flags: <defaults>
</compile_context>

<pallas_src>
import jax
import jax.numpy as jnp
import numpy as np
from jax.experimental import pallas as pl
from jax.experimental.pallas import tpu as pltpu

NEGATIVE_RATIO = 3.0
EPS = 1e-6

LANES = 128
ROW_ALIGN = 32                 # int8 sublane packing -> row tiles multiple of 32
DEFAULT_TILE_ROWS = 2048       # (2048, 128) f32 = 1 MiB per input per buffer

# ----- histogram / stats layout ---------------------------------------------
MAX_LOSS = 100.0               # BCE log terms clamped at -100 -> loss <= 100
NBINS = 64                     # log-spaced CDF edges
_EDGES = np.geomspace(1e-3, MAX_LOSS, NBINS).astype(np.float32)

ROW_POS_SUM = 0                # sum(loss * positive)
ROW_POS_CNT = 1                # sum(positive)
ROW_NEG_CNT = 2                # sum(negative)
ROW_NEG_SUM = 3                # sum(loss * negative)
ROW_CNT0 = 4                   # counts:  #neg with loss >= EDGES[j]
ROW_SUM0 = 4 + NBINS           # sums :   sum neg loss with loss >= EDGES[j]
NSTAT = 4 + 2 * NBINS          # 132
NSTAT_PAD = ((NSTAT + 7) // 8) * 8   # 136 (sublane-aligned block height)


def _round_up(x, m):
    return ((x + m - 1) // m) * m


def _pick_tile_rows(rows_padded, requested):
    """Largest multiple of ROW_ALIGN that divides rows_padded and is <= requested."""
    t = min(_round_up(max(requested, ROW_ALIGN), ROW_ALIGN), rows_padded)
    t = (t // ROW_ALIGN) * ROW_ALIGN
    while rows_padded % t:
        t -= ROW_ALIGN
    return t


def _bce_stats_kernel(pred_ref, gt_ref, mask_ref, stats_ref):
    """One (tile_rows, 128) tile: BCE stats + per-lane loss-CDF histogram.

    stats_ref block: (1, NSTAT_PAD, 128) f32, per-lane partial sums (the tiny
    lane/tile reduction finishes in XLA).
    """
    pred = pred_ref[...].astype(jnp.float32)
    gt = gt_ref[...].astype(jnp.float32)    # narrow dtype in HBM; widen on VPU
    mask = mask_ref[...].astype(jnp.float32)

    # .byte() truncates toward zero; the products are non-negative -> floor.
    positive = jnp.floor(gt * mask)
    negative = jnp.floor((1.0 - gt) * mask)

    # F.binary_cross_entropy(reduction='none'): each log term clamped at -100.
    log_p = jnp.maximum(jnp.log(pred), -MAX_LOSS)
    log_1mp = jnp.maximum(jnp.log(1.0 - pred), -MAX_LOSS)
    loss = -(gt * log_p + (1.0 - gt) * log_1mp)

    neg_loss = loss * negative              # exactly 0 outside the negative set

    stats_ref[0, ROW_POS_SUM, :] = jnp.sum(loss * positive, axis=0)
    stats_ref[0, ROW_POS_CNT, :] = jnp.sum(positive, axis=0)
    stats_ref[0, ROW_NEG_CNT, :] = jnp.sum(negative, axis=0)
    stats_ref[0, ROW_NEG_SUM, :] = jnp.sum(neg_loss, axis=0)

    # Loss-value CDF histogram (count + masked sum per edge).  Every edge is
    # > 0, so elements outside the negative set (neg_loss == 0) never enter.
    # TODO(synk): move this accumulation onto the MXU (indicator matmul) if
    #             the VPU bin loop becomes the bottleneck at production scale.
    for j, edge in enumerate(_EDGES.tolist()):
        ge = neg_loss >= edge
        stats_ref[0, ROW_CNT0 + j, :] = jnp.sum(jnp.where(ge, 1.0, 0.0), axis=0)
        stats_ref[0, ROW_SUM0 + j, :] = jnp.sum(jnp.where(ge, neg_loss, 0.0), axis=0)
    # Rows NSTAT..NSTAT_PAD-1 are padding and never read.


def balance_cross_entropy_loss(pred, gt, mask,
                               negative_ratio=NEGATIVE_RATIO, eps=EPS,
                               tile_rows=DEFAULT_TILE_ROWS):
    """pred/gt/mask: (N, H, W).  gt/mask may be any dtype (int8 recommended for
    binary maps); soft float gt is also handled (loss uses the float values)."""
    total = int(np.prod(pred.shape))
    rows = -(-total // LANES)                       # cdiv
    rows_padded = _round_up(rows, ROW_ALIGN)
    tile_rows = _pick_tile_rows(rows_padded, tile_rows)
    num_tiles = rows_padded // tile_rows
    padded_total = rows_padded * LANES

    pred_f = pred.reshape(-1)
    gt_f = gt.reshape(-1)
    mask_f = mask.reshape(-1)
    if padded_total != total:
        # Only for maps whose element count is not a multiple of 32*128; the
        # common aligned case (e.g. N x 640 x 640) reshapes with zero copies.
        # Zero padding is inert: mask==0 -> positive==negative==0 and the
        # clamped logs keep loss finite, so padding contributes nothing.
        pad = padded_total - total
        pred_f = jnp.pad(pred_f, (0, pad))
        gt_f = jnp.pad(gt_f, (0, pad))
        mask_f = jnp.pad(mask_f, (0, pad))
    pred2 = pred_f.reshape(rows_padded, LANES)
    gt2 = gt_f.reshape(rows_padded, LANES)
    mask2 = mask_f.reshape(rows_padded, LANES)

    stats = pl.pallas_call(
        _bce_stats_kernel,
        out_shape=jax.ShapeDtypeStruct((num_tiles, NSTAT_PAD, LANES), jnp.float32),
        grid=(num_tiles,),
        in_specs=[
            pl.BlockSpec((tile_rows, LANES), lambda i: (i, 0)),
            pl.BlockSpec((tile_rows, LANES), lambda i: (i, 0)),
            pl.BlockSpec((tile_rows, LANES), lambda i: (i, 0)),
        ],
        out_specs=pl.BlockSpec((1, NSTAT_PAD, LANES), lambda i: (i, 0, 0)),
        compiler_params=pltpu.CompilerParams(
            dimension_semantics=("parallel",),        # megacore / 2-TC sharding
            vmem_limit_bytes=32 * 1024 * 1024,        # headroom over v5e default
        ),
    )(pred2, gt2, mask2)

    # ---- tiny reductions / selection in XLA (O(num_tiles * 136 * 128)) -----
    pos_sum = jnp.sum(stats[:, ROW_POS_SUM, :])
    pos_cnt = jnp.sum(stats[:, ROW_POS_CNT, :].astype(jnp.int32))
    neg_cnt = jnp.sum(stats[:, ROW_NEG_CNT, :].astype(jnp.int32))
    neg_sum = jnp.sum(stats[:, ROW_NEG_SUM, :])
    cnt_cdf = jnp.sum(stats[:, ROW_CNT0:ROW_CNT0 + NBINS, :].astype(jnp.int32),
                      axis=(0, 2))
    sum_cdf = jnp.sum(stats[:, ROW_SUM0:ROW_SUM0 + NBINS, :], axis=(0, 2))

    # negative_count = min(#neg, int(#pos * ratio)); integer arithmetic for the
    # (common) integral ratio so truncation stays exact on huge maps.
    if float(negative_ratio).is_integer():
        cap = pos_cnt * jnp.int32(int(negative_ratio))
    else:
        # TODO(synk): f32 multiply loses exact truncation beyond ~2^24 positives.
        cap = jnp.floor(pos_cnt.astype(jnp.float32) * negative_ratio).astype(jnp.int32)
    k = jnp.minimum(neg_cnt, cap)

    # CDF over thresholds t_0 = 0 < EDGES[0] < ... < EDGES[-1], plus a sentinel
    # "nothing above the top edge" entry.
    cnt_ext = jnp.concatenate([neg_cnt[None], cnt_cdf, jnp.zeros((1,), jnp.int32)])
    sum_ext = jnp.concatenate([neg_sum[None], sum_cdf, jnp.zeros((1,), jnp.float32)])
    hi_edges = jnp.concatenate([jnp.asarray(_EDGES),
                                jnp.asarray([MAX_LOSS], jnp.float32)])

    # j* = coarsest band containing the k-th largest negative loss.
    jstar = jnp.maximum(jnp.sum((cnt_ext[:-1] >= k).astype(jnp.int32)) - 1, 0)
    count_above = cnt_ext[jstar + 1]
    sum_above = sum_ext[jstar + 1]
    band_cnt = cnt_ext[jstar] - count_above
    band_sum = sum_ext[jstar] - sum_above
    hi = hi_edges[jstar]

    # torch.topk(...).sum(): everything above the band is taken exactly; the m
    # elements still needed are the largest inside the band.  Their mean is
    # modelled as band_mean + (1 - m/band_cnt)*(hi - band_mean): exact when the
    # band is fully taken (cap not binding) or not needed at all, otherwise a
    # sub-bin-width approximation of the tie boundary.
    # TODO(synk): optional second mem-bound refinement pass over the boundary
    #             band for bit-tighter tie handling if ever required.
    m = (k - count_above).astype(jnp.float32)
    bc = jnp.maximum(band_cnt, 1).astype(jnp.float32)
    band_mean = band_sum / bc
    frac = jnp.clip(m / bc, 0.0, 1.0)
    boundary = m * (band_mean + (1.0 - frac) * (hi - band_mean))
    boundary = jnp.where(band_cnt > 0, boundary, 0.0)
    topk_sum = sum_above + boundary

    denom = (pos_cnt + k).astype(jnp.float32) + eps
    return (pos_sum + topk_sum) / denom


def _reference(pred, gt, mask, negative_ratio=NEGATIVE_RATIO, eps=EPS):
    pred = np.asarray(pred, np.float64)
    gt = np.asarray(gt, np.float64)
    mask = np.asarray(mask, np.float64)
    positive = np.trunc(gt * mask)
    negative = np.trunc((1.0 - gt) * mask)
    pc = int(positive.sum())
    nc = min(int(negative.sum()), int(pc * negative_ratio))
    loss = -(gt * np.maximum(np.log(pred), -100.0)
             + (1.0 - gt) * np.maximum(np.log(1.0 - pred), -100.0))
    pos_loss = float((loss * positive).sum())
    neg_sorted = np.sort((loss * negative).ravel())[::-1]
    neg_loss = float(neg_sorted[:nc].sum())
    return (pos_loss + neg_loss) / (pc + nc + eps)


if __name__ == "__main__":
    key = jax.random.PRNGKey(0)
    ks = jax.random.split(key, 8)

    loss_fn = jax.jit(balance_cross_entropy_loss,
                      static_argnames=("negative_ratio", "eps", "tile_rows"))

    # Case A: aligned element count -> zero-copy reshape, multi-tile grid,
    # negative cap NOT binding -> histogram selection is exact.
    N, H, W = 2, 64, 128
    pred_a = jax.nn.sigmoid(jax.random.normal(ks[0], (N, H, W), jnp.float32))
    gt_a = (jax.random.uniform(ks[1], (N, H, W)) < 0.4).astype(jnp.int8)
    mask_a = (jax.random.uniform(ks[2], (N, H, W)) < 0.9).astype(jnp.int8)
    out_a = jax.block_until_ready(loss_fn(pred_a, gt_a, mask_a, tile_rows=32))
    np.testing.assert_allclose(float(out_a), _reference(pred_a, gt_a, mask_a),
                               rtol=1e-4, atol=1e-5)

    # Case B: misaligned element count (exercises the small tail-pad path).
    N, H, W = 2, 24, 40
    pred_b = jax.nn.sigmoid(jax.random.normal(ks[3], (N, H, W), jnp.float32))
    gt_b = (jax.random.uniform(ks[4], (N, H, W)) < 0.4).astype(jnp.int8)
    mask_b = (jax.random.uniform(ks[5], (N, H, W)) < 0.9).astype(jnp.int8)
    out_b = jax.block_until_ready(loss_fn(pred_b, gt_b, mask_b))
    np.testing.assert_allclose(float(out_b), _reference(pred_b, gt_b, mask_b),
                               rtol=1e-4, atol=1e-5)

    # Case C: sparse positives so the 3:1 cap binds (hard-negative mining is
    # active).  The tie-boundary model is a sub-bin-width approximation here
    # (typically ~1e-3 relative error); assert a loose bound.
    N, H, W = 2, 64, 128
    pred_c = jax.nn.sigmoid(jax.random.normal(ks[6], (N, H, W), jnp.float32))
    gt_c = (jax.random.uniform(ks[7], (N, H, W)) < 0.05).astype(jnp.int8)
    mask_c = jnp.ones((N, H, W), jnp.int8)
    out_c = jax.block_until_ready(loss_fn(pred_c, gt_c, mask_c))
    np.testing.assert_allclose(float(out_c), _reference(pred_c, gt_c, mask_c),
                               rtol=5e-2)

    print("KERNEL_OK")
</pallas_src>

<mosaic_0001>
module attributes {stable_mosaic.version = 11 : i64} {
  func.func @_bce_stats_kernel(%arg0: i32, %arg1: memref<32x128xf32, #tpu.memory_space<vmem>>, %arg2: memref<32x128xi8, #tpu.memory_space<vmem>>, %arg3: memref<32x128xi8, #tpu.memory_space<vmem>>, %arg4: memref<1x136x128xf32, #tpu.memory_space<vmem>>) attributes {dimension_semantics = [#tpu.dimension_semantics<parallel>], iteration_bounds = array<i64: 4>, scalar_prefetch = 0 : i64, scratch_operands = 0 : i64, tpu.core_type = #tpu.core_type<tc>, window_params = [{transform_indices = @transform_0, window_bounds = array<i64: 32, 128>}, {transform_indices = @transform_1, window_bounds = array<i64: 32, 128>}, {transform_indices = @transform_2, window_bounds = array<i64: 32, 128>}, {transform_indices = @transform_3, window_bounds = array<i64: 1, 136, 128>}]} {
    %c0 = arith.constant 0 : index
    %c0_0 = arith.constant 0 : index
    %0 = vector.load %arg1[%c0, %c0_0] : memref<32x128xf32, #tpu.memory_space<vmem>>, vector<32x128xf32>
    %c0_1 = arith.constant 0 : index
    %c0_2 = arith.constant 0 : index
    %1 = vector.load %arg2[%c0_1, %c0_2] : memref<32x128xi8, #tpu.memory_space<vmem>>, vector<32x128xi8>
    %2 = arith.sitofp %1 : vector<32x128xi8> to vector<32x128xf32>
    %c0_3 = arith.constant 0 : index
    %c0_4 = arith.constant 0 : index
    %3 = vector.load %arg3[%c0_3, %c0_4] : memref<32x128xi8, #tpu.memory_space<vmem>>, vector<32x128xi8>
    %4 = arith.sitofp %3 : vector<32x128xi8> to vector<32x128xf32>
    %5 = arith.mulf %2, %4 : vector<32x128xf32>
    %6 = math.floor %5 : vector<32x128xf32>
    %cst = arith.constant 1.000000e+00 : f32
    %7 = vector.broadcast %cst : f32 to vector<32x128xf32>
    %8 = arith.subf %7, %2 : vector<32x128xf32>
    %9 = arith.mulf %8, %4 : vector<32x128xf32>
    %10 = math.floor %9 : vector<32x128xf32>
    %11 = math.log %0 : vector<32x128xf32>
    %cst_5 = arith.constant -1.000000e+02 : f32
    %12 = vector.broadcast %cst_5 : f32 to vector<32x128xf32>
    %13 = arith.maximumf %11, %12 : vector<32x128xf32>
    %cst_6 = arith.constant 1.000000e+00 : f32
    %14 = vector.broadcast %cst_6 : f32 to vector<32x128xf32>
    %15 = arith.subf %14, %0 : vector<32x128xf32>
    %16 = math.log %15 : vector<32x128xf32>
    %cst_7 = arith.constant -1.000000e+02 : f32
    %17 = vector.broadcast %cst_7 : f32 to vector<32x128xf32>
    %18 = arith.maximumf %16, %17 : vector<32x128xf32>
    %19 = arith.mulf %2, %13 : vector<32x128xf32>
    %cst_8 = arith.constant 1.000000e+00 : f32
    %20 = vector.broadcast %cst_8 : f32 to vector<32x128xf32>
    %21 = arith.subf %20, %2 : vector<32x128xf32>
    %22 = arith.mulf %21, %18 : vector<32x128xf32>
    %23 = arith.addf %19, %22 : vector<32x128xf32>
    %cst_9 = arith.constant 0.000000e+00 : f32
    %24 = vector.broadcast %cst_9 : f32 to vector<32x128xf32>
    %25 = arith.subf %24, %23 : vector<32x128xf32>
    %26 = arith.mulf %25, %10 : vector<32x128xf32>
    %27 = arith.mulf %25, %6 : vector<32x128xf32>
    %cst_10 = arith.constant dense<0.000000e+00> : vector<128xf32>
    %28 = vector.multi_reduction <add>, %27, %cst_10 [0] : vector<32x128xf32> to vector<128xf32>
    %c0_11 = arith.constant 0 : index
    %c0_12 = arith.constant 0 : index
    %c0_13 = arith.constant 0 : index
    %29 = vector.load %arg4[%c0_11, %c0_12, %c0_13] : memref<1x136x128xf32, #tpu.memory_space<vmem>>, vector<1x1x128xf32>
    %30 = vector.shape_cast %29 : vector<1x1x128xf32> to vector<128xf32>
    %31 = vector.shape_cast %28 : vector<128xf32> to vector<1x1x128xf32>
    tpu.vector_store %arg4[%c0_11, %c0_12, %c0_13], %31 {strides = array<i32>} : memref<1x136x128xf32, #tpu.memory_space<vmem>>, vector<1x1x128xf32>,
    %cst_14 = arith.constant dense<0.000000e+00> : vector<128xf32>
    %32 = vector.multi_reduction <add>, %6, %cst_14 [0] : vector<32x128xf32> to vector<128xf32>
    %c0_15 = arith.constant 0 : index
    %c1 = arith.constant 1 : index
    %c0_16 = arith.constant 0 : index
    %33 = vector.load %arg4[%c0_15, %c1, %c0_16] : memref<1x136x128xf32, #tpu.memory_space<vmem>>, vector<1x1x128xf32>
    %34 = vector.shape_cast %33 : vector<1x1x128xf32> to vector<128xf32>
    %35 = vector.shape_cast %32 : vector<128xf32> to vector<1x1x128xf32>
    tpu.vector_store %arg4[%c0_15, %c1, %c0_16], %35 {strides = array<i32>} : memref<1x136x128xf32, #tpu.memory_space<vmem>>, vector<1x1x128xf32>,
    %cst_17 = arith.constant dense<0.000000e+00> : vector<128xf32>
    %36 = vector.multi_reduction <add>, %10, %cst_17 [0] : vector<32x128xf32> to vector<128xf32>
    %c0_18 = arith.constant 0 : index
    %c2 = arith.constant 2 : index
    %c0_19 = arith.constant 0 : index
    %37 = vector.load %arg4[%c0_18, %c2, %c0_19] : memref<1x136x128xf32, #tpu.memory_space<vmem>>, vector<1x1x128xf32>
    %38 = vector.shape_cast %37 : vector<1x1x128xf32> to vector<128xf32>
    %39 = vector.shape_cast %36 : vector<128xf32> to vector<1x1x128xf32>
    tpu.vector_store %arg4[%c0_18, %c2, %c0_19], %39 {strides = array<i32>} : memref<1x136x128xf32, #tpu.memory_space<vmem>>, vector<1x1x128xf32>,
    %cst_20 = arith.constant dense<0.000000e+00> : vector<128xf32>
    %40 = vector.multi_reduction <add>, %26, %cst_20 [0] : vector<32x128xf32> to vector<128xf32>
    %c0_21 = arith.constant 0 : index
    %c3 = arith.constant 3 : index
    %c0_22 = arith.constant 0 : index
    %41 = vector.load %arg4[%c0_21, %c3, %c0_22] : memref<1x136x128xf32, #tpu.memory_space<vmem>>, vector<1x1x128xf32>
    %42 = vector.shape_cast %41 : vector<1x1x128xf32> to vector<128xf32>
    %43 = vector.shape_cast %40 : vector<128xf32> to vector<1x1x128xf32>
    tpu.vector_store %arg4[%c0_21, %c3, %c0_22], %43 {strides = array<i32>} : memref<1x136x128xf32, #tpu.memory_space<vmem>>, vector<1x1x128xf32>,
    %cst_23 = arith.constant 1.000000e-03 : f32
    %44 = vector.broadcast %cst_23 : f32 to vector<32x128xf32>
    %45 = arith.cmpf oge, %26, %44 : vector<32x128xf32>
    %cst_24 = arith.constant 1.000000e+00 : f32
    %cst_25 = arith.constant 0.000000e+00 : f32
    %46 = vector.broadcast %cst_24 : f32 to vector<32x128xf32>
    %47 = vector.broadcast %cst_25 : f32 to vector<32x128xf32>
    %48 = arith.select %45, %46, %47 : vector<32x128xi1>, vector<32x128xf32>
    %cst_26 = arith.constant dense<0.000000e+00> : vector<128xf32>
    %49 = vector.multi_reduction <add>, %48, %cst_26 [0] : vector<32x128xf32> to vector<128xf32>
    %c0_27 = arith.constant 0 : index
    %c4 = arith.constant 4 : index
    %c0_28 = arith.constant 0 : index
    %50 = vector.load %arg4[%c0_27, %c4, %c0_28] : memref<1x136x128xf32, #tpu.memory_space<vmem>>, vector<1x1x128xf32>
    %51 = vector.shape_cast %50 : vector<1x1x128xf32> to vector<128xf32>
    %52 = vector.shape_cast %49 : vector<128xf32> to vector<1x1x128xf32>
    tpu.vector_store %arg4[%c0_27, %c4, %c0_28], %52 {strides = array<i32>} : memref<1x136x128xf32, #tpu.memory_space<vmem>>, vector<1x1x128xf32>,
    %cst_29 = arith.constant 0.000000e+00 : f32
    %53 = vector.broadcast %cst_29 : f32 to vector<32x128xf32>
    %54 = arith.select %45, %26, %53 : vector<32x128xi1>, vector<32x128xf32>
    %cst_30 = arith.constant dense<0.000000e+00> : vector<128xf32>
    %55 = vector.multi_reduction <add>, %54, %cst_30 [0] : vector<32x128xf32> to vector<128xf32>
    %c0_31 = arith.constant 0 : index
    %c68 = arith.constant 68 : index
    %c0_32 = arith.constant 0 : index
    %56 = vector.load %arg4[%c0_31, %c68, %c0_32] : memref<1x136x128xf32, #tpu.memory_space<vmem>>, vector<1x1x128xf32>
    %57 = vector.shape_cast %56 : vector<1x1x128xf32> to vector<128xf32>
    %58 = vector.shape_cast %55 : vector<128xf32> to vector<1x1x128xf32>
    tpu.vector_store %arg4[%c0_31, %c68, %c0_32], %58 {strides = array<i32>} : memref<1x136x128xf32, #tpu.memory_space<vmem>>, vector<1x1x128xf32>,
    %cst_33 = arith.constant 0.00120050809 : f32
    %59 = vector.broadcast %cst_33 : f32 to vector<32x128xf32>
    %60 = arith.cmpf oge, %26, %59 : vector<32x128xf32>
    %cst_34 = arith.constant 1.000000e+00 : f32
    %cst_35 = arith.constant 0.000000e+00 : f32
    %61 = vector.broadcast %cst_34 : f32 to vector<32x128xf32>
    %62 = vector.broadcast %cst_35 : f32 to vector<32x128xf32>
    %63 = arith.select %60, %61, %62 : vector<32x128xi1>, vector<32x128xf32>
    %cst_36 = arith.constant dense<0.000000e+00> : vector<128xf32>
    %64 = vector.multi_reduction <add>, %63, %cst_36 [0] : vector<32x128xf32> to vector<128xf32>
    %c0_37 = arith.constant 0 : index
    %c5 = arith.constant 5 : index
    %c0_38 = arith.constant 0 : index
    %65 = vector.load %arg4[%c0_37, %c5, %c0_38] : memref<1x136x128xf32, #tpu.memory_space<vmem>>, vector<1x1x128xf32>
    %66 = vector.shape_cast %65 : vector<1x1x128xf32> to vector<128xf32>
    %67 = vector.shape_cast %64 : vector<128xf32> to vector<1x1x128xf32>
    tpu.vector_store %arg4[%c0_37, %c5, %c0_38], %67 {strides = array<i32>} : memref<1x136x128xf32, #tpu.memory_space<vmem>>, vector<1x1x128xf32>,
    %cst_39 = arith.constant 0.000000e+00 : f32
    %68 = vector.broadcast %cst_39 : f32 to vector<32x128xf32>
    %69 = arith.select %60, %26, %68 : vector<32x128xi1>, vector<32x128xf32>
    %cst_40 = arith.constant dense<0.000000e+00> : vector<128xf32>
    %70 = vector.multi_reduction <add>, %69, %cst_40 [0] : vector<32x128xf32> to vector<128xf32>
    %c0_41 = arith.constant 0 : index
    %c69 = arith.constant 69 : index
    %c0_42 = arith.constant 0 : index
    %71 = vector.load %arg4[%c0_41, %c69, %c0_42] : memref<1x136x128xf32, #tpu.memory_space<vmem>>, vector<1x1x128xf32>
    %72 = vector.shape_cast %71 : vector<1x1x128xf32> to vector<128xf32>
    %73 = vector.shape_cast %70 : vector<128xf32> to vector<1x1x128xf32>
    tpu.vector_store %arg4[%c0_41, %c69, %c0_42], %73 {strides = array<i32>} : memref<1x136x128xf32, #tpu.memory_space<vmem>>, vector<1x1x128xf32>,
    %cst_43 = arith.constant 0.00144121959 : f32
    %74 = vector.broadcast %cst_43 : f32 to vector<32x128xf32>
    %75 = arith.cmpf oge, %26, %74 : vector<32x128xf32>
    %cst_44 = arith.constant 1.000000e+00 : f32
    %cst_45 = arith.constant 0.000000e+00 : f32
    %76 = vector.broadcast %cst_44 : f32 to vector<32x128xf32>
    %77 = vector.broadcast %cst_45 : f32 to vector<32x128xf32>
    %78 = arith.select %75, %76, %77 : vector<32x128xi1>, vector<32x128xf32>
    %cst_46 = arith.constant dense<0.000000e+00> : vector<128xf32>
    %79 = vector.multi_reduction <add>, %78, %cst_46 [0] : vector<32x128xf32> to vector<128xf32>
    %c0_47 = arith.constant 0 : index
    %c6 = arith.constant 6 : index
    %c0_48 = arith.constant 0 : index
    %80 = vector.load %arg4[%c0_47, %c6, %c0_48] : memref<1x136x128xf32, #tpu.memory_space<vmem>>, vector<1x1x128xf32>
    %81 = vector.shape_cast %80 : vector<1x1x128xf32> to vector<128xf32>
    %82 = vector.shape_cast %79 : vector<128xf32> to vector<1x1x128xf32>
    tpu.vector_store %arg4[%c0_47, %c6, %c0_48], %82 {strides = array<i32>} : memref<1x136x128xf32, #tpu.memory_space<vmem>>, vector<1x1x128xf32>,
    %cst_49 = arith.constant 0.000000e+00 : f32
    %83 = vector.broadcast %cst_49 : f32 to vector<32x128xf32>
    %84 = arith.select %75, %26, %83 : vector<32x128xi1>, vector<32x128xf32>
    %cst_50 = arith.constant dense<0.000000e+00> : vector<128xf32>
    %85 = vector.multi_reduction <add>, %84, %cst_50 [0] : vector<32x128xf32> to vector<128xf32>
    %c0_51 = arith.constant 0 : index
    %c70 = arith.constant 70 : index
    %c0_52 = arith.constant 0 : index
    %86 = vector.load %arg4[%c0_51, %c70, %c0_52] : memref<1x136x128xf32, #tpu.memory_space<vmem>>, vector<1x1x128xf32>
    %87 = vector.shape_cast %86 : vector<1x1x128xf32> to vector<128xf32>
    %88 = vector.shape_cast %85 : vector<128xf32> to vector<1x1x128xf32>
    tpu.vector_store %arg4[%c0_51, %c70, %c0_52], %88 {strides = array<i32>} : memref<1x136x128xf32, #tpu.memory_space<vmem>>, vector<1x1x128xf32>,
    %cst_53 = arith.constant 0.00173019571 : f32
    %89 = vector.broadcast %cst_53 : f32 to vector<32x128xf32>
    %90 = arith.cmpf oge, %26, %89 : vector<32x128xf32>
    %cst_54 = arith.constant 1.000000e+00 : f32
    %cst_55 = arith.constant 0.000000e+00 : f32
    %91 = vector.broadcast %cst_54 : f32 to vector<32x128xf32>
    %92 = vector.broadcast %cst_55 : f32 to vector<32x128xf32>
    %93 = arith.select %90, %91, %92 : vector<32x128xi1>, vector<32x128xf32>
    %cst_56 = arith.constant dense<0.000000e+00> : vector<128xf32>
    %94 = vector.multi_reduction <add>, %93, %cst_56 [0] : vector<32x128xf32> to vector<128xf32>
    %c0_57 = arith.constant 0 : index
    %c7 = arith.constant 7 : index
    %c0_58 = arith.constant 0 : index
    %95 = vector.load %arg4[%c0_57, %c7, %c0_58] : memref<1x136x128xf32, #tpu.memory_space<vmem>>, vector<1x1x128xf32>
    %96 = vector.shape_cast %95 : vector<1x1x128xf32> to vector<128xf32>
    %97 = vector.shape_cast %94 : vector<128xf32> to vector<1x1x128xf32>
    tpu.vector_store %arg4[%c0_57, %c7, %c0_58], %97 {strides = array<i32>} : memref<1x136x128xf32, #tpu.memory_space<vmem>>, vector<1x1x128xf32>,
    %cst_59 = arith.constant 0.000000e+00 : f32
    %98 = vector.broadcast %cst_59 : f32 to vector<32x128xf32>
    %99 = arith.select %90, %26, %98 : vector<32x128xi1>, vector<32x128xf32>
    %cst_60 = arith.constant dense<0.000000e+00> : vector<128xf32>
    %100 = vector.multi_reduction <add>, %99, %cst_60 [0] : vector<32x128xf32> to vector<128xf32>
    %c0_61 = arith.constant 0 : index
    %c71 = arith.constant 71 : index
    %c0_62 = arith.constant 0 : index
    %101 = vector.load %arg4[%c0_61, %c71, %c0_62] : memref<1x136x128xf32, #tpu.memory_space<vmem>>, vector<1x1x128xf32>
    %102 = vector.shape_cast %101 : vector<1x1x128xf32> to vector<128xf32>
    %103 = vector.shape_cast %100 : vector<128xf32> to vector<1x1x128xf32>
    tpu.vector_store %arg4[%c0_61, %c71, %c0_62], %103 {strides = array<i32>} : memref<1x136x128xf32, #tpu.memory_space<vmem>>, vector<1x1x128xf32>,
    %cst_63 = arith.constant 0.00207711384 : f32
    %104 = vector.broadcast %cst_63 : f32 to vector<32x128xf32>
    %105 = arith.cmpf oge, %26, %104 : vector<32x128xf32>
    %cst_64 = arith.constant 1.000000e+00 : f32
    %cst_65 = arith.constant 0.000000e+00 : f32
    %106 = vector.broadcast %cst_64 : f32 to vector<32x128xf32>
    %107 = vector.broadcast %cst_65 : f32 to vector<32x128xf32>
    %108 = arith.select %105, %106, %107 : vector<32x128xi1>, vector<32x128xf32>
    %cst_66 = arith.constant dense<0.000000e+00> : vector<128xf32>
    %109 = vector.multi_reduction <add>, %108, %cst_66 [0] : vector<32x128xf32> to vector<128xf32>
    %c0_67 = arith.constant 0 : index
    %c8 = arith.constant 8 : index
    %c0_68 = arith.constant 0 : index
    %110 = vector.load %arg4[%c0_67, %c8, %c0_68] : memref<1x136x128xf32, #tpu.memory_space<vmem>>, vector<1x1x128xf32>
    %111 = vector.shape_cast %110 : vector<1x1x128xf32> to vector<128xf32>
    %112 = vector.shape_cast %109 : vector<128xf32> to vector<1x1x128xf32>
    tpu.vector_store %arg4[%c0_67, %c8, %c0_68], %112 {strides = array<i32>} : memref<1x136x128xf32, #tpu.memory_space<vmem>>, vector<1x1x128xf32>,
    %cst_69 = arith.constant 0.000000e+00 : f32
    %113 = vector.broadcast %cst_69 : f32 to vector<32x128xf32>
    %114 = arith.select %105, %26, %113 : vector<32x128xi1>, vector<32x128xf32>
    %cst_70 = arith.constant dense<0.000000e+00> : vector<128xf32>
    %115 = vector.multi_reduction <add>, %114, %cst_70 [0] : vector<32x128xf32> to vector<128xf32>
    %c0_71 = arith.constant 0 : index
    %c72 = arith.constant 72 : index
    %c0_72 = arith.constant 0 : index
    %116 = vector.load %arg4[%c0_71, %c72, %c0_72] : memref<1x136x128xf32, #tpu.memory_space<vmem>>, vector<1x1x128xf32>
    %117 = vector.shape_cast %116 : vector<1x1x128xf32> to vector<128xf32>
    %118 = vector.shape_cast %115 : vector<128xf32> to vector<1x1x128xf32>
    tpu.vector_store %arg4[%c0_71, %c72, %c0_72], %118 {strides = array<i32>} : memref<1x136x128xf32, #tpu.memory_space<vmem>>, vector<1x1x128xf32>,
    %cst_73 = arith.constant 0.00249359198 : f32
    %119 = vector.broadcast %cst_73 : f32 to vector<32x128xf32>
    %120 = arith.cmpf oge, %26, %119 : vector<32x128xf32>
    %cst_74 = arith.constant 1.000000e+00 : f32
    %cst_75 = arith.constant 0.000000e+00 : f32
    %121 = vector.broadcast %cst_74 : f32 to vector<32x128xf32>
    %122 = vector.broadcast %cst_75 : f32 to vector<32x128xf32>
    %123 = arith.select %120, %121, %122 : vector<32x128xi1>, vector<32x128xf32>
    %cst_76 = arith.constant dense<0.000000e+00> : vector<128xf32>
    %124 = vector.multi_reduction <add>, %123, %cst_76 [0] : vector<32x128xf32> to vector<128xf32>
    %c0_77 = arith.constant 0 : index
    %c9 = arith.constant 9 : index
    %c0_78 = arith.constant 0 : index
    %125 = vector.load %arg4[%c0_77, %c9, %c0_78] : memref<1x136x128xf32, #tpu.memory_space<vmem>>, vector<1x1x128xf32>
    %126 = vector.shape_cast %125 : vector<1x1x128xf32> to vector<128xf32>
    %127 = vector.shape_cast %124 : vector<128xf32> to vector<1x1x128xf32>
    tpu.vector_store %arg4[%c0_77, %c9, %c0_78], %127 {strides = array<i32>} : memref<1x136x128xf32, #tpu.memory_space<vmem>>, vector<1x1x128xf32>,
    %cst_79 = arith.constant 0.000000e+00 : f32
    %128 = vector.broadcast %cst_79 : f32 to vector<32x128xf32>
    %129 = arith.select %120, %26, %128 : vector<32x128xi1>, vector<32x128xf32>
    %cst_80 = arith.constant dense<0.000000e+00> : vector<128xf32>
    %130 = vector.multi_reduction <add>, %129, %cst_80 [0] : vector<32x128xf32> to vector<128xf32>
    %c0_81 = arith.constant 0 : index
    %c73 = arith.constant 73 : index
    %c0_82 = arith.constant 0 : index
    %131 = vector.load %arg4[%c0_81, %c73, %c0_82] : memref<1x136x128xf32, #tpu.memory_space<vmem>>, vector<1x1x128xf32>
    %132 = vector.shape_cast %131 : vector<1x1x128xf32> to vector<128xf32>
    %133 = vector.shape_cast %130 : vector<128xf32> to vector<1x1x128xf32>
    tpu.vector_store %arg4[%c0_81, %c73, %c0_82], %133 {strides = array<i32>} : memref<1x136x128xf32, #tpu.memory_space<vmem>>, vector<1x1x128xf32>,
    %cst_83 = arith.constant 0.00299357739 : f32
    %134 = vector.broadcast %cst_83 : f32 to vector<32x128xf32>
    %135 = arith.cmpf oge, %26, %134 : vector<32x128xf32>
    %cst_84 = arith.constant 1.000000e+00 : f32
    %cst_85 = arith.constant 0.000000e+00 : f32
    %136 = vector.broadcast %cst_84 : f32 to vector<32x128xf32>
    %137 = vector.broadcast %cst_85 : f32 to vector<32x128xf32>
    %138 = arith.select %135, %136, %137 : vector<32x128xi1>, vector<32x128xf32>
    %cst_86 = arith.constant dense<0.000000e+00> : vector<128xf32>
    %139 = vector.multi_reduction <add>, %138, %cst_86 [0] : vector<32x128xf32> to vector<128xf32>
    %c0_87 = arith.constant 0 : index
    %c10 = arith.constant 10 : index
    %c0_88 = arith.constant 0 : index
    %140 = vector.load %arg4[%c0_87, %c10, %c0_88] : memref<1x136x128xf32, #tpu.memory_space<vmem>>, vector<1x1x128xf32>
    %141 = vector.shape_cast %140 : vector<1x1x128xf32> to vector<128xf32>
    %142 = vector.shape_cast %139 : vector<128xf32> to vector<1x1x128xf32>
    tpu.vector_store %arg4[%c0_87, %c10, %c0_88], %142 {strides = array<i32>} : memref<1x136x128xf32, #tpu.memory_space<vmem>>, vector<1x1x128xf32>,
    %cst_89 = arith.constant 0.000000e+00 : f32
    %143 = vector.broadcast %cst_89 : f32 to vector<32x128xf32>
    %144 = arith.select %135, %26, %143 : vector<32x128xi1>, vector<32x128xf32>
    %cst_90 = arith.constant dense<0.000000e+00> : vector<128xf32>
    %145 = vector.multi_reduction <add>, %144, %cst_90 [0] : vector<32x128xf32> to vector<128xf32>
    %c0_91 = arith.constant 0 : index
    %c74 = arith.constant 74 : index
    %c0_92 = arith.constant 0 : index
    %146 = vector.load %arg4[%c0_91, %c74, %c0_92] : memref<1x136x128xf32, #tpu.memory_space<vmem>>, vector<1x1x128xf32>
    %147 = vector.shape_cast %146 : vector<1x1x128xf32> to vector<128xf32>
    %148 = vector.shape_cast %145 : vector<128xf32> to vector<1x1x128xf32>
    tpu.vector_store %arg4[%c0_91, %c74, %c0_92], %148 {strides = array<i32>} : memref<1x136x128xf32, #tpu.memory_space<vmem>>, vector<1x1x128xf32>,
    %cst_93 = arith.constant 0.00359381363 : f32
    %149 = vector.broadcast %cst_93 : f32 to vector<32x128xf32>
    %150 = arith.cmpf oge, %26, %149 : vector<32x128xf32>
    %cst_94 = arith.constant 1.000000e+00 : f32
    %cst_95 = arith.constant 0.000000e+00 : f32
    %151 = vector.broadcast %cst_94 : f32 to vector<32x128xf32>
    %152 = vector.broadcast %cst_95 : f32 to vector<32x128xf32>
    %153 = arith.select %150, %151, %152 : vector<32x128xi1>, vector<32x128xf32>
    %cst_96 = arith.constant dense<0.000000e+00> : vector<128xf32>
    %154 = vector.multi_reduction <add>, %153, %cst_96 [0] : vector<32x128xf32> to vector<128xf32>
    %c0_97 = arith.constant 0 : index
    %c11 = arith.constant 11 : index
    %c0_98 = arith.constant 0 : index
    %155 = vector.load %arg4[%c0_97, %c11, %c0_98] : memref<1x136x128xf32, #tpu.memory_space<vmem>>, vector<1x1x128xf32>
    %156 = vector.shape_cast %155 : vector<1x1x128xf32> to vector<128xf32>
    %157 = vector.shape_cast %154 : vector<128xf32> to vector<1x1x128xf32>
    tpu.vector_store %arg4[%c0_97, %c11, %c0_98], %157 {strides = array<i32>} : memref<1x136x128xf32, #tpu.memory_space<vmem>>, vector<1x1x128xf32>,
    %cst_99 = arith.constant 0.000000e+00 : f32
    %158 = vector.broadcast %cst_99 : f32 to vector<32x128xf32>
    %159 = arith.select %150, %26, %158 : vector<32x128xi1>, vector<32x128xf32>
    %cst_100 = arith.constant dense<0.000000e+00> : vector<128xf32>
    %160 = vector.multi_reduction <add>, %159, %cst_100 [0] : vector<32x128xf32> to vector<128xf32>
    %c0_101 = arith.constant 0 : index
    %c75 = arith.constant 75 : index
    %c0_102 = arith.constant 0 : index
    %161 = vector.load %arg4[%c0_101, %c75, %c0_102] : memref<1x136x128xf32, #tpu.memory_space<vmem>>, vector<1x1x128xf32>
    %162 = vector.shape_cast %161 : vector<1x1x128xf32> to vector<128xf32>
    %163 = vector.shape_cast %160 : vector<128xf32> to vector<1x1x128xf32>
    tpu.vector_store %arg4[%c0_101, %c75, %c0_102], %163 {strides = array<i32>} : memref<1x136x128xf32, #tpu.memory_space<vmem>>, vector<1x1x128xf32>,
    %cst_103 = arith.constant 0.00431440212 : f32
    %164 = vector.broadcast %cst_103 : f32 to vector<32x128xf32>
    %165 = arith.cmpf oge, %26, %164 : vector<32x128xf32>
    %cst_104 = arith.constant 1.000000e+00 : f32
    %cst_105 = arith.constant 0.000000e+00 : f32
    %166 = vector.broadcast %cst_104 : f32 to vector<32x128xf32>
    %167 = vector.broadcast %cst_105 : f32 to vector<32x128xf32>
    %168 = arith.select %165, %166, %167 : vector<32x128xi1>, vector<32x128xf32>
    %cst_106 = arith.constant dense<0.000000e+00> : vector<128xf32>
    %169 = vector.multi_reduction <add>, %168, %cst_106 [0] : vector<32x128xf32> to vector<128xf32>
    %c0_107 = arith.constant 0 : index
    %c12 = arith.constant 12 : index
    %c0_108 = arith.constant 0 : index
    %170 = vector.load %arg4[%c0_107, %c12, %c0_108] : memref<1x136x128xf32, #tpu.memory_space<vmem>>, vector<1x1x128xf32>
    %171 = vector.shape_cast %170 : vector<1x1x128xf32> to vector<128xf32>
    %172 = vector.shape_cast %169 : vector<128xf32> to vector<1x1x128xf32>
    tpu.vector_store %arg4[%c0_107, %c12, %c0_108], %172 {strides = array<i32>} : memref<1x136x128xf32, #tpu.memory_space<vmem>>, vector<1x1x128xf32>,
    %cst_109 = arith.constant 0.000000e+00 : f32
    %173 = vector.broadcast %cst_109 : f32 to vector<32x128xf32>
    %174 = arith.select %165, %26, %173 : vector<32x128xi1>, vector<32x128xf32>
    %cst_110 = arith.constant dense<0.000000e+00> : vector<128xf32>
    %175 = vector.multi_reduction <add>, %174, %cst_110 [0] : vector<32x128xf32> to vector<128xf32>
    %c0_111 = arith.constant 0 : index
    %c76 = arith.constant 76 : index
    %c0_112 = arith.constant 0 : index
    %176 = vector.load %arg4[%c0_111, %c76, %c0_112] : memref<1x136x128xf32, #tpu.memory_space<vmem>>, vector<1x1x128xf32>
    %177 = vector.shape_cast %176 : vector<1x1x128xf32> to vector<128xf32>
    %178 = vector.shape_cast %175 : vector<128xf32> to vector<1x1x128xf32>
    tpu.vector_store %arg4[%c0_111, %c76, %c0_112], %178 {strides = array<i32>} : memref<1x136x128xf32, #tpu.memory_space<vmem>>, vector<1x1x128xf32>,
    %cst_113 = arith.constant 0.0051794746 : f32
    %179 = vector.broadcast %cst_113 : f32 to vector<32x128xf32>
    %180 = arith.cmpf oge, %26, %179 : vector<32x128xf32>
    %cst_114 = arith.constant 1.000000e+00 : f32
    %cst_115 = arith.constant 0.000000e+00 : f32
    %181 = vector.broadcast %cst_114 : f32 to vector<32x128xf32>
    %182 = vector.broadcast %cst_115 : f32 to vector<32x128xf32>
    %183 = arith.select %180, %181, %182 : vector<32x128xi1>, vector<32x128xf32>
    %cst_116 = arith.constant dense<0.000000e+00> : vector<128xf32>
    %184 = vector.multi_reduction <add>, %183, %cst_116 [0] : vector<32x128xf32> to vector<128xf32>
    %c0_117 = arith.constant 0 : index
    %c13 = arith.constant 13 : index
    %c0_118 = arith.constant 0 : index
    %185 = vector.load %arg4[%c0_117, %c13, %c0_118] : memref<1x136x128xf32, #tpu.memory_space<vmem>>, vector<1x1x128xf32>
    %186 = vector.shape_cast %185 : vector<1x1x128xf32> to vector<128xf32>
    %187 = vector.shape_cast %184 : vector<128xf32> to vector<1x1x128xf32>
    tpu.vector_store %arg4[%c0_117, %c13, %c0_118], %187 {strides = array<i32>} : memref<1x136x128xf32, #tpu.memory_space<vmem>>, vector<1x1x128xf32>,
    %cst_119 = arith.constant 0.000000e+00 : f32
    %188 = vector.broadcast %cst_119 : f32 to vector<32x128xf32>
    %189 = arith.select %180, %26, %188 : vector<32x128xi1>, vector<32x128xf32>
    %cst_120 = arith.constant dense<0.000000e+00> : vector<128xf32>
    %190 = vector.multi_reduction <add>, %189, %cst_120 [0] : vector<32x128xf32> to vector<128xf32>
    %c0_121 = arith.constant 0 : index
    %c77 = arith.constant 77 : index
    %c0_122 = arith.constant 0 : index
    %191 = vector.load %arg4[%c0_121, %c77, %c0_122] : memref<1x136x128xf32, #tpu.memory_space<vmem>>, vector<1x1x128xf32>
    %192 = vector.shape_cast %191 : vector<1x1x128xf32> to vector<128xf32>
    %193 = vector.shape_cast %190 : vector<128xf32> to vector<1x1x128xf32>
    tpu.vector_store %arg4[%c0_121, %c77, %c0_122], %193 {strides = array<i32>} : memref<1x136x128xf32, #tpu.memory_space<vmem>>, vector<1x1x128xf32>,
    %cst_123 = arith.constant 0.00621800124 : f32
    %194 = vector.broadcast %cst_123 : f32 to vector<32x128xf32>
    %195 = arith.cmpf oge, %26, %194 : vector<32x128xf32>
    %cst_124 = arith.constant 1.000000e+00 : f32
    %cst_125 = arith.constant 0.000000e+00 : f32
    %196 = vector.broadcast %cst_124 : f32 to vector<32x128xf32>
    %197 = vector.broadcast %cst_125 : f32 to vector<32x128xf32>
    %198 = arith.select %195, %196, %197 : vector<32x128xi1>, vector<32x128xf32>
    %cst_126 = arith.constant dense<0.000000e+00> : vector<128xf32>
    %199 = vector.multi_reduction <add>, %198, %cst_126 [0] : vector<32x128xf32> to vector<128xf32>
    %c0_127 = arith.constant 0 : index
    %c14 = arith.constant 14 : index
    %c0_128 = arith.constant 0 : index
    %200 = vector.load %arg4[%c0_127, %c14, %c0_128] : memref<1x136x128xf32, #tpu.memory_space<vmem>>, vector<1x1x128xf32>
    %201 = vector.shape_cast %200 : vector<1x1x128xf32> to vector<128xf32>
    %202 = vector.shape_cast %199 : vector<128xf32> to vector<1x1x128xf32>
    tpu.vector_store %arg4[%c0_127, %c14, %c0_128], %202 {strides = array<i32>} : memref<1x136x128xf32, #tpu.memory_space<vmem>>, vector<1x1x128xf32>,
    %cst_129 = arith.constant 0.000000e+00 : f32
    %203 = vector.broadcast %cst_129 : f32 to vector<32x128xf32>
    %204 = arith.select %195, %26, %203 : vector<32x128xi1>, vector<32x128xf32>
    %cst_130 = arith.constant dense<0.000000e+00> : vector<128xf32>
    %205 = vector.multi_reduction <add>, %204, %cst_130 [0] : vector<32x128xf32> to vector<128xf32>
    %c0_131 = arith.constant 0 : index
    %c78 = arith.constant 78 : index
    %c0_132 = arith.constant 0 : index
    %206 = vector.load %arg4[%c0_131, %c78, %c0_132] : memref<1x136x128xf32, #tpu.memory_space<vmem>>, vector<1x1x128xf32>
    %207 = vector.shape_cast %206 : vector<1x1x128xf32> to vector<128xf32>
    %208 = vector.shape_cast %205 : vector<128xf32> to vector<1x1x128xf32>
    tpu.vector_store %arg4[%c0_131, %c78, %c0_132], %208 {strides = array<i32>} : memref<1x136x128xf32, #tpu.memory_space<vmem>>, vector<1x1x128xf32>,
    %cst_133 = arith.constant 0.00746476045 : f32
    %209 = vector.broadcast %cst_133 : f32 to vector<32x128xf32>
    %210 = arith.cmpf oge, %26, %209 : vector<32x128xf32>
    %cst_134 = arith.constant 1.000000e+00 : f32
    %cst_135 = arith.constant 0.000000e+00 : f32
    %211 = vector.broadcast %cst_134 : f32 to vector<32x128xf32>
    %212 = vector.broadcast %cst_135 : f32 to vector<32x128xf32>
    %213 = arith.select %210, %211, %212 : vector<32x128xi1>, vector<32x128xf32>
    %cst_136 = arith.constant dense<0.000000e+00> : vector<128xf32>
    %214 = vector.multi_reduction <add>, %213, %cst_136 [0] : vector<32x128xf32> to vector<128xf32>
    %c0_137 = arith.constant 0 : index
    %c15 = arith.constant 15 : index
    %c0_138 = arith.constant 0 : index
    %215 = vector.load %arg4[%c0_137, %c15, %c0_138] : memref<1x136x128xf32, #tpu.memory_space<vmem>>, vector<1x1x128xf32>
    %216 = vector.shape_cast %215 : vector<1x1x128xf32> to vector<128xf32>
    %217 = vector.shape_cast %214 : vector<128xf32> to vector<1x1x128xf32>
    tpu.vector_store %arg4[%c0_137, %c15, %c0_138], %217 {strides = array<i32>} : memref<1x136x128xf32, #tpu.memory_space<vmem>>, vector<1x1x128xf32>,
    %cst_139 = arith.constant 0.000000e+00 : f32
    %218 = vector.broadcast %cst_139 : f32 to vector<32x128xf32>
    %219 = arith.select %210, %26, %218 : vector<32x128xi1>, vector<32x128xf32>
    %cst_140 = arith.constant dense<0.000000e+00> : vector<128xf32>
    %220 = vector.multi_reduction <add>, %219, %cst_140 [0] : vector<32x128xf32> to vector<128xf32>
    %c0_141 = arith.constant 0 : index
    %c79 = arith.constant 79 : index
    %c0_142 = arith.constant 0 : index
    %221 = vector.load %arg4[%c0_141, %c79, %c0_142] : memref<1x136x128xf32, #tpu.memory_space<vmem>>, vector<1x1x128xf32>
    %222 = vector.shape_cast %221 : vector<1x1x128xf32> to vector<128xf32>
    %223 = vector.shape_cast %220 : vector<128xf32> to vector<1x1x128xf32>
    tpu.vector_store %arg4[%c0_141, %c79, %c0_142], %223 {strides = array<i32>} : memref<1x136x128xf32, #tpu.memory_space<vmem>>, vector<1x1x128xf32>,
    %cst_143 = arith.constant 0.00896150526 : f32
    %224 = vector.broadcast %cst_143 : f32 to vector<32x128xf32>
    %225 = arith.cmpf oge, %26, %224 : vector<32x128xf32>
    %cst_144 = arith.constant 1.000000e+00 : f32
    %cst_145 = arith.constant 0.000000e+00 : f32
    %226 = vector.broadcast %cst_144 : f32 to vector<32x128xf32>
    %227 = vector.broadcast %cst_145 : f32 to vector<32x128xf32>
    %228 = arith.select %225, %226, %227 : vector<32x128xi1>, vector<32x128xf32>
    %cst_146 = arith.constant dense<0.000000e+00> : vector<128xf32>
    %229 = vector.multi_reduction <add>, %228, %cst_146 [0] : vector<32x128xf32> to vector<128xf32>
    %c0_147 = arith.constant 0 : index
    %c16 = arith.constant 16 : index
    %c0_148 = arith.constant 0 : index
    %230 = vector.load %arg4[%c0_147, %c16, %c0_148] : memref<1x136x128xf32, #tpu.memory_space<vmem>>, vector<1x1x128xf32>
    %231 = vector.shape_cast %230 : vector<1x1x128xf32> to vector<128xf32>
    %232 = vector.shape_cast %229 : vector<128xf32> to vector<1x1x128xf32>
    tpu.vector_store %arg4[%c0_147, %c16, %c0_148], %232 {strides = array<i32>} : memref<1x136x128xf32, #tpu.memory_space<vmem>>, vector<1x1x128xf32>,
    %cst_149 = arith.constant 0.000000e+00 : f32
    %233 = vector.broadcast %cst_149 : f32 to vector<32x128xf32>
    %234 = arith.select %225, %26, %233 : vector<32x128xi1>, vector<32x128xf32>
    %cst_150 = arith.constant dense<0.000000e+00> : vector<128xf32>
    %235 = vector.multi_reduction <add>, %234, %cst_150 [0] : vector<32x128xf32> to vector<128xf32>
    %c0_151 = arith.constant 0 : index
    %c80 = arith.constant 80 : index
    %c0_152 = arith.constant 0 : index
    %236 = vector.load %arg4[%c0_151, %c80, %c0_152] : memref<1x136x128xf32, #tpu.memory_space<vmem>>, vector<1x1x128xf32>
    %237 = vector.shape_cast %236 : vector<1x1x128xf32> to vector<128xf32>
    %238 = vector.shape_cast %235 : vector<128xf32> to vector<1x1x128xf32>
    tpu.vector_store %arg4[%c0_151, %c80, %c0_152], %238 {strides = array<i32>} : memref<1x136x128xf32, #tpu.memory_space<vmem>>, vector<1x1x128xf32>,
    %cst_153 = arith.constant 0.010758359 : f32
    %239 = vector.broadcast %cst_153 : f32 to vector<32x128xf32>
    %240 = arith.cmpf oge, %26, %239 : vector<32x128xf32>
    %cst_154 = arith.constant 1.000000e+00 : f32
    %cst_155 = arith.constant 0.000000e+00 : f32
    %241 = vector.broadcast %cst_154 : f32 to vector<32x128xf32>
    %242 = vector.broadcast %cst_155 : f32 to vector<32x128xf32>
    %243 = arith.select %240, %241, %242 : vector<32x128xi1>, vector<32x128xf32>
    %cst_156 = arith.constant dense<0.000000e+00> : vector<128xf32>
    %244 = vector.multi_reduction <add>, %243, %cst_156 [0] : vector<32x128xf32> to vector<128xf32>
    %c0_157 = arith.constant 0 : index
    %c17 = arith.constant 17 : index
    %c0_158 = arith.constant 0 : index
    %245 = vector.load %arg4[%c0_157, %c17, %c0_158] : memref<1x136x128xf32, #tpu.memory_space<vmem>>, vector<1x1x128xf32>
    %246 = vector.shape_cast %245 : vector<1x1x128xf32> to vector<128xf32>
    %247 = vector.shape_cast %244 : vector<128xf32> to vector<1x1x128xf32>
    tpu.vector_store %arg4[%c0_157, %c17, %c0_158], %247 {strides = array<i32>} : memref<1x136x128xf32, #tpu.memory_space<vmem>>, vector<1x1x128xf32>,
    %cst_159 = arith.constant 0.000000e+00 : f32
    %248 = vector.broadcast %cst_159 : f32 to vector<32x128xf32>
    %249 = arith.select %240, %26, %248 : vector<32x128xi1>, vector<32x128xf32>
    %cst_160 = arith.constant dense<0.000000e+00> : vector<128xf32>
    %250 = vector.multi_reduction <add>, %249, %cst_160 [0] : vector<32x128xf32> to vector<128xf32>
    %c0_161 = arith.constant 0 : index
    %c81 = arith.constant 81 : index
    %c0_162 = arith.constant 0 : index
    %251 = vector.load %arg4[%c0_161, %c81, %c0_162] : memref<1x136x128xf32, #tpu.memory_space<vmem>>, vector<1x1x128xf32>
    %252 = vector.shape_cast %251 : vector<1x1x128xf32> to vector<128xf32>
    %253 = vector.shape_cast %250 : vector<128xf32> to vector<1x1x128xf32>
    tpu.vector_store %arg4[%c0_161, %c81, %c0_162], %253 {strides = array<i32>} : memref<1x136x128xf32, #tpu.memory_space<vmem>>, vector<1x1x128xf32>,
    %cst_163 = arith.constant 0.0129154967 : f32
    %254 = vector.broadcast %cst_163 : f32 to vector<32x128xf32>
    %255 = arith.cmpf oge, %26, %254 : vector<32x128xf32>
    %cst_164 = arith.constant 1.000000e+00 : f32
    %cst_165 = arith.constant 0.000000e+00 : f32
    %256 = vector.broadcast %cst_164 : f32 to vector<32x128xf32>
    %257 = vector.broadcast %cst_165 : f32 to vector<32x128xf32>
    %258 = arith.select %255, %256, %257 : vector<32x128xi1>, vector<32x128xf32>
    %cst_166 = arith.constant dense<0.000000e+00> : vector<128xf32>
    %259 = vector.multi_reduction <add>, %258, %cst_166 [0] : vector<32x128xf32> to vector<128xf32>
    %c0_167 = arith.constant 0 : index
    %c18 = arith.constant 18 : index
    %c0_168 = arith.constant 0 : index
    %260 = vector.load %arg4[%c0_167, %c18, %c0_168] : memref<1x136x128xf32, #tpu.memory_space<vmem>>, vector<1x1x128xf32>
    %261 = vector.shape_cast %260 : vector<1x1x128xf32> to vector<128xf32>
    %262 = vector.shape_cast %259 : vector<128xf32> to vector<1x1x128xf32>
    tpu.vector_store %arg4[%c0_167, %c18, %c0_168], %262 {strides = array<i32>} : memref<1x136x128xf32, #tpu.memory_space<vmem>>, vector<1x1x128xf32>,
    %cst_169 = arith.constant 0.000000e+00 : f32
    %263 = vector.broadcast %cst_169 : f32 to vector<32x128xf32>
    %264 = arith.select %255, %26, %263 : vector<32x128xi1>, vector<32x128xf32>
    %cst_170 = arith.constant dense<0.000000e+00> : vector<128xf32>
    %265 = vector.multi_reduction <add>, %264, %cst_170 [0] : vector<32x128xf32> to vector<128xf32>
    %c0_171 = arith.constant 0 : index
    %c82 = arith.constant 82 : index
    %c0_172 = arith.constant 0 : index
    %266 = vector.load %arg4[%c0_171, %c82, %c0_172] : memref<1x136x128xf32, #tpu.memory_space<vmem>>, vector<1x1x128xf32>
    %267 = vector.shape_cast %266 : vector<1x1x128xf32> to vector<128xf32>
    %268 = vector.shape_cast %265 : vector<128xf32> to vector<1x1x128xf32>
    tpu.vector_store %arg4[%c0_171, %c82, %c0_172], %268 {strides = array<i32>} : memref<1x136x128xf32, #tpu.memory_space<vmem>>, vector<1x1x128xf32>,
    %cst_173 = arith.constant 0.0155051574 : f32
    %269 = vector.broadcast %cst_173 : f32 to vector<32x128xf32>
    %270 = arith.cmpf oge, %26, %269 : vector<32x128xf32>
    %cst_174 = arith.constant 1.000000e+00 : f32
    %cst_175 = arith.constant 0.000000e+00 : f32
    %271 = vector.broadcast %cst_174 : f32 to vector<32x128xf32>
    %272 = vector.broadcast %cst_175 : f32 to vector<32x128xf32>
    %273 = arith.select %270, %271, %272 : vector<32x128xi1>, vector<32x128xf32>
    %cst_176 = arith.constant dense<0.000000e+00> : vector<128xf32>
    %274 = vector.multi_reduction <add>, %273, %cst_176 [0] : vector<32x128xf32> to vector<128xf32>
    %c0_177 = arith.constant 0 : index
    %c19 = arith.constant 19 : index
    %c0_178 = arith.constant 0 : index
    %275 = vector.load %arg4[%c0_177, %c19, %c0_178] : memref<1x136x128xf32, #tpu.memory_space<vmem>>, vector<1x1x128xf32>
    %276 = vector.shape_cast %275 : vector<1x1x128xf32> to vector<128xf32>
    %277 = vector.shape_cast %274 : vector<128xf32> to vector<1x1x128xf32>
    tpu.vector_store %arg4[%c0_177, %c19, %c0_178], %277 {strides = array<i32>} : memref<1x136x128xf32, #tpu.memory_space<vmem>>, vector<1x1x128xf32>,
    %cst_179 = arith.constant 0.000000e+00 : f32
    %278 = vector.broadcast %cst_179 : f32 to vector<32x128xf32>
    %279 = arith.select %270, %26, %278 : vector<32x128xi1>, vector<32x128xf32>
    %cst_180 = arith.constant dense<0.000000e+00> : vector<128xf32>
    %280 = vector.multi_reduction <add>, %279, %cst_180 [0] : vector<32x128xf32> to vector<128xf32>
    %c0_181 = arith.constant 0 : index
    %c83 = arith.constant 83 : index
    %c0_182 = arith.constant 0 : index
    %281 = vector.load %arg4[%c0_181, %c83, %c0_182] : memref<1x136x128xf32, #tpu.memory_space<vmem>>, vector<1x1x128xf32>
    %282 = vector.shape_cast %281 : vector<1x1x128xf32> to vector<128xf32>
    %283 = vector.shape_cast %280 : vector<128xf32> to vector<1x1x128xf32>
    tpu.vector_store %arg4[%c0_181, %c83, %c0_182], %283 {strides = array<i32>} : memref<1x136x128xf32, #tpu.memory_space<vmem>>, vector<1x1x128xf32>,
    %cst_183 = arith.constant 0.0186140668 : f32
    %284 = vector.broadcast %cst_183 : f32 to vector<32x128xf32>
    %285 = arith.cmpf oge, %26, %284 : vector<32x128xf32>
    %cst_184 = arith.constant 1.000000e+00 : f32
    %cst_185 = arith.constant 0.000000e+00 : f32
    %286 = vector.broadcast %cst_184 : f32 to vector<32x128xf32>
    %287 = vector.broadcast %cst_185 : f32 to vector<32x128xf32>
    %288 = arith.select %285, %286, %287 : vector<32x128xi1>, vector<32x128xf32>
    %cst_186 = arith.constant dense<0.000000e+00> : vector<128xf32>
    %289 = vector.multi_reduction <add>, %288, %cst_186 [0] : vector<32x128xf32> to vector<128xf32>
    %c0_187 = arith.constant 0 : index
    %c20 = arith.constant 20 : index
    %c0_188 = arith.constant 0 : index
    %290 = vector.load %arg4[%c0_187, %c20, %c0_188] : memref<1x136x128xf32, #tpu.memory_space<vmem>>, vector<1x1x128xf32>
    %291 = vector.shape_cast %290 : vector<1x1x128xf32> to vector<128xf32>
    %292 = vector.shape_cast %289 : vector<128xf32> to vector<1x1x128xf32>
    tpu.vector_store %arg4[%c0_187, %c20, %c0_188], %292 {strides = array<i32>} : memref<1x136x128xf32, #tpu.memory_space<vmem>>, vector<1x1x128xf32>,
    %cst_189 = arith.constant 0.000000e+00 : f32
    %293 = vector.broadcast %cst_189 : f32 to vector<32x128xf32>
    %294 = arith.select %285, %26, %293 : vector<32x128xi1>, vector<32x128xf32>
    %cst_190 = arith.constant dense<0.000000e+00> : vector<128xf32>
    %295 = vector.multi_reduction <add>, %294, %cst_190 [0] : vector<32x128xf32> to vector<128xf32>
    %c0_191 = arith.constant 0 : index
    %c84 = arith.constant 84 : index
    %c0_192 = arith.constant 0 : index
    %296 = vector.load %arg4[%c0_191, %c84, %c0_192] : memref<1x136x128xf32, #tpu.memory_space<vmem>>, vector<1x1x128xf32>
    %297 = vector.shape_cast %296 : vector<1x1x128xf32> to vector<128xf32>
    %298 = vector.shape_cast %295 : vector<128xf32> to vector<1x1x128xf32>
    tpu.vector_store %arg4[%c0_191, %c84, %c0_192], %298 {strides = array<i32>} : memref<1x136x128xf32, #tpu.memory_space<vmem>>, vector<1x1x128xf32>,
    %cst_193 = arith.constant 0.0223463364 : f32
    %299 = vector.broadcast %cst_193 : f32 to vector<32x128xf32>
    %300 = arith.cmpf oge, %26, %299 : vector<32x128xf32>
    %cst_194 = arith.constant 1.000000e+00 : f32
    %cst_195 = arith.constant 0.000000e+00 : f32
    %301 = vector.broadcast %cst_194 : f32 to vector<32x128xf32>
    %302 = vector.broadcast %cst_195 : f32 to vector<32x128xf32>
    %303 = arith.select %300, %301, %302 : vector<32x128xi1>, vector<32x128xf32>
    %cst_196 = arith.constant dense<0.000000e+00> : vector<128xf32>
    %304 = vector.multi_reduction <add>, %303, %cst_196 [0] : vector<32x128xf32> to vector<128xf32>
    %c0_197 = arith.constant 0 : index
    %c21 = arith.constant 21 : index
    %c0_198 = arith.constant 0 : index
    %305 = vector.load %arg4[%c0_197, %c21, %c0_198] : memref<1x136x128xf32, #tpu.memory_space<vmem>>, vector<1x1x128xf32>
    %306 = vector.shape_cast %305 : vector<1x1x128xf32> to vector<128xf32>
    %307 = vector.shape_cast %304 : vector<128xf32> to vector<1x1x128xf32>
    tpu.vector_store %arg4[%c0_197, %c21, %c0_198], %307 {strides = array<i32>} : memref<1x136x128xf32, #tpu.memory_space<vmem>>, vector<1x1x128xf32>,
    %cst_199 = arith.constant 0.000000e+00 : f32
    %308 = vector.broadcast %cst_199 : f32 to vector<32x128xf32>
    %309 = arith.select %300, %26, %308 : vector<32x128xi1>, vector<32x128xf32>
    %cst_200 = arith.constant dense<0.000000e+00> : vector<128xf32>
    %310 = vector.multi_reduction <add>, %309, %cst_200 [0] : vector<32x128xf32> to vector<128xf32>
    %c0_201 = arith.constant 0 : index
    %c85 = arith.constant 85 : index
    %c0_202 = arith.constant 0 : index
    %311 = vector.load %arg4[%c0_201, %c85, %c0_202] : memref<1x136x128xf32, #tpu.memory_space<vmem>>, vector<1x1x128xf32>
    %312 = vector.shape_cast %311 : vector<1x1x128xf32> to vector<128xf32>
    %313 = vector.shape_cast %310 : vector<128xf32> to vector<1x1x128xf32>
    tpu.vector_store %arg4[%c0_201, %c85, %c0_202], %313 {strides = array<i32>} : memref<1x136x128xf32, #tpu.memory_space<vmem>>, vector<1x1x128xf32>,
    %cst_203 = arith.constant 0.0268269572 : f32
    %314 = vector.broadcast %cst_203 : f32 to vector<32x128xf32>
    %315 = arith.cmpf oge, %26, %314 : vector<32x128xf32>
    %cst_204 = arith.constant 1.000000e+00 : f32
    %cst_205 = arith.constant 0.000000e+00 : f32
    %316 = vector.broadcast %cst_204 : f32 to vector<32x128xf32>
    %317 = vector.broadcast %cst_205 : f32 to vector<32x128xf32>
    %318 = arith.select %315, %316, %317 : vector<32x128xi1>, vector<32x128xf32>
    %cst_206 = arith.constant dense<0.000000e+00> : vector<128xf32>
    %319 = vector.multi_reduction <add>, %318, %cst_206 [0] : vector<32x128xf32> to vector<128xf32>
    %c0_207 = arith.constant 0 : index
    %c22 = arith.constant 22 : index
    %c0_208 = arith.constant 0 : index
    %320 = vector.load %arg4[%c0_207, %c22, %c0_208] : memref<1x136x128xf32, #tpu.memory_space<vmem>>, vector<1x1x128xf32>
    %321 = vector.shape_cast %320 : vector<1x1x128xf32> to vector<128xf32>
    %322 = vector.shape_cast %319 : vector<128xf32> to vector<1x1x128xf32>
    tpu.vector_store %arg4[%c0_207, %c22, %c0_208], %322 {strides = array<i32>} : memref<1x136x128xf32, #tpu.memory_space<vmem>>, vector<1x1x128xf32>,
    %cst_209 = arith.constant 0.000000e+00 : f32
    %323 = vector.broadcast %cst_209 : f32 to vector<32x128xf32>
    %324 = arith.select %315, %26, %323 : vector<32x128xi1>, vector<32x128xf32>
    %cst_210 = arith.constant dense<0.000000e+00> : vector<128xf32>
    %325 = vector.multi_reduction <add>, %324, %cst_210 [0] : vector<32x128xf32> to vector<128xf32>
    %c0_211 = arith.constant 0 : index
    %c86 = arith.constant 86 : index
    %c0_212 = arith.constant 0 : index
    %326 = vector.load %arg4[%c0_211, %c86, %c0_212] : memref<1x136x128xf32, #tpu.memory_space<vmem>>, vector<1x1x128xf32>
    %327 = vector.shape_cast %326 : vector<1x1x128xf32> to vector<128xf32>
    %328 = vector.shape_cast %325 : vector<128xf32> to vector<1x1x128xf32>
    tpu.vector_store %arg4[%c0_211, %c86, %c0_212], %328 {strides = array<i32>} : memref<1x136x128xf32, #tpu.memory_space<vmem>>, vector<1x1x128xf32>,
    %cst_213 = arith.constant 0.0322059803 : f32
    %329 = vector.broadcast %cst_213 : f32 to vector<32x128xf32>
    %330 = arith.cmpf oge, %26, %329 : vector<32x128xf32>
    %cst_214 = arith.constant 1.000000e+00 : f32
    %cst_215 = arith.constant 0.000000e+00 : f32
    %331 = vector.broadcast %cst_214 : f32 to vector<32x128xf32>
    %332 = vector.broadcast %cst_215 : f32 to vector<32x128xf32>
    %333 = arith.select %330, %331, %332 : vector<32x128xi1>, vector<32x128xf32>
    %cst_216 = arith.constant dense<0.000000e+00> : vector<128xf32>
    %334 = vector.multi_reduction <add>, %333, %cst_216 [0] : vector<32x128xf32> to vector<128xf32>
    %c0_217 = arith.constant 0 : index
    %c23 = arith.constant 23 : index
    %c0_218 = arith.constant 0 : index
    %335 = vector.load %arg4[%c0_217, %c23, %c0_218] : memref<1x136x128xf32, #tpu.memory_space<vmem>>, vector<1x1x128xf32>
    %336 = vector.shape_cast %335 : vector<1x1x128xf32> to vector<128xf32>
    %337 = vector.shape_cast %334 : vector<128xf32> to vector<1x1x128xf32>
    tpu.vector_store %arg4[%c0_217, %c23, %c0_218], %337 {strides = array<i32>} : memref<1x136x128xf32, #tpu.memory_space<vmem>>, vector<1x1x128xf32>,
    %cst_219 = arith.constant 0.000000e+00 : f32
    %338 = vector.broadcast %cst_219 : f32 to vector<32x128xf32>
    %339 = arith.select %330, %26, %338 : vector<32x128xi1>, vector<32x128xf32>
    %cst_220 = arith.constant dense<0.000000e+00> : vector<128xf32>
    %340 = vector.multi_reduction <add>, %339, %cst_220 [0] : vector<32x128xf32> to vector<128xf32>
    %c0_221 = arith.constant 0 : index
    %c87 = arith.constant 87 : index
    %c0_222 = arith.constant 0 : index
    %341 = vector.load %arg4[%c0_221, %c87, %c0_222] : memref<1x136x128xf32, #tpu.memory_space<vmem>>, vector<1x1x128xf32>
    %342 = vector.shape_cast %341 : vector<1x1x128xf32> to vector<128xf32>
    %343 = vector.shape_cast %340 : vector<128xf32> to vector<1x1x128xf32>
    tpu.vector_store %arg4[%c0_221, %c87, %c0_222], %343 {strides = array<i32>} : memref<1x136x128xf32, #tpu.memory_space<vmem>>, vector<1x1x128xf32>,
    %cst_223 = arith.constant 0.0386635363 : f32
    %344 = vector.broadcast %cst_223 : f32 to vector<32x128xf32>
    %345 = arith.cmpf oge, %26, %344 : vector<32x128xf32>
    %cst_224 = arith.constant 1.000000e+00 : f32
    %cst_225 = arith.constant 0.000000e+00 : f32
    %346 = vector.broadcast %cst_224 : f32 to vector<32x128xf32>
    %347 = vector.broadcast %cst_225 : f32 to vector<32x128xf32>
    %348 = arith.select %345, %346, %347 : vector<32x128xi1>, vector<32x128xf32>
    %cst_226 = arith.constant dense<0.000000e+00> : vector<128xf32>
    %349 = vector.multi_reduction <add>, %348, %cst_226 [0] : vector<32x128xf32> to vector<128xf32>
    %c0_227 = arith.constant 0 : index
    %c24 = arith.constant 24 : index
    %c0_228 = arith.constant 0 : index
    %350 = vector.load %arg4[%c0_227, %c24, %c0_228] : memref<1x136x128xf32, #tpu.memory_space<vmem>>, vector<1x1x128xf32>
    %351 = vector.shape_cast %350 : vector<1x1x128xf32> to vector<128xf32>
    %352 = vector.shape_cast %349 : vector<128xf32> to vector<1x1x128xf32>
    tpu.vector_store %arg4[%c0_227, %c24, %c0_228], %352 {strides = array<i32>} : memref<1x136x128xf32, #tpu.memory_space<vmem>>, vector<1x1x128xf32>,
    %cst_229 = arith.constant 0.000000e+00 : f32
    %353 = vector.broadcast %cst_229 : f32 to vector<32x128xf32>
    %354 = arith.select %345, %26, %353 : vector<32x128xi1>, vector<32x128xf32>
    %cst_230 = arith.constant dense<0.000000e+00> : vector<128xf32>
    %355 = vector.multi_reduction <add>, %354, %cst_230 [0] : vector<32x128xf32> to vector<128xf32>
    %c0_231 = arith.constant 0 : index
    %c88 = arith.constant 88 : index
    %c0_232 = arith.constant 0 : index
    %356 = vector.load %arg4[%c0_231, %c88, %c0_232] : memref<1x136x128xf32, #tpu.memory_space<vmem>>, vector<1x1x128xf32>
    %357 = vector.shape_cast %356 : vector<1x1x128xf32> to vector<128xf32>
    %358 = vector.shape_cast %355 : vector<128xf32> to vector<1x1x128xf32>
    tpu.vector_store %arg4[%c0_231, %c88, %c0_232], %358 {strides = array<i32>} : memref<1x136x128xf32, #tpu.memory_space<vmem>>, vector<1x1x128xf32>,
    %cst_233 = arith.constant 0.0464158878 : f32
    %359 = vector.broadcast %cst_233 : f32 to vector<32x128xf32>
    %360 = arith.cmpf oge, %26, %359 : vector<32x128xf32>
    %cst_234 = arith.constant 1.000000e+00 : f32
    %cst_235 = arith.constant 0.000000e+00 : f32
    %361 = vector.broadcast %cst_234 : f32 to vector<32x128xf32>
    %362 = vector.broadcast %cst_235 : f32 to vector<32x128xf32>
    %363 = arith.select %360, %361, %362 : vector<32x128xi1>, vector<32x128xf32>
    %cst_236 = arith.constant dense<0.000000e+00> : vector<128xf32>
    %364 = vector.multi_reduction <add>, %363, %cst_236 [0] : vector<32x128xf32> to vector<128xf32>
    %c0_237 = arith.constant 0 : index
    %c25 = arith.constant 25 : index
    %c0_238 = arith.constant 0 : index
    %365 = vector.load %arg4[%c0_237, %c25, %c0_238] : memref<1x136x128xf32, #tpu.memory_space<vmem>>, vector<1x1x128xf32>
    %366 = vector.shape_cast %365 : vector<1x1x128xf32> to vector<128xf32>
    %367 = vector.shape_cast %364 : vector<128xf32> to vector<1x1x128xf32>
    tpu.vector_store %arg4[%c0_237, %c25, %c0_238], %367 {strides = array<i32>} : memref<1x136x128xf32, #tpu.memory_space<vmem>>, vector<1x1x128xf32>,
    %cst_239 = arith.constant 0.000000e+00 : f32
    %368 = vector.broadcast %cst_239 : f32 to vector<32x128xf32>
    %369 = arith.select %360, %26, %368 : vector<32x128xi1>, vector<32x128xf32>
    %cst_240 = arith.constant dense<0.000000e+00> : vector<128xf32>
    %370 = vector.multi_reduction <add>, %369, %cst_240 [0] : vector<32x128xf32> to vector<128xf32>
    %c0_241 = arith.constant 0 : index
    %c89 = arith.constant 89 : index
    %c0_242 = arith.constant 0 : index
    %371 = vector.load %arg4[%c0_241, %c89, %c0_242] : memref<1x136x128xf32, #tpu.memory_space<vmem>>, vector<1x1x128xf32>
    %372 = vector.shape_cast %371 : vector<1x1x128xf32> to vector<128xf32>
    %373 = vector.shape_cast %370 : vector<128xf32> to vector<1x1x128xf32>
    tpu.vector_store %arg4[%c0_241, %c89, %c0_242], %373 {strides = array<i32>} : memref<1x136x128xf32, #tpu.memory_space<vmem>>, vector<1x1x128xf32>,
    %cst_243 = arith.constant 0.0557226464 : f32
    %374 = vector.broadcast %cst_243 : f32 to vector<32x128xf32>
    %375 = arith.cmpf oge, %26, %374 : vector<32x128xf32>
    %cst_244 = arith.constant 1.000000e+00 : f32
    %cst_245 = arith.constant 0.000000e+00 : f32
    %376 = vector.broadcast %cst_244 : f32 to vector<32x128xf32>
    %377 = vector.broadcast %cst_245 : f32 to vector<32x128xf32>
    %378 = arith.select %375, %376, %377 : vector<32x128xi1>, vector<32x128xf32>
    %cst_246 = arith.constant dense<0.000000e+00> : vector<128xf32>
    %379 = vector.multi_reduction <add>, %378, %cst_246 [0] : vector<32x128xf32> to vector<128xf32>
    %c0_247 = arith.constant 0 : index
    %c26 = arith.constant 26 : index
    %c0_248 = arith.constant 0 : index
    %380 = vector.load %arg4[%c0_247, %c26, %c0_248] : memref<1x136x128xf32, #tpu.memory_space<vmem>>, vector<1x1x128xf32>
    %381 = vector.shape_cast %380 : vector<1x1x128xf32> to vector<128xf32>
    %382 = vector.shape_cast %379 : vector<128xf32> to vector<1x1x128xf32>
    tpu.vector_store %arg4[%c0_247, %c26, %c0_248], %382 {strides = array<i32>} : memref<1x136x128xf32, #tpu.memory_space<vmem>>, vector<1x1x128xf32>,
    %cst_249 = arith.constant 0.000000e+00 : f32
    %383 = vector.broadcast %cst_249 : f32 to vector<32x128xf32>
    %384 = arith.select %375, %26, %383 : vector<32x128xi1>, vector<32x128xf32>
    %cst_250 = arith.constant dense<0.000000e+00> : vector<128xf32>
    %385 = vector.multi_reduction <add>, %384, %cst_250 [0] : vector<32x128xf32> to vector<128xf32>
    %c0_251 = arith.constant 0 : index
    %c90 = arith.constant 90 : index
    %c0_252 = arith.constant 0 : index
    %386 = vector.load %arg4[%c0_251, %c90, %c0_252] : memref<1x136x128xf32, #tpu.memory_space<vmem>>, vector<1x1x128xf32>
    %387 = vector.shape_cast %386 : vector<1x1x128xf32> to vector<128xf32>
    %388 = vector.shape_cast %385 : vector<128xf32> to vector<1x1x128xf32>
    tpu.vector_store %arg4[%c0_251, %c90, %c0_252], %388 {strides = array<i32>} : memref<1x136x128xf32, #tpu.memory_space<vmem>>, vector<1x1x128xf32>,
    %cst_253 = arith.constant 0.0668954849 : f32
    %389 = vector.broadcast %cst_253 : f32 to vector<32x128xf32>
    %390 = arith.cmpf oge, %26, %389 : vector<32x128xf32>
    %cst_254 = arith.constant 1.000000e+00 : f32
    %cst_255 = arith.constant 0.000000e+00 : f32
    %391 = vector.broadcast %cst_254 : f32 to vector<32x128xf32>
    %392 = vector.broadcast %cst_255 : f32 to vector<32x128xf32>
    %393 = arith.select %390, %391, %392 : vector<32x128xi1>, vector<32x128xf32>
    %cst_256 = arith.constant dense<0.000000e+00> : vector<128xf32>
    %394 = vector.multi_reduction <add>, %393, %cst_256 [0] : vector<32x128xf32> to vector<128xf32>
    %c0_257 = arith.constant 0 : index
    %c27 = arith.constant 27 : index
    %c0_258 = arith.constant 0 : index
    %395 = vector.load %arg4[%c0_257, %c27, %c0_258] : memref<1x136x128xf32, #tpu.memory_space<vmem>>, vector<1x1x128xf32>
    %396 = vector.shape_cast %395 : vector<1x1x128xf32> to vector<128xf32>
    %397 = vector.shape_cast %394 : vector<128xf32> to vector<1x1x128xf32>
    tpu.vector_store %arg4[%c0_257, %c27, %c0_258], %397 {strides = array<i32>} : memref<1x136x128xf32, #tpu.memory_space<vmem>>, vector<1x1x128xf32>,
    %cst_259 = arith.constant 0.000000e+00 : f32
    %398 = vector.broadcast %cst_259 : f32 to vector<32x128xf32>
    %399 = arith.select %390, %26, %398 : vector<32x128xi1>, vector<32x128xf32>
    %cst_260 = arith.constant dense<0.000000e+00> : vector<128xf32>
    %400 = vector.multi_reduction <add>, %399, %cst_260 [0] : vector<32x128xf32> to vector<128xf32>
    %c0_261 = arith.constant 0 : index
    %c91 = arith.constant 91 : index
    %c0_262 = arith.constant 0 : index
    %401 = vector.load %arg4[%c0_261, %c91, %c0_262] : memref<1x136x128xf32, #tpu.memory_space<vmem>>, vector<1x1x128xf32>
    %402 = vector.shape_cast %401 : vector<1x1x128xf32> to vector<128xf32>
    %403 = vector.shape_cast %400 : vector<128xf32> to vector<1x1x128xf32>
    tpu.vector_store %arg4[%c0_261, %c91, %c0_262], %403 {strides = array<i32>} : memref<1x136x128xf32, #tpu.memory_space<vmem>>, vector<1x1x128xf32>,
    %cst_263 = arith.constant 0.0803085715 : f32
    %404 = vector.broadcast %cst_263 : f32 to vector<32x128xf32>
    %405 = arith.cmpf oge, %26, %404 : vector<32x128xf32>
    %cst_264 = arith.constant 1.000000e+00 : f32
    %cst_265 = arith.constant 0.000000e+00 : f32
    %406 = vector.broadcast %cst_264 : f32 to vector<32x128xf32>
    %407 = vector.broadcast %cst_265 : f32 to vector<32x128xf32>
    %408 = arith.select %405, %406, %407 : vector<32x128xi1>, vector<32x128xf32>
    %cst_266 = arith.constant dense<0.000000e+00> : vector<128xf32>
    %409 = vector.multi_reduction <add>, %408, %cst_266 [0] : vector<32x128xf32> to vector<128xf32>
    %c0_267 = arith.constant 0 : index
    %c28 = arith.constant 28 : index
    %c0_268 = arith.constant 0 : index
    %410 = vector.load %arg4[%c0_267, %c28, %c0_268] : memref<1x136x128xf32, #tpu.memory_space<vmem>>, vector<1x1x128xf32>
    %411 = vector.shape_cast %410 : vector<1x1x128xf32> to vector<128xf32>
    %412 = vector.shape_cast %409 : vector<128xf32> to vector<1x1x128xf32>
    tpu.vector_store %arg4[%c0_267, %c28, %c0_268], %412 {strides = array<i32>} : memref<1x136x128xf32, #tpu.memory_space<vmem>>, vector<1x1x128xf32>,
    %cst_269 = arith.constant 0.000000e+00 : f32
    %413 = vector.broadcast %cst_269 : f32 to vector<32x128xf32>
    %414 = arith.select %405, %26, %413 : vector<32x128xi1>, vector<32x128xf32>
    %cst_270 = arith.constant dense<0.000000e+00> : vector<128xf32>
    %415 = vector.multi_reduction <add>, %414, %cst_270 [0] : vector<32x128xf32> to vector<128xf32>
    %c0_271 = arith.constant 0 : index
    %c92 = arith.constant 92 : index
    %c0_272 = arith.constant 0 : index
    %416 = vector.load %arg4[%c0_271, %c92, %c0_272] : memref<1x136x128xf32, #tpu.memory_space<vmem>>, vector<1x1x128xf32>
    %417 = vector.shape_cast %416 : vector<1x1x128xf32> to vector<128xf32>
    %418 = vector.shape_cast %415 : vector<128xf32> to vector<1x1x128xf32>
    tpu.vector_store %arg4[%c0_271, %c92, %c0_272], %418 {strides = array<i32>} : memref<1x136x128xf32, #tpu.memory_space<vmem>>, vector<1x1x128xf32>,
    %cst_273 = arith.constant 0.0964110866 : f32
    %419 = vector.broadcast %cst_273 : f32 to vector<32x128xf32>
    %420 = arith.cmpf oge, %26, %419 : vector<32x128xf32>
    %cst_274 = arith.constant 1.000000e+00 : f32
    %cst_275 = arith.constant 0.000000e+00 : f32
    %421 = vector.broadcast %cst_274 : f32 to vector<32x128xf32>
    %422 = vector.broadcast %cst_275 : f32 to vector<32x128xf32>
    %423 = arith.select %420, %421, %422 : vector<32x128xi1>, vector<32x128xf32>
    %cst_276 = arith.constant dense<0.000000e+00> : vector<128xf32>
    %424 = vector.multi_reduction <add>, %423, %cst_276 [0] : vector<32x128xf32> to vector<128xf32>
    %c0_277 = arith.constant 0 : index
    %c29 = arith.constant 29 : index
    %c0_278 = arith.constant 0 : index
    %425 = vector.load %arg4[%c0_277, %c29, %c0_278] : memref<1x136x128xf32, #tpu.memory_space<vmem>>, vector<1x1x128xf32>
    %426 = vector.shape_cast %425 : vector<1x1x128xf32> to vector<128xf32>
    %427 = vector.shape_cast %424 : vector<128xf32> to vector<1x1x128xf32>
    tpu.vector_store %arg4[%c0_277, %c29, %c0_278], %427 {strides = array<i32>} : memref<1x136x128xf32, #tpu.memory_space<vmem>>, vector<1x1x128xf32>,
    %cst_279 = arith.constant 0.000000e+00 : f32
    %428 = vector.broadcast %cst_279 : f32 to vector<32x128xf32>
    %429 = arith.select %420, %26, %428 : vector<32x128xi1>, vector<32x128xf32>
    %cst_280 = arith.constant dense<0.000000e+00> : vector<128xf32>
    %430 = vector.multi_reduction <add>, %429, %cst_280 [0] : vector<32x128xf32> to vector<128xf32>
    %c0_281 = arith.constant 0 : index
    %c93 = arith.constant 93 : index
    %c0_282 = arith.constant 0 : index
    %431 = vector.load %arg4[%c0_281, %c93, %c0_282] : memref<1x136x128xf32, #tpu.memory_space<vmem>>, vector<1x1x128xf32>
    %432 = vector.shape_cast %431 : vector<1x1x128xf32> to vector<128xf32>
    %433 = vector.shape_cast %430 : vector<128xf32> to vector<1x1x128xf32>
    tpu.vector_store %arg4[%c0_281, %c93, %c0_282], %433 {strides = array<i32>} : memref<1x136x128xf32, #tpu.memory_space<vmem>>, vector<1x1x128xf32>,
    %cst_283 = arith.constant 0.115742289 : f32
    %434 = vector.broadcast %cst_283 : f32 to vector<32x128xf32>
    %435 = arith.cmpf oge, %26, %434 : vector<32x128xf32>
    %cst_284 = arith.constant 1.000000e+00 : f32
    %cst_285 = arith.constant 0.000000e+00 : f32
    %436 = vector.broadcast %cst_284 : f32 to vector<32x128xf32>
    %437 = vector.broadcast %cst_285 : f32 to vector<32x128xf32>
    %438 = arith.select %435, %436, %437 : vector<32x128xi1>, vector<32x128xf32>
    %cst_286 = arith.constant dense<0.000000e+00> : vector<128xf32>
    %439 = vector.multi_reduction <add>, %438, %cst_286 [0] : vector<32x128xf32> to vector<128xf32>
    %c0_287 = arith.constant 0 : index
    %c30 = arith.constant 30 : index
    %c0_288 = arith.constant 0 : index
    %440 = vector.load %arg4[%c0_287, %c30, %c0_288] : memref<1x136x128xf32, #tpu.memory_space<vmem>>, vector<1x1x128xf32>
    %441 = vector.shape_cast %440 : vector<1x1x128xf32> to vector<128xf32>
    %442 = vector.shape_cast %439 : vector<128xf32> to vector<1x1x128xf32>
    tpu.vector_store %arg4[%c0_287, %c30, %c0_288], %442 {strides = array<i32>} : memref<1x136x128xf32, #tpu.memory_space<vmem>>, vector<1x1x128xf32>,
    %cst_289 = arith.constant 0.000000e+00 : f32
    %443 = vector.broadcast %cst_289 : f32 to vector<32x128xf32>
    %444 = arith.select %435, %26, %443 : vector<32x128xi1>, vector<32x128xf32>
    %cst_290 = arith.constant dense<0.000000e+00> : vector<128xf32>
    %445 = vector.multi_reduction <add>, %444, %cst_290 [0] : vector<32x128xf32> to vector<128xf32>
    %c0_291 = arith.constant 0 : index
    %c94 = arith.constant 94 : index
    %c0_292 = arith.constant 0 : index
    %446 = vector.load %arg4[%c0_291, %c94, %c0_292] : memref<1x136x128xf32, #tpu.memory_space<vmem>>, vector<1x1x128xf32>
    %447 = vector.shape_cast %446 : vector<1x1x128xf32> to vector<128xf32>
    %448 = vector.shape_cast %445 : vector<128xf32> to vector<1x1x128xf32>
    tpu.vector_store %arg4[%c0_291, %c94, %c0_292], %448 {strides = array<i32>} : memref<1x136x128xf32, #tpu.memory_space<vmem>>, vector<1x1x128xf32>,
    %cst_293 = arith.constant 0.138949543 : f32
    %449 = vector.broadcast %cst_293 : f32 to vector<32x128xf32>
    %450 = arith.cmpf oge, %26, %449 : vector<32x128xf32>
    %cst_294 = arith.constant 1.000000e+00 : f32
    %cst_295 = arith.constant 0.000000e+00 : f32
    %451 = vector.broadcast %cst_294 : f32 to vector<32x128xf32>
    %452 = vector.broadcast %cst_295 : f32 to vector<32x128xf32>
    %453 = arith.select %450, %451, %452 : vector<32x128xi1>, vector<32x128xf32>
    %cst_296 = arith.constant dense<0.000000e+00> : vector<128xf32>
    %454 = vector.multi_reduction <add>, %453, %cst_296 [0] : vector<32x128xf32> to vector<128xf32>
    %c0_297 = arith.constant 0 : index
    %c31 = arith.constant 31 : index
    %c0_298 = arith.constant 0 : index
    %455 = vector.load %arg4[%c0_297, %c31, %c0_298] : memref<1x136x128xf32, #tpu.memory_space<vmem>>, vector<1x1x128xf32>
    %456 = vector.shape_cast %455 : vector<1x1x128xf32> to vector<128xf32>
    %457 = vector.shape_cast %454 : vector<128xf32> to vector<1x1x128xf32>
    tpu.vector_store %arg4[%c0_297, %c31, %c0_298], %457 {strides = array<i32>} : memref<1x136x128xf32, #tpu.memory_space<vmem>>, vector<1x1x128xf32>,
    %cst_299 = arith.constant 0.000000e+00 : f32
    %458 = vector.broadcast %cst_299 : f32 to vector<32x128xf32>
    %459 = arith.select %450, %26, %458 : vector<32x128xi1>, vector<32x128xf32>
    %cst_300 = arith.constant dense<0.000000e+00> : vector<128xf32>
    %460 = vector.multi_reduction <add>, %459, %cst_300 [0] : vector<32x128xf32> to vector<128xf32>
    %c0_301 = arith.constant 0 : index
    %c95 = arith.constant 95 : index
    %c0_302 = arith.constant 0 : index
    %461 = vector.load %arg4[%c0_301, %c95, %c0_302] : memref<1x136x128xf32, #tpu.memory_space<vmem>>, vector<1x1x128xf32>
    %462 = vector.shape_cast %461 : vector<1x1x128xf32> to vector<128xf32>
    %463 = vector.shape_cast %460 : vector<128xf32> to vector<1x1x128xf32>
    tpu.vector_store %arg4[%c0_301, %c95, %c0_302], %463 {strides = array<i32>} : memref<1x136x128xf32, #tpu.memory_space<vmem>>, vector<1x1x128xf32>,
    %cst_303 = arith.constant 0.166810051 : f32
    %464 = vector.broadcast %cst_303 : f32 to vector<32x128xf32>
    %465 = arith.cmpf oge, %26, %464 : vector<32x128xf32>
    %cst_304 = arith.constant 1.000000e+00 : f32
    %cst_305 = arith.constant 0.000000e+00 : f32
    %466 = vector.broadcast %cst_304 : f32 to vector<32x128xf32>
    %467 = vector.broadcast %cst_305 : f32 to vector<32x128xf32>
    %468 = arith.select %465, %466, %467 : vector<32x128xi1>, vector<32x128xf32>
    %cst_306 = arith.constant dense<0.000000e+00> : vector<128xf32>
    %469 = vector.multi_reduction <add>, %468, %cst_306 [0] : vector<32x128xf32> to vector<128xf32>
    %c0_307 = arith.constant 0 : index
    %c32 = arith.constant 32 : index
    %c0_308 = arith.constant 0 : index
    %470 = vector.load %arg4[%c0_307, %c32, %c0_308] : memref<1x136x128xf32, #tpu.memory_space<vmem>>, vector<1x1x128xf32>
    %471 = vector.shape_cast %470 : vector<1x1x128xf32> to vector<128xf32>
    %472 = vector.shape_cast %469 : vector<128xf32> to vector<1x1x128xf32>
    tpu.vector_store %arg4[%c0_307, %c32, %c0_308], %472 {strides = array<i32>} : memref<1x136x128xf32, #tpu.memory_space<vmem>>, vector<1x1x128xf32>,
    %cst_309 = arith.constant 0.000000e+00 : f32
    %473 = vector.broadcast %cst_309 : f32 to vector<32x128xf32>
    %474 = arith.select %465, %26, %473 : vector<32x128xi1>, vector<32x128xf32>
    %cst_310 = arith.constant dense<0.000000e+00> : vector<128xf32>
    %475 = vector.multi_reduction <add>, %474, %cst_310 [0] : vector<32x128xf32> to vector<128xf32>
    %c0_311 = arith.constant 0 : index
    %c96 = arith.constant 96 : index
    %c0_312 = arith.constant 0 : index
    %476 = vector.load %arg4[%c0_311, %c96, %c0_312] : memref<1x136x128xf32, #tpu.memory_space<vmem>>, vector<1x1x128xf32>
    %477 = vector.shape_cast %476 : vector<1x1x128xf32> to vector<128xf32>
    %478 = vector.shape_cast %475 : vector<128xf32> to vector<1x1x128xf32>
    tpu.vector_store %arg4[%c0_311, %c96, %c0_312], %478 {strides = array<i32>} : memref<1x136x128xf32, #tpu.memory_space<vmem>>, vector<1x1x128xf32>,
    %cst_313 = arith.constant 0.20025681 : f32
    %479 = vector.broadcast %cst_313 : f32 to vector<32x128xf32>
    %480 = arith.cmpf oge, %26, %479 : vector<32x128xf32>
    %cst_314 = arith.constant 1.000000e+00 : f32
    %cst_315 = arith.constant 0.000000e+00 : f32
    %481 = vector.broadcast %cst_314 : f32 to vector<32x128xf32>
    %482 = vector.broadcast %cst_315 : f32 to vector<32x128xf32>
    %483 = arith.select %480, %481, %482 : vector<32x128xi1>, vector<32x128xf32>
    %cst_316 = arith.constant dense<0.000000e+00> : vector<128xf32>
    %484 = vector.multi_reduction <add>, %483, %cst_316 [0] : vector<32x128xf32> to vector<128xf32>
    %c0_317 = arith.constant 0 : index
    %c33 = arith.constant 33 : index
    %c0_318 = arith.constant 0 : index
    %485 = vector.load %arg4[%c0_317, %c33, %c0_318] : memref<1x136x128xf32, #tpu.memory_space<vmem>>, vector<1x1x128xf32>
    %486 = vector.shape_cast %485 : vector<1x1x128xf32> to vector<128xf32>
    %487 = vector.shape_cast %484 : vector<128xf32> to vector<1x1x128xf32>
    tpu.vector_store %arg4[%c0_317, %c33, %c0_318], %487 {strides = array<i32>} : memref<1x136x128xf32, #tpu.memory_space<vmem>>, vector<1x1x128xf32>,
    %cst_319 = arith.constant 0.000000e+00 : f32
    %488 = vector.broadcast %cst_319 : f32 to vector<32x128xf32>
    %489 = arith.select %480, %26, %488 : vector<32x128xi1>, vector<32x128xf32>
    %cst_320 = arith.constant dense<0.000000e+00> : vector<128xf32>
    %490 = vector.multi_reduction <add>, %489, %cst_320 [0] : vector<32x128xf32> to vector<128xf32>
    %c0_321 = arith.constant 0 : index
    %c97 = arith.constant 97 : index
    %c0_322 = arith.constant 0 : index
    %491 = vector.load %arg4[%c0_321, %c97, %c0_322] : memref<1x136x128xf32, #tpu.memory_space<vmem>>, vector<1x1x128xf32>
    %492 = vector.shape_cast %491 : vector<1x1x128xf32> to vector<128xf32>
    %493 = vector.shape_cast %490 : vector<128xf32> to vector<1x1x128xf32>
    tpu.vector_store %arg4[%c0_321, %c97, %c0_322], %493 {strides = array<i32>} : memref<1x136x128xf32, #tpu.memory_space<vmem>>, vector<1x1x128xf32>,
    %cst_323 = arith.constant 0.240409926 : f32
    %494 = vector.broadcast %cst_323 : f32 to vector<32x128xf32>
    %495 = arith.cmpf oge, %26, %494 : vector<32x128xf32>
    %cst_324 = arith.constant 1.000000e+00 : f32
    %cst_325 = arith.constant 0.000000e+00 : f32
    %496 = vector.broadcast %cst_324 : f32 to vector<32x128xf32>
    %497 = vector.broadcast %cst_325 : f32 to vector<32x128xf32>
    %498 = arith.select %495, %496, %497 : vector<32x128xi1>, vector<32x128xf32>
    %cst_326 = arith.constant dense<0.000000e+00> : vector<128xf32>
    %499 = vector.multi_reduction <add>, %498, %cst_326 [0] : vector<32x128xf32> to vector<128xf32>
    %c0_327 = arith.constant 0 : index
    %c34 = arith.constant 34 : index
    %c0_328 = arith.constant 0 : index
    %500 = vector.load %arg4[%c0_327, %c34, %c0_328] : memref<1x136x128xf32, #tpu.memory_space<vmem>>, vector<1x1x128xf32>
    %501 = vector.shape_cast %500 : vector<1x1x128xf32> to vector<128xf32>
    %502 = vector.shape_cast %499 : vector<128xf32> to vector<1x1x128xf32>
    tpu.vector_store %arg4[%c0_327, %c34, %c0_328], %502 {strides = array<i32>} : memref<1x136x128xf32, #tpu.memory_space<vmem>>, vector<1x1x128xf32>,
    %cst_329 = arith.constant 0.000000e+00 : f32
    %503 = vector.broadcast %cst_329 : f32 to vector<32x128xf32>
    %504 = arith.select %495, %26, %503 : vector<32x128xi1>, vector<32x128xf32>
    %cst_330 = arith.constant dense<0.000000e+00> : vector<128xf32>
    %505 = vector.multi_reduction <add>, %504, %cst_330 [0] : vector<32x128xf32> to vector<128xf32>
    %c0_331 = arith.constant 0 : index
    %c98 = arith.constant 98 : index
    %c0_332 = arith.constant 0 : index
    %506 = vector.load %arg4[%c0_331, %c98, %c0_332] : memref<1x136x128xf32, #tpu.memory_space<vmem>>, vector<1x1x128xf32>
    %507 = vector.shape_cast %506 : vector<1x1x128xf32> to vector<128xf32>
    %508 = vector.shape_cast %505 : vector<128xf32> to vector<1x1x128xf32>
    tpu.vector_store %arg4[%c0_331, %c98, %c0_332], %508 {strides = array<i32>} : memref<1x136x128xf32, #tpu.memory_space<vmem>>, vector<1x1x128xf32>,
    %cst_333 = arith.constant 0.288614035 : f32
    %509 = vector.broadcast %cst_333 : f32 to vector<32x128xf32>
    %510 = arith.cmpf oge, %26, %509 : vector<32x128xf32>
    %cst_334 = arith.constant 1.000000e+00 : f32
    %cst_335 = arith.constant 0.000000e+00 : f32
    %511 = vector.broadcast %cst_334 : f32 to vector<32x128xf32>
    %512 = vector.broadcast %cst_335 : f32 to vector<32x128xf32>
    %513 = arith.select %510, %511, %512 : vector<32x128xi1>, vector<32x128xf32>
    %cst_336 = arith.constant dense<0.000000e+00> : vector<128xf32>
    %514 = vector.multi_reduction <add>, %513, %cst_336 [0] : vector<32x128xf32> to vector<128xf32>
    %c0_337 = arith.constant 0 : index
    %c35 = arith.constant 35 : index
    %c0_338 = arith.constant 0 : index
    %515 = vector.load %arg4[%c0_337, %c35, %c0_338] : memref<1x136x128xf32, #tpu.memory_space<vmem>>, vector<1x1x128xf32>
    %516 = vector.shape_cast %515 : vector<1x1x128xf32> to vector<128xf32>
    %517 = vector.shape_cast %514 : vector<128xf32> to vector<1x1x128xf32>
    tpu.vector_store %arg4[%c0_337, %c35, %c0_338], %517 {strides = array<i32>} : memref<1x136x128xf32, #tpu.memory_space<vmem>>, vector<1x1x128xf32>,
    %cst_339 = arith.constant 0.000000e+00 : f32
    %518 = vector.broadcast %cst_339 : f32 to vector<32x128xf32>
    %519 = arith.select %510, %26, %518 : vector<32x128xi1>, vector<32x128xf32>
    %cst_340 = arith.constant dense<0.000000e+00> : vector<128xf32>
    %520 = vector.multi_reduction <add>, %519, %cst_340 [0] : vector<32x128xf32> to vector<128xf32>
    %c0_341 = arith.constant 0 : index
    %c99 = arith.constant 99 : index
    %c0_342 = arith.constant 0 : index
    %521 = vector.load %arg4[%c0_341, %c99, %c0_342] : memref<1x136x128xf32, #tpu.memory_space<vmem>>, vector<1x1x128xf32>
    %522 = vector.shape_cast %521 : vector<1x1x128xf32> to vector<128xf32>
    %523 = vector.shape_cast %520 : vector<128xf32> to vector<1x1x128xf32>
    tpu.vector_store %arg4[%c0_341, %c99, %c0_342], %523 {strides = array<i32>} : memref<1x136x128xf32, #tpu.memory_space<vmem>>, vector<1x1x128xf32>,
    %cst_343 = arith.constant 0.346483499 : f32
    %524 = vector.broadcast %cst_343 : f32 to vector<32x128xf32>
    %525 = arith.cmpf oge, %26, %524 : vector<32x128xf32>
    %cst_344 = arith.constant 1.000000e+00 : f32
    %cst_345 = arith.constant 0.000000e+00 : f32
    %526 = vector.broadcast %cst_344 : f32 to vector<32x128xf32>
    %527 = vector.broadcast %cst_345 : f32 to vector<32x128xf32>
    %528 = arith.select %525, %526, %527 : vector<32x128xi1>, vector<32x128xf32>
    %cst_346 = arith.constant dense<0.000000e+00> : vector<128xf32>
    %529 = vector.multi_reduction <add>, %528, %cst_346 [0] : vector<32x128xf32> to vector<128xf32>
    %c0_347 = arith.constant 0 : index
    %c36 = arith.constant 36 : index
    %c0_348 = arith.constant 0 : index
    %530 = vector.load %arg4[%c0_347, %c36, %c0_348] : memref<1x136x128xf32, #tpu.memory_space<vmem>>, vector<1x1x128xf32>
    %531 = vector.shape_cast %530 : vector<1x1x128xf32> to vector<128xf32>
    %532 = vector.shape_cast %529 : vector<128xf32> to vector<1x1x128xf32>
    tpu.vector_store %arg4[%c0_347, %c36, %c0_348], %532 {strides = array<i32>} : memref<1x136x128xf32, #tpu.memory_space<vmem>>, vector<1x1x128xf32>,
    %cst_349 = arith.constant 0.000000e+00 : f32
    %533 = vector.broadcast %cst_349 : f32 to vector<32x128xf32>
    %534 = arith.select %525, %26, %533 : vector<32x128xi1>, vector<32x128xf32>
    %cst_350 = arith.constant dense<0.000000e+00> : vector<128xf32>
    %535 = vector.multi_reduction <add>, %534, %cst_350 [0] : vector<32x128xf32> to vector<128xf32>
    %c0_351 = arith.constant 0 : index
    %c100 = arith.constant 100 : index
    %c0_352 = arith.constant 0 : index
    %536 = vector.load %arg4[%c0_351, %c100, %c0_352] : memref<1x136x128xf32, #tpu.memory_space<vmem>>, vector<1x1x128xf32>
    %537 = vector.shape_cast %536 : vector<1x1x128xf32> to vector<128xf32>
    %538 = vector.shape_cast %535 : vector<128xf32> to vector<1x1x128xf32>
    tpu.vector_store %arg4[%c0_351, %c100, %c0_352], %538 {strides = array<i32>} : memref<1x136x128xf32, #tpu.memory_space<vmem>>, vector<1x1x128xf32>,
    %cst_353 = arith.constant 0.415956229 : f32
    %539 = vector.broadcast %cst_353 : f32 to vector<32x128xf32>
    %540 = arith.cmpf oge, %26, %539 : vector<32x128xf32>
    %cst_354 = arith.constant 1.000000e+00 : f32
    %cst_355 = arith.constant 0.000000e+00 : f32
    %541 = vector.broadcast %cst_354 : f32 to vector<32x128xf32>
    %542 = vector.broadcast %cst_355 : f32 to vector<32x128xf32>
    %543 = arith.select %540, %541, %542 : vector<32x128xi1>, vector<32x128xf32>
    %cst_356 = arith.constant dense<0.000000e+00> : vector<128xf32>
    %544 = vector.multi_reduction <add>, %543, %cst_356 [0] : vector<32x128xf32> to vector<128xf32>
    %c0_357 = arith.constant 0 : index
    %c37 = arith.constant 37 : index
    %c0_358 = arith.constant 0 : index
    %545 = vector.load %arg4[%c0_357, %c37, %c0_358] : memref<1x136x128xf32, #tpu.memory_space<vmem>>, vector<1x1x128xf32>
    %546 = vector.shape_cast %545 : vector<1x1x128xf32> to vector<128xf32>
    %547 = vector.shape_cast %544 : vector<128xf32> to vector<1x1x128xf32>
    tpu.vector_store %arg4[%c0_357, %c37, %c0_358], %547 {strides = array<i32>} : memref<1x136x128xf32, #tpu.memory_space<vmem>>, vector<1x1x128xf32>,
    %cst_359 = arith.constant 0.000000e+00 : f32
    %548 = vector.broadcast %cst_359 : f32 to vector<32x128xf32>
    %549 = arith.select %540, %26, %548 : vector<32x128xi1>, vector<32x128xf32>
    %cst_360 = arith.constant dense<0.000000e+00> : vector<128xf32>
    %550 = vector.multi_reduction <add>, %549, %cst_360 [0] : vector<32x128xf32> to vector<128xf32>
    %c0_361 = arith.constant 0 : index
    %c101 = arith.constant 101 : index
    %c0_362 = arith.constant 0 : index
    %551 = vector.load %arg4[%c0_361, %c101, %c0_362] : memref<1x136x128xf32, #tpu.memory_space<vmem>>, vector<1x1x128xf32>
    %552 = vector.shape_cast %551 : vector<1x1x128xf32> to vector<128xf32>
    %553 = vector.shape_cast %550 : vector<128xf32> to vector<1x1x128xf32>
    tpu.vector_store %arg4[%c0_361, %c101, %c0_362], %553 {strides = array<i32>} : memref<1x136x128xf32, #tpu.memory_space<vmem>>, vector<1x1x128xf32>,
    %cst_363 = arith.constant 0.499358803 : f32
    %554 = vector.broadcast %cst_363 : f32 to vector<32x128xf32>
    %555 = arith.cmpf oge, %26, %554 : vector<32x128xf32>
    %cst_364 = arith.constant 1.000000e+00 : f32
    %cst_365 = arith.constant 0.000000e+00 : f32
    %556 = vector.broadcast %cst_364 : f32 to vector<32x128xf32>
    %557 = vector.broadcast %cst_365 : f32 to vector<32x128xf32>
    %558 = arith.select %555, %556, %557 : vector<32x128xi1>, vector<32x128xf32>
    %cst_366 = arith.constant dense<0.000000e+00> : vector<128xf32>
    %559 = vector.multi_reduction <add>, %558, %cst_366 [0] : vector<32x128xf32> to vector<128xf32>
    %c0_367 = arith.constant 0 : index
    %c38 = arith.constant 38 : index
    %c0_368 = arith.constant 0 : index
    %560 = vector.load %arg4[%c0_367, %c38, %c0_368] : memref<1x136x128xf32, #tpu.memory_space<vmem>>, vector<1x1x128xf32>
    %561 = vector.shape_cast %560 : vector<1x1x128xf32> to vector<128xf32>
    %562 = vector.shape_cast %559 : vector<128xf32> to vector<1x1x128xf32>
    tpu.vector_store %arg4[%c0_367, %c38, %c0_368], %562 {strides = array<i32>} : memref<1x136x128xf32, #tpu.memory_space<vmem>>, vector<1x1x128xf32>,
    %cst_369 = arith.constant 0.000000e+00 : f32
    %563 = vector.broadcast %cst_369 : f32 to vector<32x128xf32>
    %564 = arith.select %555, %26, %563 : vector<32x128xi1>, vector<32x128xf32>
    %cst_370 = arith.constant dense<0.000000e+00> : vector<128xf32>
    %565 = vector.multi_reduction <add>, %564, %cst_370 [0] : vector<32x128xf32> to vector<128xf32>
    %c0_371 = arith.constant 0 : index
    %c102 = arith.constant 102 : index
    %c0_372 = arith.constant 0 : index
    %566 = vector.load %arg4[%c0_371, %c102, %c0_372] : memref<1x136x128xf32, #tpu.memory_space<vmem>>, vector<1x1x128xf32>
    %567 = vector.shape_cast %566 : vector<1x1x128xf32> to vector<128xf32>
    %568 = vector.shape_cast %565 : vector<128xf32> to vector<1x1x128xf32>
    tpu.vector_store %arg4[%c0_371, %c102, %c0_372], %568 {strides = array<i32>} : memref<1x136x128xf32, #tpu.memory_space<vmem>>, vector<1x1x128xf32>,
    %cst_373 = arith.constant 0.599484265 : f32
    %569 = vector.broadcast %cst_373 : f32 to vector<32x128xf32>
    %570 = arith.cmpf oge, %26, %569 : vector<32x128xf32>
    %cst_374 = arith.constant 1.000000e+00 : f32
    %cst_375 = arith.constant 0.000000e+00 : f32
    %571 = vector.broadcast %cst_374 : f32 to vector<32x128xf32>
    %572 = vector.broadcast %cst_375 : f32 to vector<32x128xf32>
    %573 = arith.select %570, %571, %572 : vector<32x128xi1>, vector<32x128xf32>
    %cst_376 = arith.constant dense<0.000000e+00> : vector<128xf32>
    %574 = vector.multi_reduction <add>, %573, %cst_376 [0] : vector<32x128xf32> to vector<128xf32>
    %c0_377 = arith.constant 0 : index
    %c39 = arith.constant 39 : index
    %c0_378 = arith.constant 0 : index
    %575 = vector.load %arg4[%c0_377, %c39, %c0_378] : memref<1x136x128xf32, #tpu.memory_space<vmem>>, vector<1x1x128xf32>
    %576 = vector.shape_cast %575 : vector<1x1x128xf32> to vector<128xf32>
    %577 = vector.shape_cast %574 : vector<128xf32> to vector<1x1x128xf32>
    tpu.vector_store %arg4[%c0_377, %c39, %c0_378], %577 {strides = array<i32>} : memref<1x136x128xf32, #tpu.memory_space<vmem>>, vector<1x1x128xf32>,
    %cst_379 = arith.constant 0.000000e+00 : f32
    %578 = vector.broadcast %cst_379 : f32 to vector<32x128xf32>
    %579 = arith.select %570, %26, %578 : vector<32x128xi1>, vector<32x128xf32>
    %cst_380 = arith.constant dense<0.000000e+00> : vector<128xf32>
    %580 = vector.multi_reduction <add>, %579, %cst_380 [0] : vector<32x128xf32> to vector<128xf32>
    %c0_381 = arith.constant 0 : index
    %c103 = arith.constant 103 : index
    %c0_382 = arith.constant 0 : index
    %581 = vector.load %arg4[%c0_381, %c103, %c0_382] : memref<1x136x128xf32, #tpu.memory_space<vmem>>, vector<1x1x128xf32>
    %582 = vector.shape_cast %581 : vector<1x1x128xf32> to vector<128xf32>
    %583 = vector.shape_cast %580 : vector<128xf32> to vector<1x1x128xf32>
    tpu.vector_store %arg4[%c0_381, %c103, %c0_382], %583 {strides = array<i32>} : memref<1x136x128xf32, #tpu.memory_space<vmem>>, vector<1x1x128xf32>,
    %cst_383 = arith.constant 0.719685674 : f32
    %584 = vector.broadcast %cst_383 : f32 to vector<32x128xf32>
    %585 = arith.cmpf oge, %26, %584 : vector<32x128xf32>
    %cst_384 = arith.constant 1.000000e+00 : f32
    %cst_385 = arith.constant 0.000000e+00 : f32
    %586 = vector.broadcast %cst_384 : f32 to vector<32x128xf32>
    %587 = vector.broadcast %cst_385 : f32 to vector<32x128xf32>
    %588 = arith.select %585, %586, %587 : vector<32x128xi1>, vector<32x128xf32>
    %cst_386 = arith.constant dense<0.000000e+00> : vector<128xf32>
    %589 = vector.multi_reduction <add>, %588, %cst_386 [0] : vector<32x128xf32> to vector<128xf32>
    %c0_387 = arith.constant 0 : index
    %c40 = arith.constant 40 : index
    %c0_388 = arith.constant 0 : index
    %590 = vector.load %arg4[%c0_387, %c40, %c0_388] : memref<1x136x128xf32, #tpu.memory_space<vmem>>, vector<1x1x128xf32>
    %591 = vector.shape_cast %590 : vector<1x1x128xf32> to vector<128xf32>
    %592 = vector.shape_cast %589 : vector<128xf32> to vector<1x1x128xf32>
    tpu.vector_store %arg4[%c0_387, %c40, %c0_388], %592 {strides = array<i32>} : memref<1x136x128xf32, #tpu.memory_space<vmem>>, vector<1x1x128xf32>,
    %cst_389 = arith.constant 0.000000e+00 : f32
    %593 = vector.broadcast %cst_389 : f32 to vector<32x128xf32>
    %594 = arith.select %585, %26, %593 : vector<32x128xi1>, vector<32x128xf32>
    %cst_390 = arith.constant dense<0.000000e+00> : vector<128xf32>
    %595 = vector.multi_reduction <add>, %594, %cst_390 [0] : vector<32x128xf32> to vector<128xf32>
    %c0_391 = arith.constant 0 : index
    %c104 = arith.constant 104 : index
    %c0_392 = arith.constant 0 : index
    %596 = vector.load %arg4[%c0_391, %c104, %c0_392] : memref<1x136x128xf32, #tpu.memory_space<vmem>>, vector<1x1x128xf32>
    %597 = vector.shape_cast %596 : vector<1x1x128xf32> to vector<128xf32>
    %598 = vector.shape_cast %595 : vector<128xf32> to vector<1x1x128xf32>
    tpu.vector_store %arg4[%c0_391, %c104, %c0_392], %598 {strides = array<i32>} : memref<1x136x128xf32, #tpu.memory_space<vmem>>, vector<1x1x128xf32>,
    %cst_393 = arith.constant 0.863988459 : f32
    %599 = vector.broadcast %cst_393 : f32 to vector<32x128xf32>
    %600 = arith.cmpf oge, %26, %599 : vector<32x128xf32>
    %cst_394 = arith.constant 1.000000e+00 : f32
    %cst_395 = arith.constant 0.000000e+00 : f32
    %601 = vector.broadcast %cst_394 : f32 to vector<32x128xf32>
    %602 = vector.broadcast %cst_395 : f32 to vector<32x128xf32>
    %603 = arith.select %600, %601, %602 : vector<32x128xi1>, vector<32x128xf32>
    %cst_396 = arith.constant dense<0.000000e+00> : vector<128xf32>
    %604 = vector.multi_reduction <add>, %603, %cst_396 [0] : vector<32x128xf32> to vector<128xf32>
    %c0_397 = arith.constant 0 : index
    %c41 = arith.constant 41 : index
    %c0_398 = arith.constant 0 : index
    %605 = vector.load %arg4[%c0_397, %c41, %c0_398] : memref<1x136x128xf32, #tpu.memory_space<vmem>>, vector<1x1x128xf32>
    %606 = vector.shape_cast %605 : vector<1x1x128xf32> to vector<128xf32>
    %607 = vector.shape_cast %604 : vector<128xf32> to vector<1x1x128xf32>
    tpu.vector_store %arg4[%c0_397, %c41, %c0_398], %607 {strides = array<i32>} : memref<1x136x128xf32, #tpu.memory_space<vmem>>, vector<1x1x128xf32>,
    %cst_399 = arith.constant 0.000000e+00 : f32
    %608 = vector.broadcast %cst_399 : f32 to vector<32x128xf32>
    %609 = arith.select %600, %26, %608 : vector<32x128xi1>, vector<32x128xf32>
    %cst_400 = arith.constant dense<0.000000e+00> : vector<128xf32>
    %610 = vector.multi_reduction <add>, %609, %cst_400 [0] : vector<32x128xf32> to vector<128xf32>
    %c0_401 = arith.constant 0 : index
    %c105 = arith.constant 105 : index
    %c0_402 = arith.constant 0 : index
    %611 = vector.load %arg4[%c0_401, %c105, %c0_402] : memref<1x136x128xf32, #tpu.memory_space<vmem>>, vector<1x1x128xf32>
    %612 = vector.shape_cast %611 : vector<1x1x128xf32> to vector<128xf32>
    %613 = vector.shape_cast %610 : vector<128xf32> to vector<1x1x128xf32>
    tpu.vector_store %arg4[%c0_401, %c105, %c0_402], %613 {strides = array<i32>} : memref<1x136x128xf32, #tpu.memory_space<vmem>>, vector<1x1x128xf32>,
    %cst_403 = arith.constant 1.03722513 : f32
    %614 = vector.broadcast %cst_403 : f32 to vector<32x128xf32>
    %615 = arith.cmpf oge, %26, %614 : vector<32x128xf32>
    %cst_404 = arith.constant 1.000000e+00 : f32
    %cst_405 = arith.constant 0.000000e+00 : f32
    %616 = vector.broadcast %cst_404 : f32 to vector<32x128xf32>
    %617 = vector.broadcast %cst_405 : f32 to vector<32x128xf32>
    %618 = arith.select %615, %616, %617 : vector<32x128xi1>, vector<32x128xf32>
    %cst_406 = arith.constant dense<0.000000e+00> : vector<128xf32>
    %619 = vector.multi_reduction <add>, %618, %cst_406 [0] : vector<32x128xf32> to vector<128xf32>
    %c0_407 = arith.constant 0 : index
    %c42 = arith.constant 42 : index
    %c0_408 = arith.constant 0 : index
    %620 = vector.load %arg4[%c0_407, %c42, %c0_408] : memref<1x136x128xf32, #tpu.memory_space<vmem>>, vector<1x1x128xf32>
    %621 = vector.shape_cast %620 : vector<1x1x128xf32> to vector<128xf32>
    %622 = vector.shape_cast %619 : vector<128xf32> to vector<1x1x128xf32>
    tpu.vector_store %arg4[%c0_407, %c42, %c0_408], %622 {strides = array<i32>} : memref<1x136x128xf32, #tpu.memory_space<vmem>>, vector<1x1x128xf32>,
    %cst_409 = arith.constant 0.000000e+00 : f32
    %623 = vector.broadcast %cst_409 : f32 to vector<32x128xf32>
    %624 = arith.select %615, %26, %623 : vector<32x128xi1>, vector<32x128xf32>
    %cst_410 = arith.constant dense<0.000000e+00> : vector<128xf32>
    %625 = vector.multi_reduction <add>, %624, %cst_410 [0] : vector<32x128xf32> to vector<128xf32>
    %c0_411 = arith.constant 0 : index
    %c106 = arith.constant 106 : index
    %c0_412 = arith.constant 0 : index
    %626 = vector.load %arg4[%c0_411, %c106, %c0_412] : memref<1x136x128xf32, #tpu.memory_space<vmem>>, vector<1x1x128xf32>
    %627 = vector.shape_cast %626 : vector<1x1x128xf32> to vector<128xf32>
    %628 = vector.shape_cast %625 : vector<128xf32> to vector<1x1x128xf32>
    tpu.vector_store %arg4[%c0_411, %c106, %c0_412], %628 {strides = array<i32>} : memref<1x136x128xf32, #tpu.memory_space<vmem>>, vector<1x1x128xf32>,
    %cst_413 = arith.constant 1.24519706 : f32
    %629 = vector.broadcast %cst_413 : f32 to vector<32x128xf32>
    %630 = arith.cmpf oge, %26, %629 : vector<32x128xf32>
    %cst_414 = arith.constant 1.000000e+00 : f32
    %cst_415 = arith.constant 0.000000e+00 : f32
    %631 = vector.broadcast %cst_414 : f32 to vector<32x128xf32>
    %632 = vector.broadcast %cst_415 : f32 to vector<32x128xf32>
    %633 = arith.select %630, %631, %632 : vector<32x128xi1>, vector<32x128xf32>
    %cst_416 = arith.constant dense<0.000000e+00> : vector<128xf32>
    %634 = vector.multi_reduction <add>, %633, %cst_416 [0] : vector<32x128xf32> to vector<128xf32>
    %c0_417 = arith.constant 0 : index
    %c43 = arith.constant 43 : index
    %c0_418 = arith.constant 0 : index
    %635 = vector.load %arg4[%c0_417, %c43, %c0_418] : memref<1x136x128xf32, #tpu.memory_space<vmem>>, vector<1x1x128xf32>
    %636 = vector.shape_cast %635 : vector<1x1x128xf32> to vector<128xf32>
    %637 = vector.shape_cast %634 : vector<128xf32> to vector<1x1x128xf32>
    tpu.vector_store %arg4[%c0_417, %c43, %c0_418], %637 {strides = array<i32>} : memref<1x136x128xf32, #tpu.memory_space<vmem>>, vector<1x1x128xf32>,
    %cst_419 = arith.constant 0.000000e+00 : f32
    %638 = vector.broadcast %cst_419 : f32 to vector<32x128xf32>
    %639 = arith.select %630, %26, %638 : vector<32x128xi1>, vector<32x128xf32>
    %cst_420 = arith.constant dense<0.000000e+00> : vector<128xf32>
    %640 = vector.multi_reduction <add>, %639, %cst_420 [0] : vector<32x128xf32> to vector<128xf32>
    %c0_421 = arith.constant 0 : index
    %c107 = arith.constant 107 : index
    %c0_422 = arith.constant 0 : index
    %641 = vector.load %arg4[%c0_421, %c107, %c0_422] : memref<1x136x128xf32, #tpu.memory_space<vmem>>, vector<1x1x128xf32>
    %642 = vector.shape_cast %641 : vector<1x1x128xf32> to vector<128xf32>
    %643 = vector.shape_cast %640 : vector<128xf32> to vector<1x1x128xf32>
    tpu.vector_store %arg4[%c0_421, %c107, %c0_422], %643 {strides = array<i32>} : memref<1x136x128xf32, #tpu.memory_space<vmem>>, vector<1x1x128xf32>,
    %cst_423 = arith.constant 1.49486911 : f32
    %644 = vector.broadcast %cst_423 : f32 to vector<32x128xf32>
    %645 = arith.cmpf oge, %26, %644 : vector<32x128xf32>
    %cst_424 = arith.constant 1.000000e+00 : f32
    %cst_425 = arith.constant 0.000000e+00 : f32
    %646 = vector.broadcast %cst_424 : f32 to vector<32x128xf32>
    %647 = vector.broadcast %cst_425 : f32 to vector<32x128xf32>
    %648 = arith.select %645, %646, %647 : vector<32x128xi1>, vector<32x128xf32>
    %cst_426 = arith.constant dense<0.000000e+00> : vector<128xf32>
    %649 = vector.multi_reduction <add>, %648, %cst_426 [0] : vector<32x128xf32> to vector<128xf32>
    %c0_427 = arith.constant 0 : index
    %c44 = arith.constant 44 : index
    %c0_428 = arith.constant 0 : index
    %650 = vector.load %arg4[%c0_427, %c44, %c0_428] : memref<1x136x128xf32, #tpu.memory_space<vmem>>, vector<1x1x128xf32>
    %651 = vector.shape_cast %650 : vector<1x1x128xf32> to vector<128xf32>
    %652 = vector.shape_cast %649 : vector<128xf32> to vector<1x1x128xf32>
    tpu.vector_store %arg4[%c0_427, %c44, %c0_428], %652 {strides = array<i32>} : memref<1x136x128xf32, #tpu.memory_space<vmem>>, vector<1x1x128xf32>,
    %cst_429 = arith.constant 0.000000e+00 : f32
    %653 = vector.broadcast %cst_429 : f32 to vector<32x128xf32>
    %654 = arith.select %645, %26, %653 : vector<32x128xi1>, vector<32x128xf32>
    %cst_430 = arith.constant dense<0.000000e+00> : vector<128xf32>
    %655 = vector.multi_reduction <add>, %654, %cst_430 [0] : vector<32x128xf32> to vector<128xf32>
    %c0_431 = arith.constant 0 : index
    %c108 = arith.constant 108 : index
    %c0_432 = arith.constant 0 : index
    %656 = vector.load %arg4[%c0_431, %c108, %c0_432] : memref<1x136x128xf32, #tpu.memory_space<vmem>>, vector<1x1x128xf32>
    %657 = vector.shape_cast %656 : vector<1x1x128xf32> to vector<128xf32>
    %658 = vector.shape_cast %655 : vector<128xf32> to vector<1x1x128xf32>
    tpu.vector_store %arg4[%c0_431, %c108, %c0_432], %658 {strides = array<i32>} : memref<1x136x128xf32, #tpu.memory_space<vmem>>, vector<1x1x128xf32>,
    %cst_433 = arith.constant 1.79460239 : f32
    %659 = vector.broadcast %cst_433 : f32 to vector<32x128xf32>
    %660 = arith.cmpf oge, %26, %659 : vector<32x128xf32>
    %cst_434 = arith.constant 1.000000e+00 : f32
    %cst_435 = arith.constant 0.000000e+00 : f32
    %661 = vector.broadcast %cst_434 : f32 to vector<32x128xf32>
    %662 = vector.broadcast %cst_435 : f32 to vector<32x128xf32>
    %663 = arith.select %660, %661, %662 : vector<32x128xi1>, vector<32x128xf32>
    %cst_436 = arith.constant dense<0.000000e+00> : vector<128xf32>
    %664 = vector.multi_reduction <add>, %663, %cst_436 [0] : vector<32x128xf32> to vector<128xf32>
    %c0_437 = arith.constant 0 : index
    %c45 = arith.constant 45 : index
    %c0_438 = arith.constant 0 : index
    %665 = vector.load %arg4[%c0_437, %c45, %c0_438] : memref<1x136x128xf32, #tpu.memory_space<vmem>>, vector<1x1x128xf32>
    %666 = vector.shape_cast %665 : vector<1x1x128xf32> to vector<128xf32>
    %667 = vector.shape_cast %664 : vector<128xf32> to vector<1x1x128xf32>
    tpu.vector_store %arg4[%c0_437, %c45, %c0_438], %667 {strides = array<i32>} : memref<1x136x128xf32, #tpu.memory_space<vmem>>, vector<1x1x128xf32>,
    %cst_439 = arith.constant 0.000000e+00 : f32
    %668 = vector.broadcast %cst_439 : f32 to vector<32x128xf32>
    %669 = arith.select %660, %26, %668 : vector<32x128xi1>, vector<32x128xf32>
    %cst_440 = arith.constant dense<0.000000e+00> : vector<128xf32>
    %670 = vector.multi_reduction <add>, %669, %cst_440 [0] : vector<32x128xf32> to vector<128xf32>
    %c0_441 = arith.constant 0 : index
    %c109 = arith.constant 109 : index
    %c0_442 = arith.constant 0 : index
    %671 = vector.load %arg4[%c0_441, %c109, %c0_442] : memref<1x136x128xf32, #tpu.memory_space<vmem>>, vector<1x1x128xf32>
    %672 = vector.shape_cast %671 : vector<1x1x128xf32> to vector<128xf32>
    %673 = vector.shape_cast %670 : vector<128xf32> to vector<1x1x128xf32>
    tpu.vector_store %arg4[%c0_441, %c109, %c0_442], %673 {strides = array<i32>} : memref<1x136x128xf32, #tpu.memory_space<vmem>>, vector<1x1x128xf32>,
    %cst_443 = arith.constant 2.15443468 : f32
    %674 = vector.broadcast %cst_443 : f32 to vector<32x128xf32>
    %675 = arith.cmpf oge, %26, %674 : vector<32x128xf32>
    %cst_444 = arith.constant 1.000000e+00 : f32
    %cst_445 = arith.constant 0.000000e+00 : f32
    %676 = vector.broadcast %cst_444 : f32 to vector<32x128xf32>
    %677 = vector.broadcast %cst_445 : f32 to vector<32x128xf32>
    %678 = arith.select %675, %676, %677 : vector<32x128xi1>, vector<32x128xf32>
    %cst_446 = arith.constant dense<0.000000e+00> : vector<128xf32>
    %679 = vector.multi_reduction <add>, %678, %cst_446 [0] : vector<32x128xf32> to vector<128xf32>
    %c0_447 = arith.constant 0 : index
    %c46 = arith.constant 46 : index
    %c0_448 = arith.constant 0 : index
    %680 = vector.load %arg4[%c0_447, %c46, %c0_448] : memref<1x136x128xf32, #tpu.memory_space<vmem>>, vector<1x1x128xf32>
    %681 = vector.shape_cast %680 : vector<1x1x128xf32> to vector<128xf32>
    %682 = vector.shape_cast %679 : vector<128xf32> to vector<1x1x128xf32>
    tpu.vector_store %arg4[%c0_447, %c46, %c0_448], %682 {strides = array<i32>} : memref<1x136x128xf32, #tpu.memory_space<vmem>>, vector<1x1x128xf32>,
    %cst_449 = arith.constant 0.000000e+00 : f32
    %683 = vector.broadcast %cst_449 : f32 to vector<32x128xf32>
    %684 = arith.select %675, %26, %683 : vector<32x128xi1>, vector<32x128xf32>
    %cst_450 = arith.constant dense<0.000000e+00> : vector<128xf32>
    %685 = vector.multi_reduction <add>, %684, %cst_450 [0] : vector<32x128xf32> to vector<128xf32>
    %c0_451 = arith.constant 0 : index
    %c110 = arith.constant 110 : index
    %c0_452 = arith.constant 0 : index
    %686 = vector.load %arg4[%c0_451, %c110, %c0_452] : memref<1x136x128xf32, #tpu.memory_space<vmem>>, vector<1x1x128xf32>
    %687 = vector.shape_cast %686 : vector<1x1x128xf32> to vector<128xf32>
    %688 = vector.shape_cast %685 : vector<128xf32> to vector<1x1x128xf32>
    tpu.vector_store %arg4[%c0_451, %c110, %c0_452], %688 {strides = array<i32>} : memref<1x136x128xf32, #tpu.memory_space<vmem>>, vector<1x1x128xf32>,
    %cst_453 = arith.constant 2.58641624 : f32
    %689 = vector.broadcast %cst_453 : f32 to vector<32x128xf32>
    %690 = arith.cmpf oge, %26, %689 : vector<32x128xf32>
    %cst_454 = arith.constant 1.000000e+00 : f32
    %cst_455 = arith.constant 0.000000e+00 : f32
    %691 = vector.broadcast %cst_454 : f32 to vector<32x128xf32>
    %692 = vector.broadcast %cst_455 : f32 to vector<32x128xf32>
    %693 = arith.select %690, %691, %692 : vector<32x128xi1>, vector<32x128xf32>
    %cst_456 = arith.constant dense<0.000000e+00> : vector<128xf32>
    %694 = vector.multi_reduction <add>, %693, %cst_456 [0] : vector<32x128xf32> to vector<128xf32>
    %c0_457 = arith.constant 0 : index
    %c47 = arith.constant 47 : index
    %c0_458 = arith.constant 0 : index
    %695 = vector.load %arg4[%c0_457, %c47, %c0_458] : memref<1x136x128xf32, #tpu.memory_space<vmem>>, vector<1x1x128xf32>
    %696 = vector.shape_cast %695 : vector<1x1x128xf32> to vector<128xf32>
    %697 = vector.shape_cast %694 : vector<128xf32> to vector<1x1x128xf32>
    tpu.vector_store %arg4[%c0_457, %c47, %c0_458], %697 {strides = array<i32>} : memref<1x136x128xf32, #tpu.memory_space<vmem>>, vector<1x1x128xf32>,
    %cst_459 = arith.constant 0.000000e+00 : f32
    %698 = vector.broadcast %cst_459 : f32 to vector<32x128xf32>
    %699 = arith.select %690, %26, %698 : vector<32x128xi1>, vector<32x128xf32>
    %cst_460 = arith.constant dense<0.000000e+00> : vector<128xf32>
    %700 = vector.multi_reduction <add>, %699, %cst_460 [0] : vector<32x128xf32> to vector<128xf32>
    %c0_461 = arith.constant 0 : index
    %c111 = arith.constant 111 : index
    %c0_462 = arith.constant 0 : index
    %701 = vector.load %arg4[%c0_461, %c111, %c0_462] : memref<1x136x128xf32, #tpu.memory_space<vmem>>, vector<1x1x128xf32>
    %702 = vector.shape_cast %701 : vector<1x1x128xf32> to vector<128xf32>
    %703 = vector.shape_cast %700 : vector<128xf32> to vector<1x1x128xf32>
    tpu.vector_store %arg4[%c0_461, %c111, %c0_462], %703 {strides = array<i32>} : memref<1x136x128xf32, #tpu.memory_space<vmem>>, vector<1x1x128xf32>,
    %cst_463 = arith.constant 3.10501361 : f32
    %704 = vector.broadcast %cst_463 : f32 to vector<32x128xf32>
    %705 = arith.cmpf oge, %26, %704 : vector<32x128xf32>
    %cst_464 = arith.constant 1.000000e+00 : f32
    %cst_465 = arith.constant 0.000000e+00 : f32
    %706 = vector.broadcast %cst_464 : f32 to vector<32x128xf32>
    %707 = vector.broadcast %cst_465 : f32 to vector<32x128xf32>
    %708 = arith.select %705, %706, %707 : vector<32x128xi1>, vector<32x128xf32>
    %cst_466 = arith.constant dense<0.000000e+00> : vector<128xf32>
    %709 = vector.multi_reduction <add>, %708, %cst_466 [0] : vector<32x128xf32> to vector<128xf32>
    %c0_467 = arith.constant 0 : index
    %c48 = arith.constant 48 : index
    %c0_468 = arith.constant 0 : index
    %710 = vector.load %arg4[%c0_467, %c48, %c0_468] : memref<1x136x128xf32, #tpu.memory_space<vmem>>, vector<1x1x128xf32>
    %711 = vector.shape_cast %710 : vector<1x1x128xf32> to vector<128xf32>
    %712 = vector.shape_cast %709 : vector<128xf32> to vector<1x1x128xf32>
    tpu.vector_store %arg4[%c0_467, %c48, %c0_468], %712 {strides = array<i32>} : memref<1x136x128xf32, #tpu.memory_space<vmem>>, vector<1x1x128xf32>,
    %cst_469 = arith.constant 0.000000e+00 : f32
    %713 = vector.broadcast %cst_469 : f32 to vector<32x128xf32>
    %714 = arith.select %705, %26, %713 : vector<32x128xi1>, vector<32x128xf32>
    %cst_470 = arith.constant dense<0.000000e+00> : vector<128xf32>
    %715 = vector.multi_reduction <add>, %714, %cst_470 [0] : vector<32x128xf32> to vector<128xf32>
    %c0_471 = arith.constant 0 : index
    %c112 = arith.constant 112 : index
    %c0_472 = arith.constant 0 : index
    %716 = vector.load %arg4[%c0_471, %c112, %c0_472] : memref<1x136x128xf32, #tpu.memory_space<vmem>>, vector<1x1x128xf32>
    %717 = vector.shape_cast %716 : vector<1x1x128xf32> to vector<128xf32>
    %718 = vector.shape_cast %715 : vector<128xf32> to vector<1x1x128xf32>
    tpu.vector_store %arg4[%c0_471, %c112, %c0_472], %718 {strides = array<i32>} : memref<1x136x128xf32, #tpu.memory_space<vmem>>, vector<1x1x128xf32>,
    %cst_473 = arith.constant 3.72759366 : f32
    %719 = vector.broadcast %cst_473 : f32 to vector<32x128xf32>
    %720 = arith.cmpf oge, %26, %719 : vector<32x128xf32>
    %cst_474 = arith.constant 1.000000e+00 : f32
    %cst_475 = arith.constant 0.000000e+00 : f32
    %721 = vector.broadcast %cst_474 : f32 to vector<32x128xf32>
    %722 = vector.broadcast %cst_475 : f32 to vector<32x128xf32>
    %723 = arith.select %720, %721, %722 : vector<32x128xi1>, vector<32x128xf32>
    %cst_476 = arith.constant dense<0.000000e+00> : vector<128xf32>
    %724 = vector.multi_reduction <add>, %723, %cst_476 [0] : vector<32x128xf32> to vector<128xf32>
    %c0_477 = arith.constant 0 : index
    %c49 = arith.constant 49 : index
    %c0_478 = arith.constant 0 : index
    %725 = vector.load %arg4[%c0_477, %c49, %c0_478] : memref<1x136x128xf32, #tpu.memory_space<vmem>>, vector<1x1x128xf32>
    %726 = vector.shape_cast %725 : vector<1x1x128xf32> to vector<128xf32>
    %727 = vector.shape_cast %724 : vector<128xf32> to vector<1x1x128xf32>
    tpu.vector_store %arg4[%c0_477, %c49, %c0_478], %727 {strides = array<i32>} : memref<1x136x128xf32, #tpu.memory_space<vmem>>, vector<1x1x128xf32>,
    %cst_479 = arith.constant 0.000000e+00 : f32
    %728 = vector.broadcast %cst_479 : f32 to vector<32x128xf32>
    %729 = arith.select %720, %26, %728 : vector<32x128xi1>, vector<32x128xf32>
    %cst_480 = arith.constant dense<0.000000e+00> : vector<128xf32>
    %730 = vector.multi_reduction <add>, %729, %cst_480 [0] : vector<32x128xf32> to vector<128xf32>
    %c0_481 = arith.constant 0 : index
    %c113 = arith.constant 113 : index
    %c0_482 = arith.constant 0 : index
    %731 = vector.load %arg4[%c0_481, %c113, %c0_482] : memref<1x136x128xf32, #tpu.memory_space<vmem>>, vector<1x1x128xf32>
    %732 = vector.shape_cast %731 : vector<1x1x128xf32> to vector<128xf32>
    %733 = vector.shape_cast %730 : vector<128xf32> to vector<1x1x128xf32>
    tpu.vector_store %arg4[%c0_481, %c113, %c0_482], %733 {strides = array<i32>} : memref<1x136x128xf32, #tpu.memory_space<vmem>>, vector<1x1x128xf32>,
    %cst_483 = arith.constant 4.4750061 : f32
    %734 = vector.broadcast %cst_483 : f32 to vector<32x128xf32>
    %735 = arith.cmpf oge, %26, %734 : vector<32x128xf32>
    %cst_484 = arith.constant 1.000000e+00 : f32
    %cst_485 = arith.constant 0.000000e+00 : f32
    %736 = vector.broadcast %cst_484 : f32 to vector<32x128xf32>
    %737 = vector.broadcast %cst_485 : f32 to vector<32x128xf32>
    %738 = arith.select %735, %736, %737 : vector<32x128xi1>, vector<32x128xf32>
    %cst_486 = arith.constant dense<0.000000e+00> : vector<128xf32>
    %739 = vector.multi_reduction <add>, %738, %cst_486 [0] : vector<32x128xf32> to vector<128xf32>
    %c0_487 = arith.constant 0 : index
    %c50 = arith.constant 50 : index
    %c0_488 = arith.constant 0 : index
    %740 = vector.load %arg4[%c0_487, %c50, %c0_488] : memref<1x136x128xf32, #tpu.memory_space<vmem>>, vector<1x1x128xf32>
    %741 = vector.shape_cast %740 : vector<1x1x128xf32> to vector<128xf32>
    %742 = vector.shape_cast %739 : vector<128xf32> to vector<1x1x128xf32>
    tpu.vector_store %arg4[%c0_487, %c50, %c0_488], %742 {strides = array<i32>} : memref<1x136x128xf32, #tpu.memory_space<vmem>>, vector<1x1x128xf32>,
    %cst_489 = arith.constant 0.000000e+00 : f32
    %743 = vector.broadcast %cst_489 : f32 to vector<32x128xf32>
    %744 = arith.select %735, %26, %743 : vector<32x128xi1>, vector<32x128xf32>
    %cst_490 = arith.constant dense<0.000000e+00> : vector<128xf32>
    %745 = vector.multi_reduction <add>, %744, %cst_490 [0] : vector<32x128xf32> to vector<128xf32>
    %c0_491 = arith.constant 0 : index
    %c114 = arith.constant 114 : index
    %c0_492 = arith.constant 0 : index
    %746 = vector.load %arg4[%c0_491, %c114, %c0_492] : memref<1x136x128xf32, #tpu.memory_space<vmem>>, vector<1x1x128xf32>
    %747 = vector.shape_cast %746 : vector<1x1x128xf32> to vector<128xf32>
    %748 = vector.shape_cast %745 : vector<128xf32> to vector<1x1x128xf32>
    tpu.vector_store %arg4[%c0_491, %c114, %c0_492], %748 {strides = array<i32>} : memref<1x136x128xf32, #tpu.memory_space<vmem>>, vector<1x1x128xf32>,
    %cst_493 = arith.constant 5.37228107 : f32
    %749 = vector.broadcast %cst_493 : f32 to vector<32x128xf32>
    %750 = arith.cmpf oge, %26, %749 : vector<32x128xf32>
    %cst_494 = arith.constant 1.000000e+00 : f32
    %cst_495 = arith.constant 0.000000e+00 : f32
    %751 = vector.broadcast %cst_494 : f32 to vector<32x128xf32>
    %752 = vector.broadcast %cst_495 : f32 to vector<32x128xf32>
    %753 = arith.select %750, %751, %752 : vector<32x128xi1>, vector<32x128xf32>
    %cst_496 = arith.constant dense<0.000000e+00> : vector<128xf32>
    %754 = vector.multi_reduction <add>, %753, %cst_496 [0] : vector<32x128xf32> to vector<128xf32>
    %c0_497 = arith.constant 0 : index
    %c51 = arith.constant 51 : index
    %c0_498 = arith.constant 0 : index
    %755 = vector.load %arg4[%c0_497, %c51, %c0_498] : memref<1x136x128xf32, #tpu.memory_space<vmem>>, vector<1x1x128xf32>
    %756 = vector.shape_cast %755 : vector<1x1x128xf32> to vector<128xf32>
    %757 = vector.shape_cast %754 : vector<128xf32> to vector<1x1x128xf32>
    tpu.vector_store %arg4[%c0_497, %c51, %c0_498], %757 {strides = array<i32>} : memref<1x136x128xf32, #tpu.memory_space<vmem>>, vector<1x1x128xf32>,
    %cst_499 = arith.constant 0.000000e+00 : f32
    %758 = vector.broadcast %cst_499 : f32 to vector<32x128xf32>
    %759 = arith.select %750, %26, %758 : vector<32x128xi1>, vector<32x128xf32>
    %cst_500 = arith.constant dense<0.000000e+00> : vector<128xf32>
    %760 = vector.multi_reduction <add>, %759, %cst_500 [0] : vector<32x128xf32> to vector<128xf32>
    %c0_501 = arith.constant 0 : index
    %c115 = arith.constant 115 : index
    %c0_502 = arith.constant 0 : index
    %761 = vector.load %arg4[%c0_501, %c115, %c0_502] : memref<1x136x128xf32, #tpu.memory_space<vmem>>, vector<1x1x128xf32>
    %762 = vector.shape_cast %761 : vector<1x1x128xf32> to vector<128xf32>
    %763 = vector.shape_cast %760 : vector<128xf32> to vector<1x1x128xf32>
    tpu.vector_store %arg4[%c0_501, %c115, %c0_502], %763 {strides = array<i32>} : memref<1x136x128xf32, #tpu.memory_space<vmem>>, vector<1x1x128xf32>,
    %cst_503 = arith.constant 6.44946671 : f32
    %764 = vector.broadcast %cst_503 : f32 to vector<32x128xf32>
    %765 = arith.cmpf oge, %26, %764 : vector<32x128xf32>
    %cst_504 = arith.constant 1.000000e+00 : f32
    %cst_505 = arith.constant 0.000000e+00 : f32
    %766 = vector.broadcast %cst_504 : f32 to vector<32x128xf32>
    %767 = vector.broadcast %cst_505 : f32 to vector<32x128xf32>
    %768 = arith.select %765, %766, %767 : vector<32x128xi1>, vector<32x128xf32>
    %cst_506 = arith.constant dense<0.000000e+00> : vector<128xf32>
    %769 = vector.multi_reduction <add>, %768, %cst_506 [0] : vector<32x128xf32> to vector<128xf32>
    %c0_507 = arith.constant 0 : index
    %c52 = arith.constant 52 : index
    %c0_508 = arith.constant 0 : index
    %770 = vector.load %arg4[%c0_507, %c52, %c0_508] : memref<1x136x128xf32, #tpu.memory_space<vmem>>, vector<1x1x128xf32>
    %771 = vector.shape_cast %770 : vector<1x1x128xf32> to vector<128xf32>
    %772 = vector.shape_cast %769 : vector<128xf32> to vector<1x1x128xf32>
    tpu.vector_store %arg4[%c0_507, %c52, %c0_508], %772 {strides = array<i32>} : memref<1x136x128xf32, #tpu.memory_space<vmem>>, vector<1x1x128xf32>,
    %cst_509 = arith.constant 0.000000e+00 : f32
    %773 = vector.broadcast %cst_509 : f32 to vector<32x128xf32>
    %774 = arith.select %765, %26, %773 : vector<32x128xi1>, vector<32x128xf32>
    %cst_510 = arith.constant dense<0.000000e+00> : vector<128xf32>
    %775 = vector.multi_reduction <add>, %774, %cst_510 [0] : vector<32x128xf32> to vector<128xf32>
    %c0_511 = arith.constant 0 : index
    %c116 = arith.constant 116 : index
    %c0_512 = arith.constant 0 : index
    %776 = vector.load %arg4[%c0_511, %c116, %c0_512] : memref<1x136x128xf32, #tpu.memory_space<vmem>>, vector<1x1x128xf32>
    %777 = vector.shape_cast %776 : vector<1x1x128xf32> to vector<128xf32>
    %778 = vector.shape_cast %775 : vector<128xf32> to vector<1x1x128xf32>
    tpu.vector_store %arg4[%c0_511, %c116, %c0_512], %778 {strides = array<i32>} : memref<1x136x128xf32, #tpu.memory_space<vmem>>, vector<1x1x128xf32>,
    %cst_513 = arith.constant 7.74263668 : f32
    %779 = vector.broadcast %cst_513 : f32 to vector<32x128xf32>
    %780 = arith.cmpf oge, %26, %779 : vector<32x128xf32>
    %cst_514 = arith.constant 1.000000e+00 : f32
    %cst_515 = arith.constant 0.000000e+00 : f32
    %781 = vector.broadcast %cst_514 : f32 to vector<32x128xf32>
    %782 = vector.broadcast %cst_515 : f32 to vector<32x128xf32>
    %783 = arith.select %780, %781, %782 : vector<32x128xi1>, vector<32x128xf32>
    %cst_516 = arith.constant dense<0.000000e+00> : vector<128xf32>
    %784 = vector.multi_reduction <add>, %783, %cst_516 [0] : vector<32x128xf32> to vector<128xf32>
    %c0_517 = arith.constant 0 : index
    %c53 = arith.constant 53 : index
    %c0_518 = arith.constant 0 : index
    %785 = vector.load %arg4[%c0_517, %c53, %c0_518] : memref<1x136x128xf32, #tpu.memory_space<vmem>>, vector<1x1x128xf32>
    %786 = vector.shape_cast %785 : vector<1x1x128xf32> to vector<128xf32>
    %787 = vector.shape_cast %784 : vector<128xf32> to vector<1x1x128xf32>
    tpu.vector_store %arg4[%c0_517, %c53, %c0_518], %787 {strides = array<i32>} : memref<1x136x128xf32, #tpu.memory_space<vmem>>, vector<1x1x128xf32>,
    %cst_519 = arith.constant 0.000000e+00 : f32
    %788 = vector.broadcast %cst_519 : f32 to vector<32x128xf32>
    %789 = arith.select %780, %26, %788 : vector<32x128xi1>, vector<32x128xf32>
    %cst_520 = arith.constant dense<0.000000e+00> : vector<128xf32>
    %790 = vector.multi_reduction <add>, %789, %cst_520 [0] : vector<32x128xf32> to vector<128xf32>
    %c0_521 = arith.constant 0 : index
    %c117 = arith.constant 117 : index
    %c0_522 = arith.constant 0 : index
    %791 = vector.load %arg4[%c0_521, %c117, %c0_522] : memref<1x136x128xf32, #tpu.memory_space<vmem>>, vector<1x1x128xf32>
    %792 = vector.shape_cast %791 : vector<1x1x128xf32> to vector<128xf32>
    %793 = vector.shape_cast %790 : vector<128xf32> to vector<1x1x128xf32>
    tpu.vector_store %arg4[%c0_521, %c117, %c0_522], %793 {strides = array<i32>} : memref<1x136x128xf32, #tpu.memory_space<vmem>>, vector<1x1x128xf32>,
    %cst_523 = arith.constant 9.2950983 : f32
    %794 = vector.broadcast %cst_523 : f32 to vector<32x128xf32>
    %795 = arith.cmpf oge, %26, %794 : vector<32x128xf32>
    %cst_524 = arith.constant 1.000000e+00 : f32
    %cst_525 = arith.constant 0.000000e+00 : f32
    %796 = vector.broadcast %cst_524 : f32 to vector<32x128xf32>
    %797 = vector.broadcast %cst_525 : f32 to vector<32x128xf32>
    %798 = arith.select %795, %796, %797 : vector<32x128xi1>, vector<32x128xf32>
    %cst_526 = arith.constant dense<0.000000e+00> : vector<128xf32>
    %799 = vector.multi_reduction <add>, %798, %cst_526 [0] : vector<32x128xf32> to vector<128xf32>
    %c0_527 = arith.constant 0 : index
    %c54 = arith.constant 54 : index
    %c0_528 = arith.constant 0 : index
    %800 = vector.load %arg4[%c0_527, %c54, %c0_528] : memref<1x136x128xf32, #tpu.memory_space<vmem>>, vector<1x1x128xf32>
    %801 = vector.shape_cast %800 : vector<1x1x128xf32> to vector<128xf32>
    %802 = vector.shape_cast %799 : vector<128xf32> to vector<1x1x128xf32>
    tpu.vector_store %arg4[%c0_527, %c54, %c0_528], %802 {strides = array<i32>} : memref<1x136x128xf32, #tpu.memory_space<vmem>>, vector<1x1x128xf32>,
    %cst_529 = arith.constant 0.000000e+00 : f32
    %803 = vector.broadcast %cst_529 : f32 to vector<32x128xf32>
    %804 = arith.select %795, %26, %803 : vector<32x128xi1>, vector<32x128xf32>
    %cst_530 = arith.constant dense<0.000000e+00> : vector<128xf32>
    %805 = vector.multi_reduction <add>, %804, %cst_530 [0] : vector<32x128xf32> to vector<128xf32>
    %c0_531 = arith.constant 0 : index
    %c118 = arith.constant 118 : index
    %c0_532 = arith.constant 0 : index
    %806 = vector.load %arg4[%c0_531, %c118, %c0_532] : memref<1x136x128xf32, #tpu.memory_space<vmem>>, vector<1x1x128xf32>
    %807 = vector.shape_cast %806 : vector<1x1x128xf32> to vector<128xf32>
    %808 = vector.shape_cast %805 : vector<128xf32> to vector<1x1x128xf32>
    tpu.vector_store %arg4[%c0_531, %c118, %c0_532], %808 {strides = array<i32>} : memref<1x136x128xf32, #tpu.memory_space<vmem>>, vector<1x1x128xf32>,
    %cst_533 = arith.constant 11.1588402 : f32
    %809 = vector.broadcast %cst_533 : f32 to vector<32x128xf32>
    %810 = arith.cmpf oge, %26, %809 : vector<32x128xf32>
    %cst_534 = arith.constant 1.000000e+00 : f32
    %cst_535 = arith.constant 0.000000e+00 : f32
    %811 = vector.broadcast %cst_534 : f32 to vector<32x128xf32>
    %812 = vector.broadcast %cst_535 : f32 to vector<32x128xf32>
    %813 = arith.select %810, %811, %812 : vector<32x128xi1>, vector<32x128xf32>
    %cst_536 = arith.constant dense<0.000000e+00> : vector<128xf32>
    %814 = vector.multi_reduction <add>, %813, %cst_536 [0] : vector<32x128xf32> to vector<128xf32>
    %c0_537 = arith.constant 0 : index
    %c55 = arith.constant 55 : index
    %c0_538 = arith.constant 0 : index
    %815 = vector.load %arg4[%c0_537, %c55, %c0_538] : memref<1x136x128xf32, #tpu.memory_space<vmem>>, vector<1x1x128xf32>
    %816 = vector.shape_cast %815 : vector<1x1x128xf32> to vector<128xf32>
    %817 = vector.shape_cast %814 : vector<128xf32> to vector<1x1x128xf32>
    tpu.vector_store %arg4[%c0_537, %c55, %c0_538], %817 {strides = array<i32>} : memref<1x136x128xf32, #tpu.memory_space<vmem>>, vector<1x1x128xf32>,
    %cst_539 = arith.constant 0.000000e+00 : f32
    %818 = vector.broadcast %cst_539 : f32 to vector<32x128xf32>
    %819 = arith.select %810, %26, %818 : vector<32x128xi1>, vector<32x128xf32>
    %cst_540 = arith.constant dense<0.000000e+00> : vector<128xf32>
    %820 = vector.multi_reduction <add>, %819, %cst_540 [0] : vector<32x128xf32> to vector<128xf32>
    %c0_541 = arith.constant 0 : index
    %c119 = arith.constant 119 : index
    %c0_542 = arith.constant 0 : index
    %821 = vector.load %arg4[%c0_541, %c119, %c0_542] : memref<1x136x128xf32, #tpu.memory_space<vmem>>, vector<1x1x128xf32>
    %822 = vector.shape_cast %821 : vector<1x1x128xf32> to vector<128xf32>
    %823 = vector.shape_cast %820 : vector<128xf32> to vector<1x1x128xf32>
    tpu.vector_store %arg4[%c0_541, %c119, %c0_542], %823 {strides = array<i32>} : memref<1x136x128xf32, #tpu.memory_space<vmem>>, vector<1x1x128xf32>,
    %cst_543 = arith.constant 13.3962774 : f32
    %824 = vector.broadcast %cst_543 : f32 to vector<32x128xf32>
    %825 = arith.cmpf oge, %26, %824 : vector<32x128xf32>
    %cst_544 = arith.constant 1.000000e+00 : f32
    %cst_545 = arith.constant 0.000000e+00 : f32
    %826 = vector.broadcast %cst_544 : f32 to vector<32x128xf32>
    %827 = vector.broadcast %cst_545 : f32 to vector<32x128xf32>
    %828 = arith.select %825, %826, %827 : vector<32x128xi1>, vector<32x128xf32>
    %cst_546 = arith.constant dense<0.000000e+00> : vector<128xf32>
    %829 = vector.multi_reduction <add>, %828, %cst_546 [0] : vector<32x128xf32> to vector<128xf32>
    %c0_547 = arith.constant 0 : index
    %c56 = arith.constant 56 : index
    %c0_548 = arith.constant 0 : index
    %830 = vector.load %arg4[%c0_547, %c56, %c0_548] : memref<1x136x128xf32, #tpu.memory_space<vmem>>, vector<1x1x128xf32>
    %831 = vector.shape_cast %830 : vector<1x1x128xf32> to vector<128xf32>
    %832 = vector.shape_cast %829 : vector<128xf32> to vector<1x1x128xf32>
    tpu.vector_store %arg4[%c0_547, %c56, %c0_548], %832 {strides = array<i32>} : memref<1x136x128xf32, #tpu.memory_space<vmem>>, vector<1x1x128xf32>,
    %cst_549 = arith.constant 0.000000e+00 : f32
    %833 = vector.broadcast %cst_549 : f32 to vector<32x128xf32>
    %834 = arith.select %825, %26, %833 : vector<32x128xi1>, vector<32x128xf32>
    %cst_550 = arith.constant dense<0.000000e+00> : vector<128xf32>
    %835 = vector.multi_reduction <add>, %834, %cst_550 [0] : vector<32x128xf32> to vector<128xf32>
    %c0_551 = arith.constant 0 : index
    %c120 = arith.constant 120 : index
    %c0_552 = arith.constant 0 : index
    %836 = vector.load %arg4[%c0_551, %c120, %c0_552] : memref<1x136x128xf32, #tpu.memory_space<vmem>>, vector<1x1x128xf32>
    %837 = vector.shape_cast %836 : vector<1x1x128xf32> to vector<128xf32>
    %838 = vector.shape_cast %835 : vector<128xf32> to vector<1x1x128xf32>
    tpu.vector_store %arg4[%c0_551, %c120, %c0_552], %838 {strides = array<i32>} : memref<1x136x128xf32, #tpu.memory_space<vmem>>, vector<1x1x128xf32>,
    %cst_553 = arith.constant 16.0823383 : f32
    %839 = vector.broadcast %cst_553 : f32 to vector<32x128xf32>
    %840 = arith.cmpf oge, %26, %839 : vector<32x128xf32>
    %cst_554 = arith.constant 1.000000e+00 : f32
    %cst_555 = arith.constant 0.000000e+00 : f32
    %841 = vector.broadcast %cst_554 : f32 to vector<32x128xf32>
    %842 = vector.broadcast %cst_555 : f32 to vector<32x128xf32>
    %843 = arith.select %840, %841, %842 : vector<32x128xi1>, vector<32x128xf32>
    %cst_556 = arith.constant dense<0.000000e+00> : vector<128xf32>
    %844 = vector.multi_reduction <add>, %843, %cst_556 [0] : vector<32x128xf32> to vector<128xf32>
    %c0_557 = arith.constant 0 : index
    %c57 = arith.constant 57 : index
    %c0_558 = arith.constant 0 : index
    %845 = vector.load %arg4[%c0_557, %c57, %c0_558] : memref<1x136x128xf32, #tpu.memory_space<vmem>>, vector<1x1x128xf32>
    %846 = vector.shape_cast %845 : vector<1x1x128xf32> to vector<128xf32>
    %847 = vector.shape_cast %844 : vector<128xf32> to vector<1x1x128xf32>
    tpu.vector_store %arg4[%c0_557, %c57, %c0_558], %847 {strides = array<i32>} : memref<1x136x128xf32, #tpu.memory_space<vmem>>, vector<1x1x128xf32>,
    %cst_559 = arith.constant 0.000000e+00 : f32
    %848 = vector.broadcast %cst_559 : f32 to vector<32x128xf32>
    %849 = arith.select %840, %26, %848 : vector<32x128xi1>, vector<32x128xf32>
    %cst_560 = arith.constant dense<0.000000e+00> : vector<128xf32>
    %850 = vector.multi_reduction <add>, %849, %cst_560 [0] : vector<32x128xf32> to vector<128xf32>
    %c0_561 = arith.constant 0 : index
    %c121 = arith.constant 121 : index
    %c0_562 = arith.constant 0 : index
    %851 = vector.load %arg4[%c0_561, %c121, %c0_562] : memref<1x136x128xf32, #tpu.memory_space<vmem>>, vector<1x1x128xf32>
    %852 = vector.shape_cast %851 : vector<1x1x128xf32> to vector<128xf32>
    %853 = vector.shape_cast %850 : vector<128xf32> to vector<1x1x128xf32>
    tpu.vector_store %arg4[%c0_561, %c121, %c0_562], %853 {strides = array<i32>} : memref<1x136x128xf32, #tpu.memory_space<vmem>>, vector<1x1x128xf32>,
    %cst_563 = arith.constant 19.3069782 : f32
    %854 = vector.broadcast %cst_563 : f32 to vector<32x128xf32>
    %855 = arith.cmpf oge, %26, %854 : vector<32x128xf32>
    %cst_564 = arith.constant 1.000000e+00 : f32
    %cst_565 = arith.constant 0.000000e+00 : f32
    %856 = vector.broadcast %cst_564 : f32 to vector<32x128xf32>
    %857 = vector.broadcast %cst_565 : f32 to vector<32x128xf32>
    %858 = arith.select %855, %856, %857 : vector<32x128xi1>, vector<32x128xf32>
    %cst_566 = arith.constant dense<0.000000e+00> : vector<128xf32>
    %859 = vector.multi_reduction <add>, %858, %cst_566 [0] : vector<32x128xf32> to vector<128xf32>
    %c0_567 = arith.constant 0 : index
    %c58 = arith.constant 58 : index
    %c0_568 = arith.constant 0 : index
    %860 = vector.load %arg4[%c0_567, %c58, %c0_568] : memref<1x136x128xf32, #tpu.memory_space<vmem>>, vector<1x1x128xf32>
    %861 = vector.shape_cast %860 : vector<1x1x128xf32> to vector<128xf32>
    %862 = vector.shape_cast %859 : vector<128xf32> to vector<1x1x128xf32>
    tpu.vector_store %arg4[%c0_567, %c58, %c0_568], %862 {strides = array<i32>} : memref<1x136x128xf32, #tpu.memory_space<vmem>>, vector<1x1x128xf32>,
    %cst_569 = arith.constant 0.000000e+00 : f32
    %863 = vector.broadcast %cst_569 : f32 to vector<32x128xf32>
    %864 = arith.select %855, %26, %863 : vector<32x128xi1>, vector<32x128xf32>
    %cst_570 = arith.constant dense<0.000000e+00> : vector<128xf32>
    %865 = vector.multi_reduction <add>, %864, %cst_570 [0] : vector<32x128xf32> to vector<128xf32>
    %c0_571 = arith.constant 0 : index
    %c122 = arith.constant 122 : index
    %c0_572 = arith.constant 0 : index
    %866 = vector.load %arg4[%c0_571, %c122, %c0_572] : memref<1x136x128xf32, #tpu.memory_space<vmem>>, vector<1x1x128xf32>
    %867 = vector.shape_cast %866 : vector<1x1x128xf32> to vector<128xf32>
    %868 = vector.shape_cast %865 : vector<128xf32> to vector<1x1x128xf32>
    tpu.vector_store %arg4[%c0_571, %c122, %c0_572], %868 {strides = array<i32>} : memref<1x136x128xf32, #tpu.memory_space<vmem>>, vector<1x1x128xf32>,
    %cst_573 = arith.constant 23.1781826 : f32
    %869 = vector.broadcast %cst_573 : f32 to vector<32x128xf32>
    %870 = arith.cmpf oge, %26, %869 : vector<32x128xf32>
    %cst_574 = arith.constant 1.000000e+00 : f32
    %cst_575 = arith.constant 0.000000e+00 : f32
    %871 = vector.broadcast %cst_574 : f32 to vector<32x128xf32>
    %872 = vector.broadcast %cst_575 : f32 to vector<32x128xf32>
    %873 = arith.select %870, %871, %872 : vector<32x128xi1>, vector<32x128xf32>
    %cst_576 = arith.constant dense<0.000000e+00> : vector<128xf32>
    %874 = vector.multi_reduction <add>, %873, %cst_576 [0] : vector<32x128xf32> to vector<128xf32>
    %c0_577 = arith.constant 0 : index
    %c59 = arith.constant 59 : index
    %c0_578 = arith.constant 0 : index
    %875 = vector.load %arg4[%c0_577, %c59, %c0_578] : memref<1x136x128xf32, #tpu.memory_space<vmem>>, vector<1x1x128xf32>
    %876 = vector.shape_cast %875 : vector<1x1x128xf32> to vector<128xf32>
    %877 = vector.shape_cast %874 : vector<128xf32> to vector<1x1x128xf32>
    tpu.vector_store %arg4[%c0_577, %c59, %c0_578], %877 {strides = array<i32>} : memref<1x136x128xf32, #tpu.memory_space<vmem>>, vector<1x1x128xf32>,
    %cst_579 = arith.constant 0.000000e+00 : f32
    %878 = vector.broadcast %cst_579 : f32 to vector<32x128xf32>
    %879 = arith.select %870, %26, %878 : vector<32x128xi1>, vector<32x128xf32>
    %cst_580 = arith.constant dense<0.000000e+00> : vector<128xf32>
    %880 = vector.multi_reduction <add>, %879, %cst_580 [0] : vector<32x128xf32> to vector<128xf32>
    %c0_581 = arith.constant 0 : index
    %c123 = arith.constant 123 : index
    %c0_582 = arith.constant 0 : index
    %881 = vector.load %arg4[%c0_581, %c123, %c0_582] : memref<1x136x128xf32, #tpu.memory_space<vmem>>, vector<1x1x128xf32>
    %882 = vector.shape_cast %881 : vector<1x1x128xf32> to vector<128xf32>
    %883 = vector.shape_cast %880 : vector<128xf32> to vector<1x1x128xf32>
    tpu.vector_store %arg4[%c0_581, %c123, %c0_582], %883 {strides = array<i32>} : memref<1x136x128xf32, #tpu.memory_space<vmem>>, vector<1x1x128xf32>,
    %cst_583 = arith.constant 27.8255939 : f32
    %884 = vector.broadcast %cst_583 : f32 to vector<32x128xf32>
    %885 = arith.cmpf oge, %26, %884 : vector<32x128xf32>
    %cst_584 = arith.constant 1.000000e+00 : f32
    %cst_585 = arith.constant 0.000000e+00 : f32
    %886 = vector.broadcast %cst_584 : f32 to vector<32x128xf32>
    %887 = vector.broadcast %cst_585 : f32 to vector<32x128xf32>
    %888 = arith.select %885, %886, %887 : vector<32x128xi1>, vector<32x128xf32>
    %cst_586 = arith.constant dense<0.000000e+00> : vector<128xf32>
    %889 = vector.multi_reduction <add>, %888, %cst_586 [0] : vector<32x128xf32> to vector<128xf32>
    %c0_587 = arith.constant 0 : index
    %c60 = arith.constant 60 : index
    %c0_588 = arith.constant 0 : index
    %890 = vector.load %arg4[%c0_587, %c60, %c0_588] : memref<1x136x128xf32, #tpu.memory_space<vmem>>, vector<1x1x128xf32>
    %891 = vector.shape_cast %890 : vector<1x1x128xf32> to vector<128xf32>
    %892 = vector.shape_cast %889 : vector<128xf32> to vector<1x1x128xf32>
    tpu.vector_store %arg4[%c0_587, %c60, %c0_588], %892 {strides = array<i32>} : memref<1x136x128xf32, #tpu.memory_space<vmem>>, vector<1x1x128xf32>,
    %cst_589 = arith.constant 0.000000e+00 : f32
    %893 = vector.broadcast %cst_589 : f32 to vector<32x128xf32>
    %894 = arith.select %885, %26, %893 : vector<32x128xi1>, vector<32x128xf32>
    %cst_590 = arith.constant dense<0.000000e+00> : vector<128xf32>
    %895 = vector.multi_reduction <add>, %894, %cst_590 [0] : vector<32x128xf32> to vector<128xf32>
    %c0_591 = arith.constant 0 : index
    %c124 = arith.constant 124 : index
    %c0_592 = arith.constant 0 : index
    %896 = vector.load %arg4[%c0_591, %c124, %c0_592] : memref<1x136x128xf32, #tpu.memory_space<vmem>>, vector<1x1x128xf32>
    %897 = vector.shape_cast %896 : vector<1x1x128xf32> to vector<128xf32>
    %898 = vector.shape_cast %895 : vector<128xf32> to vector<1x1x128xf32>
    tpu.vector_store %arg4[%c0_591, %c124, %c0_592], %898 {strides = array<i32>} : memref<1x136x128xf32, #tpu.memory_space<vmem>>, vector<1x1x128xf32>,
    %cst_593 = arith.constant 33.40485 : f32
    %899 = vector.broadcast %cst_593 : f32 to vector<32x128xf32>
    %900 = arith.cmpf oge, %26, %899 : vector<32x128xf32>
    %cst_594 = arith.constant 1.000000e+00 : f32
    %cst_595 = arith.constant 0.000000e+00 : f32
    %901 = vector.broadcast %cst_594 : f32 to vector<32x128xf32>
    %902 = vector.broadcast %cst_595 : f32 to vector<32x128xf32>
    %903 = arith.select %900, %901, %902 : vector<32x128xi1>, vector<32x128xf32>
    %cst_596 = arith.constant dense<0.000000e+00> : vector<128xf32>
    %904 = vector.multi_reduction <add>, %903, %cst_596 [0] : vector<32x128xf32> to vector<128xf32>
    %c0_597 = arith.constant 0 : index
    %c61 = arith.constant 61 : index
    %c0_598 = arith.constant 0 : index
    %905 = vector.load %arg4[%c0_597, %c61, %c0_598] : memref<1x136x128xf32, #tpu.memory_space<vmem>>, vector<1x1x128xf32>
    %906 = vector.shape_cast %905 : vector<1x1x128xf32> to vector<128xf32>
    %907 = vector.shape_cast %904 : vector<128xf32> to vector<1x1x128xf32>
    tpu.vector_store %arg4[%c0_597, %c61, %c0_598], %907 {strides = array<i32>} : memref<1x136x128xf32, #tpu.memory_space<vmem>>, vector<1x1x128xf32>,
    %cst_599 = arith.constant 0.000000e+00 : f32
    %908 = vector.broadcast %cst_599 : f32 to vector<32x128xf32>
    %909 = arith.select %900, %26, %908 : vector<32x128xi1>, vector<32x128xf32>
    %cst_600 = arith.constant dense<0.000000e+00> : vector<128xf32>
    %910 = vector.multi_reduction <add>, %909, %cst_600 [0] : vector<32x128xf32> to vector<128xf32>
    %c0_601 = arith.constant 0 : index
    %c125 = arith.constant 125 : index
    %c0_602 = arith.constant 0 : index
    %911 = vector.load %arg4[%c0_601, %c125, %c0_602] : memref<1x136x128xf32, #tpu.memory_space<vmem>>, vector<1x1x128xf32>
    %912 = vector.shape_cast %911 : vector<1x1x128xf32> to vector<128xf32>
    %913 = vector.shape_cast %910 : vector<128xf32> to vector<1x1x128xf32>
    tpu.vector_store %arg4[%c0_601, %c125, %c0_602], %913 {strides = array<i32>} : memref<1x136x128xf32, #tpu.memory_space<vmem>>, vector<1x1x128xf32>,
    %cst_603 = arith.constant 40.1027908 : f32
    %914 = vector.broadcast %cst_603 : f32 to vector<32x128xf32>
    %915 = arith.cmpf oge, %26, %914 : vector<32x128xf32>
    %cst_604 = arith.constant 1.000000e+00 : f32
    %cst_605 = arith.constant 0.000000e+00 : f32
    %916 = vector.broadcast %cst_604 : f32 to vector<32x128xf32>
    %917 = vector.broadcast %cst_605 : f32 to vector<32x128xf32>
    %918 = arith.select %915, %916, %917 : vector<32x128xi1>, vector<32x128xf32>
    %cst_606 = arith.constant dense<0.000000e+00> : vector<128xf32>
    %919 = vector.multi_reduction <add>, %918, %cst_606 [0] : vector<32x128xf32> to vector<128xf32>
    %c0_607 = arith.constant 0 : index
    %c62 = arith.constant 62 : index
    %c0_608 = arith.constant 0 : index
    %920 = vector.load %arg4[%c0_607, %c62, %c0_608] : memref<1x136x128xf32, #tpu.memory_space<vmem>>, vector<1x1x128xf32>
    %921 = vector.shape_cast %920 : vector<1x1x128xf32> to vector<128xf32>
    %922 = vector.shape_cast %919 : vector<128xf32> to vector<1x1x128xf32>
    tpu.vector_store %arg4[%c0_607, %c62, %c0_608], %922 {strides = array<i32>} : memref<1x136x128xf32, #tpu.memory_space<vmem>>, vector<1x1x128xf32>,
    %cst_609 = arith.constant 0.000000e+00 : f32
    %923 = vector.broadcast %cst_609 : f32 to vector<32x128xf32>
    %924 = arith.select %915, %26, %923 : vector<32x128xi1>, vector<32x128xf32>
    %cst_610 = arith.constant dense<0.000000e+00> : vector<128xf32>
    %925 = vector.multi_reduction <add>, %924, %cst_610 [0] : vector<32x128xf32> to vector<128xf32>
    %c0_611 = arith.constant 0 : index
    %c126 = arith.constant 126 : index
    %c0_612 = arith.constant 0 : index
    %926 = vector.load %arg4[%c0_611, %c126, %c0_612] : memref<1x136x128xf32, #tpu.memory_space<vmem>>, vector<1x1x128xf32>
    %927 = vector.shape_cast %926 : vector<1x1x128xf32> to vector<128xf32>
    %928 = vector.shape_cast %925 : vector<128xf32> to vector<1x1x128xf32>
    tpu.vector_store %arg4[%c0_611, %c126, %c0_612], %928 {strides = array<i32>} : memref<1x136x128xf32, #tpu.memory_space<vmem>>, vector<1x1x128xf32>,
    %cst_613 = arith.constant 48.1437225 : f32
    %929 = vector.broadcast %cst_613 : f32 to vector<32x128xf32>
    %930 = arith.cmpf oge, %26, %929 : vector<32x128xf32>
    %cst_614 = arith.constant 1.000000e+00 : f32
    %cst_615 = arith.constant 0.000000e+00 : f32
    %931 = vector.broadcast %cst_614 : f32 to vector<32x128xf32>
    %932 = vector.broadcast %cst_615 : f32 to vector<32x128xf32>
    %933 = arith.select %930, %931, %932 : vector<32x128xi1>, vector<32x128xf32>
    %cst_616 = arith.constant dense<0.000000e+00> : vector<128xf32>
    %934 = vector.multi_reduction <add>, %933, %cst_616 [0] : vector<32x128xf32> to vector<128xf32>
    %c0_617 = arith.constant 0 : index
    %c63 = arith.constant 63 : index
    %c0_618 = arith.constant 0 : index
    %935 = vector.load %arg4[%c0_617, %c63, %c0_618] : memref<1x136x128xf32, #tpu.memory_space<vmem>>, vector<1x1x128xf32>
    %936 = vector.shape_cast %935 : vector<1x1x128xf32> to vector<128xf32>
    %937 = vector.shape_cast %934 : vector<128xf32> to vector<1x1x128xf32>
    tpu.vector_store %arg4[%c0_617, %c63, %c0_618], %937 {strides = array<i32>} : memref<1x136x128xf32, #tpu.memory_space<vmem>>, vector<1x1x128xf32>,
    %cst_619 = arith.constant 0.000000e+00 : f32
    %938 = vector.broadcast %cst_619 : f32 to vector<32x128xf32>
    %939 = arith.select %930, %26, %938 : vector<32x128xi1>, vector<32x128xf32>
    %cst_620 = arith.constant dense<0.000000e+00> : vector<128xf32>
    %940 = vector.multi_reduction <add>, %939, %cst_620 [0] : vector<32x128xf32> to vector<128xf32>
    %c0_621 = arith.constant 0 : index
    %c127 = arith.constant 127 : index
    %c0_622 = arith.constant 0 : index
    %941 = vector.load %arg4[%c0_621, %c127, %c0_622] : memref<1x136x128xf32, #tpu.memory_space<vmem>>, vector<1x1x128xf32>
    %942 = vector.shape_cast %941 : vector<1x1x128xf32> to vector<128xf32>
    %943 = vector.shape_cast %940 : vector<128xf32> to vector<1x1x128xf32>
    tpu.vector_store %arg4[%c0_621, %c127, %c0_622], %943 {strides = array<i32>} : memref<1x136x128xf32, #tpu.memory_space<vmem>>, vector<1x1x128xf32>,
    %cst_623 = arith.constant 57.7969284 : f32
    %944 = vector.broadcast %cst_623 : f32 to vector<32x128xf32>
    %945 = arith.cmpf oge, %26, %944 : vector<32x128xf32>
    %cst_624 = arith.constant 1.000000e+00 : f32
    %cst_625 = arith.constant 0.000000e+00 : f32
    %946 = vector.broadcast %cst_624 : f32 to vector<32x128xf32>
    %947 = vector.broadcast %cst_625 : f32 to vector<32x128xf32>
    %948 = arith.select %945, %946, %947 : vector<32x128xi1>, vector<32x128xf32>
    %cst_626 = arith.constant dense<0.000000e+00> : vector<128xf32>
    %949 = vector.multi_reduction <add>, %948, %cst_626 [0] : vector<32x128xf32> to vector<128xf32>
    %c0_627 = arith.constant 0 : index
    %c64 = arith.constant 64 : index
    %c0_628 = arith.constant 0 : index
    %950 = vector.load %arg4[%c0_627, %c64, %c0_628] : memref<1x136x128xf32, #tpu.memory_space<vmem>>, vector<1x1x128xf32>
    %951 = vector.shape_cast %950 : vector<1x1x128xf32> to vector<128xf32>
    %952 = vector.shape_cast %949 : vector<128xf32> to vector<1x1x128xf32>
    tpu.vector_store %arg4[%c0_627, %c64, %c0_628], %952 {strides = array<i32>} : memref<1x136x128xf32, #tpu.memory_space<vmem>>, vector<1x1x128xf32>,
    %cst_629 = arith.constant 0.000000e+00 : f32
    %953 = vector.broadcast %cst_629 : f32 to vector<32x128xf32>
    %954 = arith.select %945, %26, %953 : vector<32x128xi1>, vector<32x128xf32>
    %cst_630 = arith.constant dense<0.000000e+00> : vector<128xf32>
    %955 = vector.multi_reduction <add>, %954, %cst_630 [0] : vector<32x128xf32> to vector<128xf32>
    %c0_631 = arith.constant 0 : index
    %c128 = arith.constant 128 : index
    %c0_632 = arith.constant 0 : index
    %956 = vector.load %arg4[%c0_631, %c128, %c0_632] : memref<1x136x128xf32, #tpu.memory_space<vmem>>, vector<1x1x128xf32>
    %957 = vector.shape_cast %956 : vector<1x1x128xf32> to vector<128xf32>
    %958 = vector.shape_cast %955 : vector<128xf32> to vector<1x1x128xf32>
    tpu.vector_store %arg4[%c0_631, %c128, %c0_632], %958 {strides = array<i32>} : memref<1x136x128xf32, #tpu.memory_space<vmem>>, vector<1x1x128xf32>,
    %cst_633 = arith.constant 69.3856812 : f32
    %959 = vector.broadcast %cst_633 : f32 to vector<32x128xf32>
    %960 = arith.cmpf oge, %26, %959 : vector<32x128xf32>
    %cst_634 = arith.constant 1.000000e+00 : f32
    %cst_635 = arith.constant 0.000000e+00 : f32
    %961 = vector.broadcast %cst_634 : f32 to vector<32x128xf32>
    %962 = vector.broadcast %cst_635 : f32 to vector<32x128xf32>
    %963 = arith.select %960, %961, %962 : vector<32x128xi1>, vector<32x128xf32>
    %cst_636 = arith.constant dense<0.000000e+00> : vector<128xf32>
    %964 = vector.multi_reduction <add>, %963, %cst_636 [0] : vector<32x128xf32> to vector<128xf32>
    %c0_637 = arith.constant 0 : index
    %c65 = arith.constant 65 : index
    %c0_638 = arith.constant 0 : index
    %965 = vector.load %arg4[%c0_637, %c65, %c0_638] : memref<1x136x128xf32, #tpu.memory_space<vmem>>, vector<1x1x128xf32>
    %966 = vector.shape_cast %965 : vector<1x1x128xf32> to vector<128xf32>
    %967 = vector.shape_cast %964 : vector<128xf32> to vector<1x1x128xf32>
    tpu.vector_store %arg4[%c0_637, %c65, %c0_638], %967 {strides = array<i32>} : memref<1x136x128xf32, #tpu.memory_space<vmem>>, vector<1x1x128xf32>,
    %cst_639 = arith.constant 0.000000e+00 : f32
    %968 = vector.broadcast %cst_639 : f32 to vector<32x128xf32>
    %969 = arith.select %960, %26, %968 : vector<32x128xi1>, vector<32x128xf32>
    %cst_640 = arith.constant dense<0.000000e+00> : vector<128xf32>
    %970 = vector.multi_reduction <add>, %969, %cst_640 [0] : vector<32x128xf32> to vector<128xf32>
    %c0_641 = arith.constant 0 : index
    %c129 = arith.constant 129 : index
    %c0_642 = arith.constant 0 : index
    %971 = vector.load %arg4[%c0_641, %c129, %c0_642] : memref<1x136x128xf32, #tpu.memory_space<vmem>>, vector<1x1x128xf32>
    %972 = vector.shape_cast %971 : vector<1x1x128xf32> to vector<128xf32>
    %973 = vector.shape_cast %970 : vector<128xf32> to vector<1x1x128xf32>
    tpu.vector_store %arg4[%c0_641, %c129, %c0_642], %973 {strides = array<i32>} : memref<1x136x128xf32, #tpu.memory_space<vmem>>, vector<1x1x128xf32>,
    %cst_643 = arith.constant 83.2980651 : f32
    %974 = vector.broadcast %cst_643 : f32 to vector<32x128xf32>
    %975 = arith.cmpf oge, %26, %974 : vector<32x128xf32>
    %cst_644 = arith.constant 1.000000e+00 : f32
    %cst_645 = arith.constant 0.000000e+00 : f32
    %976 = vector.broadcast %cst_644 : f32 to vector<32x128xf32>
    %977 = vector.broadcast %cst_645 : f32 to vector<32x128xf32>
    %978 = arith.select %975, %976, %977 : vector<32x128xi1>, vector<32x128xf32>
    %cst_646 = arith.constant dense<0.000000e+00> : vector<128xf32>
    %979 = vector.multi_reduction <add>, %978, %cst_646 [0] : vector<32x128xf32> to vector<128xf32>
    %c0_647 = arith.constant 0 : index
    %c66 = arith.constant 66 : index
    %c0_648 = arith.constant 0 : index
    %980 = vector.load %arg4[%c0_647, %c66, %c0_648] : memref<1x136x128xf32, #tpu.memory_space<vmem>>, vector<1x1x128xf32>
    %981 = vector.shape_cast %980 : vector<1x1x128xf32> to vector<128xf32>
    %982 = vector.shape_cast %979 : vector<128xf32> to vector<1x1x128xf32>
    tpu.vector_store %arg4[%c0_647, %c66, %c0_648], %982 {strides = array<i32>} : memref<1x136x128xf32, #tpu.memory_space<vmem>>, vector<1x1x128xf32>,
    %cst_649 = arith.constant 0.000000e+00 : f32
    %983 = vector.broadcast %cst_649 : f32 to vector<32x128xf32>
    %984 = arith.select %975, %26, %983 : vector<32x128xi1>, vector<32x128xf32>
    %cst_650 = arith.constant dense<0.000000e+00> : vector<128xf32>
    %985 = vector.multi_reduction <add>, %984, %cst_650 [0] : vector<32x128xf32> to vector<128xf32>
    %c0_651 = arith.constant 0 : index
    %c130 = arith.constant 130 : index
    %c0_652 = arith.constant 0 : index
    %986 = vector.load %arg4[%c0_651, %c130, %c0_652] : memref<1x136x128xf32, #tpu.memory_space<vmem>>, vector<1x1x128xf32>
    %987 = vector.shape_cast %986 : vector<1x1x128xf32> to vector<128xf32>
    %988 = vector.shape_cast %985 : vector<128xf32> to vector<1x1x128xf32>
    tpu.vector_store %arg4[%c0_651, %c130, %c0_652], %988 {strides = array<i32>} : memref<1x136x128xf32, #tpu.memory_space<vmem>>, vector<1x1x128xf32>,
    %cst_653 = arith.constant 1.000000e+02 : f32
    %989 = vector.broadcast %cst_653 : f32 to vector<32x128xf32>
    %990 = arith.cmpf oge, %26, %989 : vector<32x128xf32>
    %cst_654 = arith.constant 1.000000e+00 : f32
    %cst_655 = arith.constant 0.000000e+00 : f32
    %991 = vector.broadcast %cst_654 : f32 to vector<32x128xf32>
    %992 = vector.broadcast %cst_655 : f32 to vector<32x128xf32>
    %993 = arith.select %990, %991, %992 : vector<32x128xi1>, vector<32x128xf32>
    %cst_656 = arith.constant dense<0.000000e+00> : vector<128xf32>
    %994 = vector.multi_reduction <add>, %993, %cst_656 [0] : vector<32x128xf32> to vector<128xf32>
    %c0_657 = arith.constant 0 : index
    %c67 = arith.constant 67 : index
    %c0_658 = arith.constant 0 : index
    %995 = vector.load %arg4[%c0_657, %c67, %c0_658] : memref<1x136x128xf32, #tpu.memory_space<vmem>>, vector<1x1x128xf32>
    %996 = vector.shape_cast %995 : vector<1x1x128xf32> to vector<128xf32>
    %997 = vector.shape_cast %994 : vector<128xf32> to vector<1x1x128xf32>
    tpu.vector_store %arg4[%c0_657, %c67, %c0_658], %997 {strides = array<i32>} : memref<1x136x128xf32, #tpu.memory_space<vmem>>, vector<1x1x128xf32>,
    %cst_659 = arith.constant 0.000000e+00 : f32
    %998 = vector.broadcast %cst_659 : f32 to vector<32x128xf32>
    %999 = arith.select %990, %26, %998 : vector<32x128xi1>, vector<32x128xf32>
    %cst_660 = arith.constant dense<0.000000e+00> : vector<128xf32>
    %1000 = vector.multi_reduction <add>, %999, %cst_660 [0] : vector<32x128xf32> to vector<128xf32>
    %c0_661 = arith.constant 0 : index
    %c131 = arith.constant 131 : index
    %c0_662 = arith.constant 0 : index
    %1001 = vector.load %arg4[%c0_661, %c131, %c0_662] : memref<1x136x128xf32, #tpu.memory_space<vmem>>, vector<1x1x128xf32>
    %1002 = vector.shape_cast %1001 : vector<1x1x128xf32> to vector<128xf32>
    %1003 = vector.shape_cast %1000 : vector<128xf32> to vector<1x1x128xf32>
    tpu.vector_store %arg4[%c0_661, %c131, %c0_662], %1003 {strides = array<i32>} : memref<1x136x128xf32, #tpu.memory_space<vmem>>, vector<1x1x128xf32>,
    return
  }
  func.func @transform_0(%arg0: i32) -> (i32, i32) {
    %c0_i32 = arith.constant 0 : i32
    %c0_i32_0 = arith.constant 0 : i32
    return %arg0, %c0_i32 : i32, i32
  }
  func.func @transform_1(%arg0: i32) -> (i32, i32) {
    %c0_i32 = arith.constant 0 : i32
    %c0_i32_0 = arith.constant 0 : i32
    return %arg0, %c0_i32 : i32, i32
  }
  func.func @transform_2(%arg0: i32) -> (i32, i32) {
    %c0_i32 = arith.constant 0 : i32
    %c0_i32_0 = arith.constant 0 : i32
    return %arg0, %c0_i32 : i32, i32
  }
  func.func @transform_3(%arg0: i32) -> (i32, i32, i32) {
    %c0_i32 = arith.constant 0 : i32
    %c0_i32_0 = arith.constant 0 : i32
    %c0_i32_1 = arith.constant 0 : i32
    return %arg0, %c0_i32, %c0_i32_0 : i32, i32, i32
  }
}

</mosaic_0001>

<llo_original>
// kernel: balance_cross_entropy_loss.1
$region0: #{balance_cross_entropy_loss.1}
  #allocation0 [shape = 'u32[]', space=smem, size = 0x4, offset = 0x4, fixed_abs, tag = 'smem constant byte address 0x4 - core index']
  #allocation1 [shape = 'u32[144,128]{1,0:T(1,128)}', space=vmem, size = 0x12000, scoped, tag = 'internal scratch']
  %s0 = inlined_call_operand.hbm [shape: f32[128,128], index: 0, kind: input, shape index: {}]
  %s1 = inlined_call_operand.hbm [shape: s8[128,128], index: 1, kind: input, shape index: {}]
  %s2 = inlined_call_operand.hbm [shape: s8[128,128], index: 2, kind: input, shape index: {}]
  %s3 = inlined_call_operand.vmem [shape: f32[4,136,128], index: 3, kind: output, shape index: {}]
  %s4 = sld [smem:[#allocation0]]
  $region57: #{balance_cross_entropy_loss.1} parent=0
    _
  %s6 = ssub.s32 1, %s4
  %s7 = scalar_select 0, %s6, %s4
  $region1: #{balance_cross_entropy_loss.1} parent=0
    #allocation2 [shape = 'u8[32768]{0}', space=vmem, size = 0x8000, scoped, tag = 'input window, operand 0']
    #allocation3 [shape = 's32[2]{0}', space=sflag, size = 0x8, scoped, tag = 'scoped memory for balance_cross_entropy_loss.1']
    #allocation4 [shape = 'u8[8192]{0}', space=vmem, size = 0x2000, scoped, tag = 'input window, operand 1']
    #allocation5 [shape = 's32[2]{0}', space=sflag, size = 0x8, scoped, tag = 'scoped memory for balance_cross_entropy_loss.1']
    #allocation6 [shape = 'u8[8192]{0}', space=vmem, size = 0x2000, scoped, tag = 'input window, operand 2']
    %8 = vsyncpa [#allocation3], 0
    %s9 = scalar_lea.sflag [#allocation3], 1
    %10 = vsyncpa %s9, 0
    %11 = vsyncpa [#allocation5], 0
    %s12 = scalar_lea.sflag [#allocation5], 1
    %13 = vsyncpa %s12, 0
    loop: start=0, step=1, limit=6
    $region2: #{balance_cross_entropy_loss.1} parent=1 // loop_pre_header
      _
    $region3: #{balance_cross_entropy_loss.1} parent=1 // loop_header
      %s15 = sphi 0, %s19
      %p16 = scmp.ge.s32.totalorder %s15, 6
      %s25 = sphi 0, %s27
      %s28 = sphi 0, %s25
      %s29 = sphi 0, %s28
      %s45 = sphi 0, %s29
      %s51 = sphi 0, %s53
      %s54 = sphi 0, %s51
      %s55 = sphi 0, %s54
      %s71 = sphi 0, %s55
      %s77 = sphi 0, %s79
      %s80 = sphi 0, %s77
      %s81 = sphi 0, %s80
      %s97 = sphi 0, %s81
      %s103 = sphi 0, %s105
      %s106 = sphi 0, %s103
      %s107 = sphi 0, %s106
      %s123 = sphi 0, %s107
    $region4: #{balance_cross_entropy_loss.1} parent=1 // loop_header_branch
      %18 = sbr.rel (%p16) target = $region8
    $region5: #{balance_cross_entropy_loss.1} parent=1 // loop_body
      %s20 = ssub.s32 %s15, 1
      %s21 = ssub.s32 %s15, 2
      %s22 = sadd.s32 %s15, 1
      %s23 = ssub.s32 %s15, %s22
      %p24 = scmp.eq.s32.totalorder %s23, 0
      %s26 = sadd.s32 %s25, 1
      %s27 = scalar_select %p24, %s25, %s26
      %p30 = pneg %p24
      %p31 = scmp.eq.s32.totalorder %s15, 3
      %p32 = por %p30, %p31
      %p33 = scmp.ne.s32.totalorder %s25, %s28
      %p34 = scmp.eq.s32.totalorder %s15, 0
      %p35 = por %p33, %p34
      %p36 = scmp.ne.s32.totalorder %s25, %s28
      %p37 = scmp.eq.s32.totalorder %s20, 3
      %p38 = por %p36, %p37
      %p39 = scmp.ne.s32.totalorder %s28, %s29
      %p40 = scmp.eq.s32.totalorder %s20, 0
      %p41 = por %p39, %p40
      %p42 = scmp.ne.s32.totalorder %s28, %s29
      %p43 = scmp.eq.s32.totalorder %s21, 3
      %p44 = por %p42, %p43
      %p46 = scmp.ne.s32.totalorder %s29, %s45
      %p47 = scmp.eq.s32.totalorder %s21, 0
      %p48 = por %p46, %p47
      %s49 = ssub.s32 %s15, %s22
      %p50 = scmp.eq.s32.totalorder %s49, 0
      %s52 = sadd.s32 %s51, 1
      %s53 = scalar_select %p50, %s51, %s52
      %p56 = pneg %p50
      %p57 = scmp.eq.s32.totalorder %s15, 3
      %p58 = por %p56, %p57
      %p59 = scmp.ne.s32.totalorder %s51, %s54
      %p60 = scmp.eq.s32.totalorder %s15, 0
      %p61 = por %p59, %p60
      %p62 = scmp.ne.s32.totalorder %s51, %s54
      %p63 = scmp.eq.s32.totalorder %s20, 3
      %p64 = por %p62, %p63
      %p65 = scmp.ne.s32.totalorder %s54, %s55
      %p66 = scmp.eq.s32.totalorder %s20, 0
      %p67 = por %p65, %p66
      %p68 = scmp.ne.s32.totalorder %s54, %s55
      %p69 = scmp.eq.s32.totalorder %s21, 3
      %p70 = por %p68, %p69
      %p72 = scmp.ne.s32.totalorder %s55, %s71
      %p73 = scmp.eq.s32.totalorder %s21, 0
      %p74 = por %p72, %p73
      %s75 = ssub.s32 %s15, %s22
      %p76 = scmp.eq.s32.totalorder %s75, 0
      %s78 = sadd.s32 %s77, 1
      %s79 = scalar_select %p76, %s77, %s78
      %p82 = pneg %p76
      %p83 = scmp.eq.s32.totalorder %s15, 3
      %p84 = por %p82, %p83
      %p85 = scmp.ne.s32.totalorder %s77, %s80
      %p86 = scmp.eq.s32.totalorder %s15, 0
      %p87 = por %p85, %p86
      %p88 = scmp.ne.s32.totalorder %s77, %s80
      %p89 = scmp.eq.s32.totalorder %s20, 3
      %p90 = por %p88, %p89
      %p91 = scmp.ne.s32.totalorder %s80, %s81
      %p92 = scmp.eq.s32.totalorder %s20, 0
      %p93 = por %p91, %p92
      %p94 = scmp.ne.s32.totalorder %s80, %s81
      %p95 = scmp.eq.s32.totalorder %s21, 3
      %p96 = por %p94, %p95
      %p98 = scmp.ne.s32.totalorder %s81, %s97
      %p99 = scmp.eq.s32.totalorder %s21, 0
      %p100 = por %p98, %p99
      %s101 = ssub.s32 %s15, %s22
      %p102 = scmp.eq.s32.totalorder %s101, 0
      %s104 = sadd.s32 %s103, 1
      %s105 = scalar_select %p102, %s103, %s104
      %p108 = pneg %p102
      %p109 = scmp.eq.s32.totalorder %s15, 3
      %p110 = por %p108, %p109
      %p111 = scmp.ne.s32.totalorder %s103, %s106
      %p112 = scmp.eq.s32.totalorder %s15, 0
      %p113 = por %p111, %p112
      %p114 = scmp.ne.s32.totalorder %s103, %s106
      %p115 = scmp.eq.s32.totalorder %s20, 3
      %p116 = por %p114, %p115
      %p117 = scmp.ne.s32.totalorder %s106, %s107
      %p118 = scmp.eq.s32.totalorder %s20, 0
      %p119 = por %p117, %p118
      %p120 = scmp.ne.s32.totalorder %s106, %s107
      %p121 = scmp.eq.s32.totalorder %s21, 3
      %p122 = por %p120, %p121
      %p124 = scmp.ne.s32.totalorder %s107, %s123
      %p125 = scmp.eq.s32.totalorder %s21, 0
      %p126 = por %p124, %p125
      %p127 = scmp.le.s32.totalorder 1, %s15
      %p128 = scmp.lt.s32.totalorder %s15, 5
      %p129 = pnand %p127, %p128
      %p130 = pneg %p129
      // Predicated region
      $region9: #{balance_cross_entropy_loss.1} parent=5 // pred_check
        _
      $region10: #{balance_cross_entropy_loss.1} parent=5 // pred_check_branch
        %132 = sbr.rel (%p129) target = $region12
      $region11: #{balance_cross_entropy_loss.1} parent=5 // pred_region
        %s133 = ssub.s32 %s15, 1
      $region12: #{balance_cross_entropy_loss.1} parent=5 // pred_fallthru
        _
      %p134 = scmp.lt.s32.totalorder %s15, 4
      // Predicated region
      $region13: #{balance_cross_entropy_loss.1} parent=5 // pred_check
        %p135 = pneg %p134
      $region14: #{balance_cross_entropy_loss.1} parent=5 // pred_check_branch
        %137 = sbr.rel (%p135) target = $region16
      $region15: #{balance_cross_entropy_loss.1} parent=5 // pred_region
        // Predicated region
        $region17: #{balance_cross_entropy_loss.1} parent=15 // pred_check
          %p138 = pneg %p35
        $region18: #{balance_cross_entropy_loss.1} parent=15 // pred_check_branch
          %140 = sbr.rel (%p138) target = $region20
        $region19: #{balance_cross_entropy_loss.1} parent=15 // pred_region
          %s141 = sand.u32 %s25, 1
          %s142 = scalar_lea.sflag [#allocation3], %s141
          %s143 = sand.u32 %s25, 1
          %s144 = smul.addr %s143, 32
          %s145 = scalar_lea.vmem [#allocation2], %s144
          %s146 = smul.u32 4, %s15
          %s148 = ssub.s32 512, 512
          %149 = vsyncadd %s142, %s148
          %s150 = smul.addr %s146, 128
          %s151 = scalar_lea.hbm %s0, %s150
          %s152 = sshll.u32 %s145, 4
          %s153 = int_to_ptr.vmem [resolvable:$true] %s152
          %158 = dma.hbm_to_vmem [thread:$0]  %s151, 512, %s153, %s142, 128, 128, 8
        $region20: #{balance_cross_entropy_loss.1} parent=15 // pred_fallthru
          _
        // Predicated region
        $region21: #{balance_cross_entropy_loss.1} parent=15 // pred_check
          %p159 = pneg %p61
        $region22: #{balance_cross_entropy_loss.1} parent=15 // pred_check_branch
          %161 = sbr.rel (%p159) target = $region24
        $region23: #{balance_cross_entropy_loss.1} parent=15 // pred_region
          %s162 = sand.u32 %s15, 1
          %s163 = scalar_lea.sflag [#allocation5], %s162
          %s164 = sand.u32 %s51, 1
          %s165 = smul.addr %s164, 8
          %s166 = scalar_lea.vmem [#allocation4], %s165
          %s168 = ssub.s32 128, 128
          %169 = vsyncadd %s163, %s168
          %s170 = smul.addr %s15, 128
          %s171 = scalar_lea.hbm %s1, %s170
          %s173 = sshll.u32 %s166, 4
          %s174 = int_to_ptr.vmem [resolvable:$true] %s173
          %176 = dma.hbm_to_vmem [thread:$0]  %s171, 128, %s174, %s163
        $region24: #{balance_cross_entropy_loss.1} parent=15 // pred_fallthru
          _
        // Predicated region
        $region25: #{balance_cross_entropy_loss.1} parent=15 // pred_check
          %p177 = pneg %p87
        $region26: #{balance_cross_entropy_loss.1} parent=15 // pred_check_branch
          %179 = sbr.rel (%p177) target = $region28
        $region27: #{balance_cross_entropy_loss.1} parent=15 // pred_region
          %s180 = sand.u32 %s15, 1
          %s181 = scalar_lea.sflag [#allocation5], %s180
          %s182 = sand.u32 %s77, 1
          %s183 = smul.addr %s182, 8
          %s184 = scalar_lea.vmem [#allocation6], %s183
          %s186 = ssub.s32 128, 128
          %187 = vsyncadd %s181, %s186
          %s188 = smul.addr %s15, 128
          %s189 = scalar_lea.hbm %s2, %s188
          %s191 = sshll.u32 %s184, 4
          %s192 = int_to_ptr.vmem [resolvable:$true] %s191
          %194 = dma.hbm_to_vmem [thread:$0]  %s189, 128, %s192, %s181
        $region28: #{balance_cross_entropy_loss.1} parent=15 // pred_fallthru
          _
      $region16: #{balance_cross_entropy_loss.1} parent=5 // pred_fallthru
        _
      %p195 = scmp.le.s32.totalorder 1, %s15
      %p196 = scmp.lt.s32.totalorder %s15, 5
      %p197 = pnand %p195, %p196
      %p198 = pneg %p197
      // Predicated region
      $region29: #{balance_cross_entropy_loss.1} parent=5 // pred_check
        _
      $region30: #{balance_cross_entropy_loss.1} parent=5 // pred_check_branch
        %200 = sbr.rel (%p197) target = $region32
      $region31: #{balance_cross_entropy_loss.1} parent=5 // pred_region
        %s201 = ssub.s32 %s15, 1
        %s202 = sand.u32 %s28, 1
        %s203 = scalar_lea.sflag [#allocation3], %s202
        %s204 = sand.u32 %s28, 1
        %s205 = smul.addr %s204, 32
        %s206 = scalar_lea.vmem [#allocation2], %s205
        // Predicated region
        $region33: #{balance_cross_entropy_loss.1} parent=31 // pred_check
          %p207 = pneg %p41
        $region34: #{balance_cross_entropy_loss.1} parent=31 // pred_check_branch
          %209 = sbr.rel (%p207) target = $region36
        $region35: #{balance_cross_entropy_loss.1} parent=31 // pred_region
          %210 = dma.done %s203, 512
        $region36: #{balance_cross_entropy_loss.1} parent=31 // pred_fallthru
          _
        %s211 = sand.u32 %s20, 1
        %s212 = scalar_lea.sflag [#allocation5], %s211
        %s213 = sand.u32 %s54, 1
        %s214 = smul.addr %s213, 8
        %s215 = scalar_lea.vmem [#allocation4], %s214
        // Predicated region
        $region37: #{balance_cross_entropy_loss.1} parent=31 // pred_check
          %p216 = pneg %p67
        $region38: #{balance_cross_entropy_loss.1} parent=31 // pred_check_branch
          %218 = sbr.rel (%p216) target = $region40
        $region39: #{balance_cross_entropy_loss.1} parent=31 // pred_region
          %219 = dma.done %s212, 128
        $region40: #{balance_cross_entropy_loss.1} parent=31 // pred_fallthru
          _
        %s220 = sand.u32 %s20, 1
        %s221 = scalar_lea.sflag [#allocation5], %s220
        %s222 = sand.u32 %s80, 1
        %s223 = smul.addr %s222, 8
        %s224 = scalar_lea.vmem [#allocation6], %s223
        // Predicated region
        $region41: #{balance_cross_entropy_loss.1} parent=31 // pred_check
          %p225 = pneg %p93
        $region42: #{balance_cross_entropy_loss.1} parent=31 // pred_check_branch
          %227 = sbr.rel (%p225) target = $region44
        $region43: #{balance_cross_entropy_loss.1} parent=31 // pred_region
          %228 = dma.done %s221, 128
        $region44: #{balance_cross_entropy_loss.1} parent=31 // pred_fallthru
          _
        %s229 = sand.u32 %s28, 1
        %s230 = scalar_lea.sflag [#allocation3], %s229
        %s231 = sand.u32 %s28, 1
        %s232 = smul.addr %s231, 32
        %s233 = scalar_lea.vmem [#allocation2], %s232
        %p234 = pneg %p41
        %p235 = pneg %p38
        %s236 = sand.u32 %s20, 1
        %s237 = scalar_lea.sflag [#allocation5], %s236
        %s238 = sand.u32 %s54, 1
        %s239 = smul.addr %s238, 8
        %s240 = scalar_lea.vmem [#allocation4], %s239
        %p241 = pneg %p67
        %p242 = pneg %p64
        %s243 = sand.u32 %s20, 1
        %s244 = scalar_lea.sflag [#allocation5], %s243
        %s245 = sand.u32 %s80, 1
        %s246 = smul.addr %s245, 8
        %s247 = scalar_lea.vmem [#allocation6], %s246
        %p248 = pneg %p93
        %p249 = pneg %p90
        %p250 = pneg %p119
        %p251 = pneg %p116
        %p252 = scmp.lt.s32.totalorder %s20, 3
        %s253 = scalar_select %p252, %s20, 3
        %s254 = smul.addr %s253, 17
        %s255 = smul.addr %s254, 8
        %s256 = scalar_lea.vmem %s3, %s255
        %s257 = smul.u32 4, %s20
        %p258 = scmp.lt.s32.totalorder %s20, 3
        %s259 = scalar_select %p258, %s20, 3
        %s260 = smul.addr %s259, 17
        %s261 = smul.addr %s260, 8
        %s262 = scalar_lea.vmem %s3, %s261
        %v263 = vld [vmem:[%s206] sm:$0xff]
        %v264 = vld [vmem:[%s206 + $0x8] sm:$0xff]
        %v265 = vld [vmem:[%s206 + $0x10] sm:$0xff]
        %v266 = vld [vmem:[%s206 + $0x18] sm:$0xff]
        %v267 = vld [vmem:[%s215] sm:$0xff]
        %v268 = vunpack.c.0.s8 %v267
        %v269 = vunpack.c.1.s8 %v267
        %v270 = vunpack.c.2.s8 %v267
        %v271 = vunpack.c.3.s8 %v267
        %v272 = vcvt.s32.f32 %v268
        %v273 = vcvt.s32.f32 %v269
        %v274 = vcvt.s32.f32 %v270
        %v275 = vcvt.s32.f32 %v271
        %v276 = vld [vmem:[%s224] sm:$0xff]
        %v277 = vunpack.c.0.s8 %v276
        %v278 = vunpack.c.1.s8 %v276
        %v279 = vunpack.c.2.s8 %v276
        %v280 = vunpack.c.3.s8 %v276
        %v281 = vcvt.s32.f32 %v277
        %v282 = vcvt.s32.f32 %v278
        %v283 = vcvt.s32.f32 %v279
        %v284 = vcvt.s32.f32 %v280
        %v285 = vmul.f32 %v272, %v281
        %v286 = vmul.f32 %v273, %v282
        %v287 = vmul.f32 %v274, %v283
        %v288 = vmul.f32 %v275, %v284
        %v289 = vfloor.f32 %v285
        %v290 = vfloor.f32 %v286
        %v291 = vfloor.f32 %v287
        %v292 = vfloor.f32 %v288
        %v293 = vsub.f32 1.0, %v272
        %v294 = vsub.f32 1.0, %v273
        %v295 = vsub.f32 1.0, %v274
        %v296 = vsub.f32 1.0, %v275
        %v297 = vmul.f32 %v293, %v281
        %v298 = vmul.f32 %v294, %v282
        %v299 = vmul.f32 %v295, %v283
        %v300 = vmul.f32 %v296, %v284
        %v301 = vfloor.f32 %v297
        %v302 = vfloor.f32 %v298
        %v303 = vfloor.f32 %v299
        %v304 = vfloor.f32 %v300
        %v305 = vlog2.pop %v263
        %v306 = vmul.f32 %v305, 0.6931472
        %v307 = vlog2.pop %v264
        %v308 = vmul.f32 %v307, 0.6931472
        %v309 = vlog2.pop %v265
        %v310 = vmul.f32 %v309, 0.6931472
        %v311 = vlog2.pop %v266
        %v312 = vmul.f32 %v311, 0.6931472
        %v313 = vmax.f32 %v306, -100.0
        %v314 = vmax.f32 %v308, -100.0
        %v315 = vmax.f32 %v310, -100.0
        %v316 = vmax.f32 %v312, -100.0
        %v317 = vsub.f32 1.0, %v263
        %v318 = vsub.f32 1.0, %v264
        %v319 = vsub.f32 1.0, %v265
        %v320 = vsub.f32 1.0, %v266
        %v321 = vlog2.pop %v317
        %v322 = vmul.f32 %v321, 0.6931472
        %v323 = vlog2.pop %v318
        %v324 = vmul.f32 %v323, 0.6931472
        %v325 = vlog2.pop %v319
        %v326 = vmul.f32 %v325, 0.6931472
        %v327 = vlog2.pop %v320
        %v328 = vmul.f32 %v327, 0.6931472
        %v329 = vmax.f32 %v322, -100.0
        %v330 = vmax.f32 %v324, -100.0
        %v331 = vmax.f32 %v326, -100.0
        %v332 = vmax.f32 %v328, -100.0
        %v333 = vmul.f32 %v272, %v313
        %v334 = vmul.f32 %v273, %v314
        %v335 = vmul.f32 %v274, %v315
        %v336 = vmul.f32 %v275, %v316
        %v337 = vmul.f32 %v293, %v329
        %v338 = vmul.f32 %v294, %v330
        %v339 = vmul.f32 %v295, %v331
        %v340 = vmul.f32 %v296, %v332
        %v341 = vadd.f32 %v333, %v337
        %v342 = vadd.f32 %v334, %v338
        %v343 = vadd.f32 %v335, %v339
        %v344 = vadd.f32 %v336, %v340
        %v345 = vsub.f32 0.0, %v341
        %v346 = vsub.f32 0.0, %v342
        %v347 = vsub.f32 0.0, %v343
        %v348 = vsub.f32 0.0, %v344
        %v349 = vmul.f32 %v345, %v301
        %v350 = vmul.f32 %v346, %v302
        %v351 = vmul.f32 %v347, %v303
        %v352 = vmul.f32 %v348, %v304
        %v353 = vmul.f32 %v345, %v289
        %v354 = vmul.f32 %v346, %v290
        %v355 = vmul.f32 %v347, %v291
        %v356 = vmul.f32 %v348, %v292
        %v357 = vadd.f32 %v353, %v354
        %v358 = vadd.f32 %v357, %v355
        %v359 = vadd.f32 %v358, %v356
        %v360 = vrot.slane %v359, 4
        %v361 = vadd.f32 %v359, %v360
        %v362 = vrot.slane %v361, 2
        %v363 = vadd.f32 %v361, %v362
        %v364 = vrot.slane %v363, 1
        %v365 = vadd.f32 %v363, %v364
        %366 = vst [vmem:[%s262] sm:$0x1] %v365
        %v367 = vadd.f32 %v289, %v290
        %v368 = vadd.f32 %v367, %v291
        %v369 = vadd.f32 %v368, %v292
        %v370 = vrot.slane %v369, 4
        %v371 = vadd.f32 %v369, %v370
        %v372 = vrot.slane %v371, 2
        %v373 = vadd.f32 %v371, %v372
        %v374 = vrot.slane %v373, 1
        %v375 = vadd.f32 %v373, %v374
        %376 = vst [vmem:[%s262 + $0x1] sm:$0x1] %v375
        %v377 = vadd.f32 %v301, %v302
        %v378 = vadd.f32 %v377, %v303
        %v379 = vadd.f32 %v378, %v304
        %v380 = vrot.slane %v379, 4
        %v381 = vadd.f32 %v379, %v380
        %v382 = vrot.slane %v381, 2
        %v383 = vadd.f32 %v381, %v382
        %v384 = vrot.slane %v383, 1
        %v385 = vadd.f32 %v383, %v384
        %386 = vst [vmem:[%s262 + $0x2] sm:$0x1] %v385
        %v387 = vadd.f32 %v349, %v350
        %v388 = vadd.f32 %v387, %v351
        %v389 = vadd.f32 %v388, %v352
        %v390 = vrot.slane %v389, 4
        %v391 = vadd.f32 %v389, %v390
        %v392 = vrot.slane %v391, 2
        %v393 = vadd.f32 %v391, %v392
        %v394 = vrot.slane %v393, 1
        %v395 = vadd.f32 %v393, %v394
        %396 = vst [vmem:[%s262 + $0x3] sm:$0x1] %v395
        %vm397 = vcmp.ge.f32.partialorder %v349, 0.001
        %vm398 = vcmp.ge.f32.partialorder %v350, 0.001
        %vm399 = vcmp.ge.f32.partialorder %v351, 0.001
        %vm400 = vcmp.ge.f32.partialorder %v352, 0.001
        %v401 = vsel %vm397, 1.0, 0.0
        %v402 = vsel %vm398, 1.0, 0.0
        %v403 = vsel %vm399, 1.0, 0.0
        %v404 = vsel %vm400, 1.0, 0.0
        %v405 = vadd.f32 %v401, %v402
        %v406 = vadd.f32 %v405, %v403
        %v407 = vadd.f32 %v406, %v404
        %v408 = vrot.slane %v407, 4
        %v409 = vadd.f32 %v407, %v408
        %v410 = vrot.slane %v409, 2
        %v411 = vadd.f32 %v409, %v410
        %v412 = vrot.slane %v411, 1
        %v413 = vadd.f32 %v411, %v412
        %414 = vst [vmem:[%s262 + $0x4] sm:$0x1] %v413
        %v415 = vsel %vm397, %v349, 0.0
        %v416 = vsel %vm398, %v350, 0.0
        %v417 = vsel %vm399, %v351, 0.0
        %v418 = vsel %vm400, %v352, 0.0
        %v419 = vadd.f32 %v415, %v416
        %v420 = vadd.f32 %v419, %v417
        %v421 = vadd.f32 %v420, %v418
        %v422 = vrot.slane %v421, 4
        %v423 = vadd.f32 %v421, %v422
        %v424 = vrot.slane %v423, 2
        %v425 = vadd.f32 %v423, %v424
        %v426 = vrot.slane %v425, 1
        %v427 = vadd.f32 %v425, %v426
        %428 = vst [vmem:[%s262 + $0x44] sm:$0x1] %v427
        %vm429 = vcmp.ge.f32.partialorder %v349, 0.0012005081
        %vm430 = vcmp.ge.f32.partialorder %v350, 0.0012005081
        %vm431 = vcmp.ge.f32.partialorder %v351, 0.0012005081
        %vm432 = vcmp.ge.f32.partialorder %v352, 0.0012005081
        %v433 = vsel %vm429, 1.0, 0.0
        %v434 = vsel %vm430, 1.0, 0.0
        %v435 = vsel %vm431, 1.0, 0.0
        %v436 = vsel %vm432, 1.0, 0.0
        %v437 = vadd.f32 %v433, %v434
        %v438 = vadd.f32 %v437, %v435
        %v439 = vadd.f32 %v438, %v436
        %v440 = vrot.slane %v439, 4
        %v441 = vadd.f32 %v439, %v440
        %v442 = vrot.slane %v441, 2
        %v443 = vadd.f32 %v441, %v442
        %v444 = vrot.slane %v443, 1
        %v445 = vadd.f32 %v443, %v444
        %446 = vst [vmem:[%s262 + $0x5] sm:$0x1] %v445
        %v447 = vsel %vm429, %v349, 0.0
        %v448 = vsel %vm430, %v350, 0.0
        %v449 = vsel %vm431, %v351, 0.0
        %v450 = vsel %vm432, %v352, 0.0
        %v451 = vadd.f32 %v447, %v448
        %v452 = vadd.f32 %v451, %v449
        %v453 = vadd.f32 %v452, %v450
        %v454 = vrot.slane %v453, 4
        %v455 = vadd.f32 %v453, %v454
        %v456 = vrot.slane %v455, 2
        %v457 = vadd.f32 %v455, %v456
        %v458 = vrot.slane %v457, 1
        %v459 = vadd.f32 %v457, %v458
        %460 = vst [vmem:[%s262 + $0x45] sm:$0x1] %v459
        %vm461 = vcmp.ge.f32.partialorder %v349, 0.0014412196
        %vm462 = vcmp.ge.f32.partialorder %v350, 0.0014412196
        %vm463 = vcmp.ge.f32.partialorder %v351, 0.0014412196
        %vm464 = vcmp.ge.f32.partialorder %v352, 0.0014412196
        %v465 = vsel %vm461, 1.0, 0.0
        %v466 = vsel %vm462, 1.0, 0.0
        %v467 = vsel %vm463, 1.0, 0.0
        %v468 = vsel %vm464, 1.0, 0.0
        %v469 = vadd.f32 %v465, %v466
        %v470 = vadd.f32 %v469, %v467
        %v471 = vadd.f32 %v470, %v468
        %v472 = vrot.slane %v471, 4
        %v473 = vadd.f32 %v471, %v472
        %v474 = vrot.slane %v473, 2
        %v475 = vadd.f32 %v473, %v474
        %v476 = vrot.slane %v475, 1
        %v477 = vadd.f32 %v475, %v476
        %478 = vst [vmem:[%s262 + $0x6] sm:$0x1] %v477
        %v479 = vsel %vm461, %v349, 0.0
        %v480 = vsel %vm462, %v350, 0.0
        %v481 = vsel %vm463, %v351, 0.0
        %v482 = vsel %vm464, %v352, 0.0
        %v483 = vadd.f32 %v479, %v480
        %v484 = vadd.f32 %v483, %v481
        %v485 = vadd.f32 %v484, %v482
        %v486 = vrot.slane %v485, 4
        %v487 = vadd.f32 %v485, %v486
        %v488 = vrot.slane %v487, 2
        %v489 = vadd.f32 %v487, %v488
        %v490 = vrot.slane %v489, 1
        %v491 = vadd.f32 %v489, %v490
        %492 = vst [vmem:[%s262 + $0x46] sm:$0x1] %v491
        %vm493 = vcmp.ge.f32.partialorder %v349, 0.0017301957
        %vm494 = vcmp.ge.f32.partialorder %v350, 0.0017301957
        %vm495 = vcmp.ge.f32.partialorder %v351, 0.0017301957
        %vm496 = vcmp.ge.f32.partialorder %v352, 0.0017301957
        %v497 = vsel %vm493, 1.0, 0.0
        %v498 = vsel %vm494, 1.0, 0.0
        %v499 = vsel %vm495, 1.0, 0.0
        %v500 = vsel %vm496, 1.0, 0.0
        %v501 = vadd.f32 %v497, %v498
        %v502 = vadd.f32 %v501, %v499
        %v503 = vadd.f32 %v502, %v500
        %v504 = vrot.slane %v503, 4
        %v505 = vadd.f32 %v503, %v504
        %v506 = vrot.slane %v505, 2
        %v507 = vadd.f32 %v505, %v506
        %v508 = vrot.slane %v507, 1
        %v509 = vadd.f32 %v507, %v508
        %510 = vst [vmem:[%s262 + $0x7] sm:$0x1] %v509
        %v511 = vsel %vm493, %v349, 0.0
        %v512 = vsel %vm494, %v350, 0.0
        %v513 = vsel %vm495, %v351, 0.0
        %v514 = vsel %vm496, %v352, 0.0
        %v515 = vadd.f32 %v511, %v512
        %v516 = vadd.f32 %v515, %v513
        %v517 = vadd.f32 %v516, %v514
        %v518 = vrot.slane %v517, 4
        %v519 = vadd.f32 %v517, %v518
        %v520 = vrot.slane %v519, 2
        %v521 = vadd.f32 %v519, %v520
        %v522 = vrot.slane %v521, 1
        %v523 = vadd.f32 %v521, %v522
        %524 = vst [vmem:[%s262 + $0x47] sm:$0x1] %v523
        %vm525 = vcmp.ge.f32.partialorder %v349, 0.0020771138
        %vm526 = vcmp.ge.f32.partialorder %v350, 0.0020771138
        %vm527 = vcmp.ge.f32.partialorder %v351, 0.0020771138
        %vm528 = vcmp.ge.f32.partialorder %v352, 0.0020771138
        %v529 = vsel %vm525, 1.0, 0.0
        %v530 = vsel %vm526, 1.0, 0.0
        %v531 = vsel %vm527, 1.0, 0.0
        %v532 = vsel %vm528, 1.0, 0.0
        %v533 = vadd.f32 %v529, %v530
        %v534 = vadd.f32 %v533, %v531
        %v535 = vadd.f32 %v534, %v532
        %v536 = vrot.slane %v535, 4
        %v537 = vadd.f32 %v535, %v536
        %v538 = vrot.slane %v537, 2
        %v539 = vadd.f32 %v537, %v538
        %v540 = vrot.slane %v539, 1
        %v541 = vadd.f32 %v539, %v540
        %542 = vst [vmem:[%s262 + $0x8] sm:$0x1] %v541
        %v543 = vsel %vm525, %v349, 0.0
        %v544 = vsel %vm526, %v350, 0.0
        %v545 = vsel %vm527, %v351, 0.0
        %v546 = vsel %vm528, %v352, 0.0
        %v547 = vadd.f32 %v543, %v544
        %v548 = vadd.f32 %v547, %v545
        %v549 = vadd.f32 %v548, %v546
        %v550 = vrot.slane %v549, 4
        %v551 = vadd.f32 %v549, %v550
        %v552 = vrot.slane %v551, 2
        %v553 = vadd.f32 %v551, %v552
        %v554 = vrot.slane %v553, 1
        %v555 = vadd.f32 %v553, %v554
        %556 = vst [vmem:[%s262 + $0x48] sm:$0x1] %v555
        %vm557 = vcmp.ge.f32.partialorder %v349, 0.002493592
        %vm558 = vcmp.ge.f32.partialorder %v350, 0.002493592
        %vm559 = vcmp.ge.f32.partialorder %v351, 0.002493592
        %vm560 = vcmp.ge.f32.partialorder %v352, 0.002493592
        %v561 = vsel %vm557, 1.0, 0.0
        %v562 = vsel %vm558, 1.0, 0.0
        %v563 = vsel %vm559, 1.0, 0.0
        %v564 = vsel %vm560, 1.0, 0.0
        %v565 = vadd.f32 %v561, %v562
        %v566 = vadd.f32 %v565, %v563
        %v567 = vadd.f32 %v566, %v564
        %v568 = vrot.slane %v567, 4
        %v569 = vadd.f32 %v567, %v568
        %v570 = vrot.slane %v569, 2
        %v571 = vadd.f32 %v569, %v570
        %v572 = vrot.slane %v571, 1
        %v573 = vadd.f32 %v571, %v572
        %574 = vst [vmem:[%s262 + $0x9] sm:$0x1] %v573
        %v575 = vsel %vm557, %v349, 0.0
        %v576 = vsel %vm558, %v350, 0.0
        %v577 = vsel %vm559, %v351, 0.0
        %v578 = vsel %vm560, %v352, 0.0
        %v579 = vadd.f32 %v575, %v576
        %v580 = vadd.f32 %v579, %v577
        %v581 = vadd.f32 %v580, %v578
        %v582 = vrot.slane %v581, 4
        %v583 = vadd.f32 %v581, %v582
        %v584 = vrot.slane %v583, 2
        %v585 = vadd.f32 %v583, %v584
        %v586 = vrot.slane %v585, 1
        %v587 = vadd.f32 %v585, %v586
        %588 = vst [vmem:[%s262 + $0x49] sm:$0x1] %v587
        %vm589 = vcmp.ge.f32.partialorder %v349, 0.0029935774
        %vm590 = vcmp.ge.f32.partialorder %v350, 0.0029935774
        %vm591 = vcmp.ge.f32.partialorder %v351, 0.0029935774
        %vm592 = vcmp.ge.f32.partialorder %v352, 0.0029935774
        %v593 = vsel %vm589, 1.0, 0.0
        %v594 = vsel %vm590, 1.0, 0.0
        %v595 = vsel %vm591, 1.0, 0.0
        %v596 = vsel %vm592, 1.0, 0.0
        %v597 = vadd.f32 %v593, %v594
        %v598 = vadd.f32 %v597, %v595
        %v599 = vadd.f32 %v598, %v596
        %v600 = vrot.slane %v599, 4
        %v601 = vadd.f32 %v599, %v600
        %v602 = vrot.slane %v601, 2
        %v603 = vadd.f32 %v601, %v602
        %v604 = vrot.slane %v603, 1
        %v605 = vadd.f32 %v603, %v604
        %606 = vst [vmem:[%s262 + $0xa] sm:$0x1] %v605
        %v607 = vsel %vm589, %v349, 0.0
        %v608 = vsel %vm590, %v350, 0.0
        %v609 = vsel %vm591, %v351, 0.0
        %v610 = vsel %vm592, %v352, 0.0
        %v611 = vadd.f32 %v607, %v608
        %v612 = vadd.f32 %v611, %v609
        %v613 = vadd.f32 %v612, %v610
        %v614 = vrot.slane %v613, 4
        %v615 = vadd.f32 %v613, %v614
        %v616 = vrot.slane %v615, 2
        %v617 = vadd.f32 %v615, %v616
        %v618 = vrot.slane %v617, 1
        %v619 = vadd.f32 %v617, %v618
        %620 = vst [vmem:[%s262 + $0x4a] sm:$0x1] %v619
        %vm621 = vcmp.ge.f32.partialorder %v349, 0.0035938136
        %vm622 = vcmp.ge.f32.partialorder %v350, 0.0035938136
        %vm623 = vcmp.ge.f32.partialorder %v351, 0.0035938136
        %vm624 = vcmp.ge.f32.partialorder %v352, 0.0035938136
        %v625 = vsel %vm621, 1.0, 0.0
        %v626 = vsel %vm622, 1.0, 0.0
        %v627 = vsel %vm623, 1.0, 0.0
        %v628 = vsel %vm624, 1.0, 0.0
        %v629 = vadd.f32 %v625, %v626
        %v630 = vadd.f32 %v629, %v627
        %v631 = vadd.f32 %v630, %v628
        %v632 = vrot.slane %v631, 4
        %v633 = vadd.f32 %v631, %v632
        %v634 = vrot.slane %v633, 2
        %v635 = vadd.f32 %v633, %v634
        %v636 = vrot.slane %v635, 1
        %v637 = vadd.f32 %v635, %v636
        %638 = vst [vmem:[%s262 + $0xb] sm:$0x1] %v637
        %v639 = vsel %vm621, %v349, 0.0
        %v640 = vsel %vm622, %v350, 0.0
        %v641 = vsel %vm623, %v351, 0.0
        %v642 = vsel %vm624, %v352, 0.0
        %v643 = vadd.f32 %v639, %v640
        %v644 = vadd.f32 %v643, %v641
        %v645 = vadd.f32 %v644, %v642
        %v646 = vrot.slane %v645, 4
        %v647 = vadd.f32 %v645, %v646
        %v648 = vrot.slane %v647, 2
        %v649 = vadd.f32 %v647, %v648
        %v650 = vrot.slane %v649, 1
        %v651 = vadd.f32 %v649, %v650
        %652 = vst [vmem:[%s262 + $0x4b] sm:$0x1] %v651
        %vm653 = vcmp.ge.f32.partialorder %v349, 0.004314402
        %vm654 = vcmp.ge.f32.partialorder %v350, 0.004314402
        %vm655 = vcmp.ge.f32.partialorder %v351, 0.004314402
        %vm656 = vcmp.ge.f32.partialorder %v352, 0.004314402
        %v657 = vsel %vm653, 1.0, 0.0
        %v658 = vsel %vm654, 1.0, 0.0
        %v659 = vsel %vm655, 1.0, 0.0
        %v660 = vsel %vm656, 1.0, 0.0
        %v661 = vadd.f32 %v657, %v658
        %v662 = vadd.f32 %v661, %v659
        %v663 = vadd.f32 %v662, %v660
        %v664 = vrot.slane %v663, 4
        %v665 = vadd.f32 %v663, %v664
        %v666 = vrot.slane %v665, 2
        %v667 = vadd.f32 %v665, %v666
        %v668 = vrot.slane %v667, 1
        %v669 = vadd.f32 %v667, %v668
        %670 = vst [vmem:[%s262 + $0xc] sm:$0x1] %v669
        %v671 = vsel %vm653, %v349, 0.0
        %v672 = vsel %vm654, %v350, 0.0
        %v673 = vsel %vm655, %v351, 0.0
        %v674 = vsel %vm656, %v352, 0.0
        %v675 = vadd.f32 %v671, %v672
        %v676 = vadd.f32 %v675, %v673
        %v677 = vadd.f32 %v676, %v674
        %v678 = vrot.slane %v677, 4
        %v679 = vadd.f32 %v677, %v678
        %v680 = vrot.slane %v679, 2
        %v681 = vadd.f32 %v679, %v680
        %v682 = vrot.slane %v681, 1
        %v683 = vadd.f32 %v681, %v682
        %684 = vst [vmem:[%s262 + $0x4c] sm:$0x1] %v683
        %vm685 = vcmp.ge.f32.partialorder %v349, 0.0051794746
        %vm686 = vcmp.ge.f32.partialorder %v350, 0.0051794746
        %vm687 = vcmp.ge.f32.partialorder %v351, 0.0051794746
        %vm688 = vcmp.ge.f32.partialorder %v352, 0.0051794746
        %v689 = vsel %vm685, 1.0, 0.0
        %v690 = vsel %vm686, 1.0, 0.0
        %v691 = vsel %vm687, 1.0, 0.0
        %v692 = vsel %vm688, 1.0, 0.0
        %v693 = vadd.f32 %v689, %v690
        %v694 = vadd.f32 %v693, %v691
        %v695 = vadd.f32 %v694, %v692
        %v696 = vrot.slane %v695, 4
        %v697 = vadd.f32 %v695, %v696
        %v698 = vrot.slane %v697, 2
        %v699 = vadd.f32 %v697, %v698
        %v700 = vrot.slane %v699, 1
        %v701 = vadd.f32 %v699, %v700
        %702 = vst [vmem:[%s262 + $0xd] sm:$0x1] %v701
        %v703 = vsel %vm685, %v349, 0.0
        %v704 = vsel %vm686, %v350, 0.0
        %v705 = vsel %vm687, %v351, 0.0
        %v706 = vsel %vm688, %v352, 0.0
        %v707 = vadd.f32 %v703, %v704
        %v708 = vadd.f32 %v707, %v705
        %v709 = vadd.f32 %v708, %v706
        %v710 = vrot.slane %v709, 4
        %v711 = vadd.f32 %v709, %v710
        %v712 = vrot.slane %v711, 2
        %v713 = vadd.f32 %v711, %v712
        %v714 = vrot.slane %v713, 1
        %v715 = vadd.f32 %v713, %v714
        %716 = vst [vmem:[%s262 + $0x4d] sm:$0x1] %v715
        %vm717 = vcmp.ge.f32.partialorder %v349, 0.0062180012
        %vm718 = vcmp.ge.f32.partialorder %v350, 0.0062180012
        %vm719 = vcmp.ge.f32.partialorder %v351, 0.0062180012
        %vm720 = vcmp.ge.f32.partialorder %v352, 0.0062180012
        %v721 = vsel %vm717, 1.0, 0.0
        %v722 = vsel %vm718, 1.0, 0.0
        %v723 = vsel %vm719, 1.0, 0.0
        %v724 = vsel %vm720, 1.0, 0.0
        %v725 = vadd.f32 %v721, %v722
        %v726 = vadd.f32 %v725, %v723
        %v727 = vadd.f32 %v726, %v724
        %v728 = vrot.slane %v727, 4
        %v729 = vadd.f32 %v727, %v728
        %v730 = vrot.slane %v729, 2
        %v731 = vadd.f32 %v729, %v730
        %v732 = vrot.slane %v731, 1
        %v733 = vadd.f32 %v731, %v732
        %734 = vst [vmem:[%s262 + $0xe] sm:$0x1] %v733
        %v735 = vsel %vm717, %v349, 0.0
        %v736 = vsel %vm718, %v350, 0.0
        %v737 = vsel %vm719, %v351, 0.0
        %v738 = vsel %vm720, %v352, 0.0
        %v739 = vadd.f32 %v735, %v736
        %v740 = vadd.f32 %v739, %v737
        %v741 = vadd.f32 %v740, %v738
        %v742 = vrot.slane %v741, 4
        %v743 = vadd.f32 %v741, %v742
        %v744 = vrot.slane %v743, 2
        %v745 = vadd.f32 %v743, %v744
        %v746 = vrot.slane %v745, 1
        %v747 = vadd.f32 %v745, %v746
        %748 = vst [vmem:[%s262 + $0x4e] sm:$0x1] %v747
        %vm749 = vcmp.ge.f32.partialorder %v349, 0.0074647604
        %vm750 = vcmp.ge.f32.partialorder %v350, 0.0074647604
        %vm751 = vcmp.ge.f32.partialorder %v351, 0.0074647604
        %vm752 = vcmp.ge.f32.partialorder %v352, 0.0074647604
        %v753 = vsel %vm749, 1.0, 0.0
        %v754 = vsel %vm750, 1.0, 0.0
        %v755 = vsel %vm751, 1.0, 0.0
        %v756 = vsel %vm752, 1.0, 0.0
        %v757 = vadd.f32 %v753, %v754
        %v758 = vadd.f32 %v757, %v755
        %v759 = vadd.f32 %v758, %v756
        %v760 = vrot.slane %v759, 4
        %v761 = vadd.f32 %v759, %v760
        %v762 = vrot.slane %v761, 2
        %v763 = vadd.f32 %v761, %v762
        %v764 = vrot.slane %v763, 1
        %v765 = vadd.f32 %v763, %v764
        %766 = vst [vmem:[%s262 + $0xf] sm:$0x1] %v765
        %v767 = vsel %vm749, %v349, 0.0
        %v768 = vsel %vm750, %v350, 0.0
        %v769 = vsel %vm751, %v351, 0.0
        %v770 = vsel %vm752, %v352, 0.0
        %v771 = vadd.f32 %v767, %v768
        %v772 = vadd.f32 %v771, %v769
        %v773 = vadd.f32 %v772, %v770
        %v774 = vrot.slane %v773, 4
        %v775 = vadd.f32 %v773, %v774
        %v776 = vrot.slane %v775, 2
        %v777 = vadd.f32 %v775, %v776
        %v778 = vrot.slane %v777, 1
        %v779 = vadd.f32 %v777, %v778
        %780 = vst [vmem:[%s262 + $0x4f] sm:$0x1] %v779
        %vm781 = vcmp.ge.f32.partialorder %v349, 0.008961505
        %vm782 = vcmp.ge.f32.partialorder %v350, 0.008961505
        %vm783 = vcmp.ge.f32.partialorder %v351, 0.008961505
        %vm784 = vcmp.ge.f32.partialorder %v352, 0.008961505
        %v785 = vsel %vm781, 1.0, 0.0
        %v786 = vsel %vm782, 1.0, 0.0
        %v787 = vsel %vm783, 1.0, 0.0
        %v788 = vsel %vm784, 1.0, 0.0
        %v789 = vadd.f32 %v785, %v786
        %v790 = vadd.f32 %v789, %v787
        %v791 = vadd.f32 %v790, %v788
        %v792 = vrot.slane %v791, 4
        %v793 = vadd.f32 %v791, %v792
        %v794 = vrot.slane %v793, 2
        %v795 = vadd.f32 %v793, %v794
        %v796 = vrot.slane %v795, 1
        %v797 = vadd.f32 %v795, %v796
        %798 = vst [vmem:[%s262 + $0x10] sm:$0x1] %v797
        %v799 = vsel %vm781, %v349, 0.0
        %v800 = vsel %vm782, %v350, 0.0
        %v801 = vsel %vm783, %v351, 0.0
        %v802 = vsel %vm784, %v352, 0.0
        %v803 = vadd.f32 %v799, %v800
        %v804 = vadd.f32 %v803, %v801
        %v805 = vadd.f32 %v804, %v802
        %v806 = vrot.slane %v805, 4
        %v807 = vadd.f32 %v805, %v806
        %v808 = vrot.slane %v807, 2
        %v809 = vadd.f32 %v807, %v808
        %v810 = vrot.slane %v809, 1
        %v811 = vadd.f32 %v809, %v810
        %812 = vst [vmem:[%s262 + $0x50] sm:$0x1] %v811
        %vm813 = vcmp.ge.f32.partialorder %v349, 0.010758359
        %vm814 = vcmp.ge.f32.partialorder %v350, 0.010758359
        %vm815 = vcmp.ge.f32.partialorder %v351, 0.010758359
        %vm816 = vcmp.ge.f32.partialorder %v352, 0.010758359
        %v817 = vsel %vm813, 1.0, 0.0
        %v818 = vsel %vm814, 1.0, 0.0
        %v819 = vsel %vm815, 1.0, 0.0
        %v820 = vsel %vm816, 1.0, 0.0
        %v821 = vadd.f32 %v817, %v818
        %v822 = vadd.f32 %v821, %v819
        %v823 = vadd.f32 %v822, %v820
        %v824 = vrot.slane %v823, 4
        %v825 = vadd.f32 %v823, %v824
        %v826 = vrot.slane %v825, 2
        %v827 = vadd.f32 %v825, %v826
        %v828 = vrot.slane %v827, 1
        %v829 = vadd.f32 %v827, %v828
        %830 = vst [vmem:[%s262 + $0x11] sm:$0x1] %v829
        %v831 = vsel %vm813, %v349, 0.0
        %v832 = vsel %vm814, %v350, 0.0
        %v833 = vsel %vm815, %v351, 0.0
        %v834 = vsel %vm816, %v352, 0.0
        %v835 = vadd.f32 %v831, %v832
        %v836 = vadd.f32 %v835, %v833
        %v837 = vadd.f32 %v836, %v834
        %v838 = vrot.slane %v837, 4
        %v839 = vadd.f32 %v837, %v838
        %v840 = vrot.slane %v839, 2
        %v841 = vadd.f32 %v839, %v840
        %v842 = vrot.slane %v841, 1
        %v843 = vadd.f32 %v841, %v842
        %844 = vst [vmem:[%s262 + $0x51] sm:$0x1] %v843
        %vm845 = vcmp.ge.f32.partialorder %v349, 0.012915497
        %vm846 = vcmp.ge.f32.partialorder %v350, 0.012915497
        %vm847 = vcmp.ge.f32.partialorder %v351, 0.012915497
        %vm848 = vcmp.ge.f32.partialorder %v352, 0.012915497
        %v849 = vsel %vm845, 1.0, 0.0
        %v850 = vsel %vm846, 1.0, 0.0
        %v851 = vsel %vm847, 1.0, 0.0
        %v852 = vsel %vm848, 1.0, 0.0
        %v853 = vadd.f32 %v849, %v850
        %v854 = vadd.f32 %v853, %v851
        %v855 = vadd.f32 %v854, %v852
        %v856 = vrot.slane %v855, 4
        %v857 = vadd.f32 %v855, %v856
        %v858 = vrot.slane %v857, 2
        %v859 = vadd.f32 %v857, %v858
        %v860 = vrot.slane %v859, 1
        %v861 = vadd.f32 %v859, %v860
        %862 = vst [vmem:[%s262 + $0x12] sm:$0x1] %v861
        %v863 = vsel %vm845, %v349, 0.0
        %v864 = vsel %vm846, %v350, 0.0
        %v865 = vsel %vm847, %v351, 0.0
        %v866 = vsel %vm848, %v352, 0.0
        %v867 = vadd.f32 %v863, %v864
        %v868 = vadd.f32 %v867, %v865
        %v869 = vadd.f32 %v868, %v866
        %v870 = vrot.slane %v869, 4
        %v871 = vadd.f32 %v869, %v870
        %v872 = vrot.slane %v871, 2
        %v873 = vadd.f32 %v871, %v872
        %v874 = vrot.slane %v873, 1
        %v875 = vadd.f32 %v873, %v874
        %876 = vst [vmem:[%s262 + $0x52] sm:$0x1] %v875
        %vm877 = vcmp.ge.f32.partialorder %v349, 0.015505157
        %vm878 = vcmp.ge.f32.partialorder %v350, 0.015505157
        %vm879 = vcmp.ge.f32.partialorder %v351, 0.015505157
        %vm880 = vcmp.ge.f32.partialorder %v352, 0.015505157
        %v881 = vsel %vm877, 1.0, 0.0
        %v882 = vsel %vm878, 1.0, 0.0
        %v883 = vsel %vm879, 1.0, 0.0
        %v884 = vsel %vm880, 1.0, 0.0
        %v885 = vadd.f32 %v881, %v882
        %v886 = vadd.f32 %v885, %v883
        %v887 = vadd.f32 %v886, %v884
        %v888 = vrot.slane %v887, 4
        %v889 = vadd.f32 %v887, %v888
        %v890 = vrot.slane %v889, 2
        %v891 = vadd.f32 %v889, %v890
        %v892 = vrot.slane %v891, 1
        %v893 = vadd.f32 %v891, %v892
        %894 = vst [vmem:[%s262 + $0x13] sm:$0x1] %v893
        %v895 = vsel %vm877, %v349, 0.0
        %v896 = vsel %vm878, %v350, 0.0
        %v897 = vsel %vm879, %v351, 0.0
        %v898 = vsel %vm880, %v352, 0.0
        %v899 = vadd.f32 %v895, %v896
        %v900 = vadd.f32 %v899, %v897
        %v901 = vadd.f32 %v900, %v898
        %v902 = vrot.slane %v901, 4
        %v903 = vadd.f32 %v901, %v902
        %v904 = vrot.slane %v903, 2
        %v905 = vadd.f32 %v903, %v904
        %v906 = vrot.slane %v905, 1
        %v907 = vadd.f32 %v905, %v906
        %908 = vst [vmem:[%s262 + $0x53] sm:$0x1] %v907
        %vm909 = vcmp.ge.f32.partialorder %v349, 0.018614067
        %vm910 = vcmp.ge.f32.partialorder %v350, 0.018614067
        %vm911 = vcmp.ge.f32.partialorder %v351, 0.018614067
        %vm912 = vcmp.ge.f32.partialorder %v352, 0.018614067
        %v913 = vsel %vm909, 1.0, 0.0
        %v914 = vsel %vm910, 1.0, 0.0
        %v915 = vsel %vm911, 1.0, 0.0
        %v916 = vsel %vm912, 1.0, 0.0
        %v917 = vadd.f32 %v913, %v914
        %v918 = vadd.f32 %v917, %v915
        %v919 = vadd.f32 %v918, %v916
        %v920 = vrot.slane %v919, 4
        %v921 = vadd.f32 %v919, %v920
        %v922 = vrot.slane %v921, 2
        %v923 = vadd.f32 %v921, %v922
        %v924 = vrot.slane %v923, 1
        %v925 = vadd.f32 %v923, %v924
        %926 = vst [vmem:[%s262 + $0x14] sm:$0x1] %v925
        %v927 = vsel %vm909, %v349, 0.0
        %v928 = vsel %vm910, %v350, 0.0
        %v929 = vsel %vm911, %v351, 0.0
        %v930 = vsel %vm912, %v352, 0.0
        %v931 = vadd.f32 %v927, %v928
        %v932 = vadd.f32 %v931, %v929
        %v933 = vadd.f32 %v932, %v930
        %v934 = vrot.slane %v933, 4
        %v935 = vadd.f32 %v933, %v934
        %v936 = vrot.slane %v935, 2
        %v937 = vadd.f32 %v935, %v936
        %v938 = vrot.slane %v937, 1
        %v939 = vadd.f32 %v937, %v938
        %940 = vst [vmem:[%s262 + $0x54] sm:$0x1] %v939
        %vm941 = vcmp.ge.f32.partialorder %v349, 0.022346336
        %vm942 = vcmp.ge.f32.partialorder %v350, 0.022346336
        %vm943 = vcmp.ge.f32.partialorder %v351, 0.022346336
        %vm944 = vcmp.ge.f32.partialorder %v352, 0.022346336
        %v945 = vsel %vm941, 1.0, 0.0
        %v946 = vsel %vm942, 1.0, 0.0
        %v947 = vsel %vm943, 1.0, 0.0
        %v948 = vsel %vm944, 1.0, 0.0
        %v949 = vadd.f32 %v945, %v946
        %v950 = vadd.f32 %v949, %v947
        %v951 = vadd.f32 %v950, %v948
        %v952 = vrot.slane %v951, 4
        %v953 = vadd.f32 %v951, %v952
        %v954 = vrot.slane %v953, 2
        %v955 = vadd.f32 %v953, %v954
        %v956 = vrot.slane %v955, 1
        %v957 = vadd.f32 %v955, %v956
        %958 = vst [vmem:[%s262 + $0x15] sm:$0x1] %v957
        %v959 = vsel %vm941, %v349, 0.0
        %v960 = vsel %vm942, %v350, 0.0
        %v961 = vsel %vm943, %v351, 0.0
        %v962 = vsel %vm944, %v352, 0.0
        %v963 = vadd.f32 %v959, %v960
        %v964 = vadd.f32 %v963, %v961
        %v965 = vadd.f32 %v964, %v962
        %v966 = vrot.slane %v965, 4
        %v967 = vadd.f32 %v965, %v966
        %v968 = vrot.slane %v967, 2
        %v969 = vadd.f32 %v967, %v968
        %v970 = vrot.slane %v969, 1
        %v971 = vadd.f32 %v969, %v970
        %972 = vst [vmem:[%s262 + $0x55] sm:$0x1] %v971
        %vm973 = vcmp.ge.f32.partialorder %v349, 0.026826957
        %vm974 = vcmp.ge.f32.partialorder %v350, 0.026826957
        %vm975 = vcmp.ge.f32.partialorder %v351, 0.026826957
        %vm976 = vcmp.ge.f32.partialorder %v352, 0.026826957
        %v977 = vsel %vm973, 1.0, 0.0
        %v978 = vsel %vm974, 1.0, 0.0
        %v979 = vsel %vm975, 1.0, 0.0
        %v980 = vsel %vm976, 1.0, 0.0
        %v981 = vadd.f32 %v977, %v978
        %v982 = vadd.f32 %v981, %v979
        %v983 = vadd.f32 %v982, %v980
        %v984 = vrot.slane %v983, 4
        %v985 = vadd.f32 %v983, %v984
        %v986 = vrot.slane %v985, 2
        %v987 = vadd.f32 %v985, %v986
        %v988 = vrot.slane %v987, 1
        %v989 = vadd.f32 %v987, %v988
        %990 = vst [vmem:[%s262 + $0x16] sm:$0x1] %v989
        %v991 = vsel %vm973, %v349, 0.0
        %v992 = vsel %vm974, %v350, 0.0
        %v993 = vsel %vm975, %v351, 0.0
        %v994 = vsel %vm976, %v352, 0.0
        %v995 = vadd.f32 %v991, %v992
        %v996 = vadd.f32 %v995, %v993
        %v997 = vadd.f32 %v996, %v994
        %v998 = vrot.slane %v997, 4
        %v999 = vadd.f32 %v997, %v998
        %v1000 = vrot.slane %v999, 2
        %v1001 = vadd.f32 %v999, %v1000
        %v1002 = vrot.slane %v1001, 1
        %v1003 = vadd.f32 %v1001, %v1002
        %1004 = vst [vmem:[%s262 + $0x56] sm:$0x1] %v1003
        %vm1005 = vcmp.ge.f32.partialorder %v349, 0.03220598
        %vm1006 = vcmp.ge.f32.partialorder %v350, 0.03220598
        %vm1007 = vcmp.ge.f32.partialorder %v351, 0.03220598
        %vm1008 = vcmp.ge.f32.partialorder %v352, 0.03220598
        %v1009 = vsel %vm1005, 1.0, 0.0
        %v1010 = vsel %vm1006, 1.0, 0.0
        %v1011 = vsel %vm1007, 1.0, 0.0
        %v1012 = vsel %vm1008, 1.0, 0.0
        %v1013 = vadd.f32 %v1009, %v1010
        %v1014 = vadd.f32 %v1013, %v1011
        %v1015 = vadd.f32 %v1014, %v1012
        %v1016 = vrot.slane %v1015, 4
        %v1017 = vadd.f32 %v1015, %v1016
        %v1018 = vrot.slane %v1017, 2
        %v1019 = vadd.f32 %v1017, %v1018
        %v1020 = vrot.slane %v1019, 1
        %v1021 = vadd.f32 %v1019, %v1020
        %1022 = vst [vmem:[%s262 + $0x17] sm:$0x1] %v1021
        %v1023 = vsel %vm1005, %v349, 0.0
        %v1024 = vsel %vm1006, %v350, 0.0
        %v1025 = vsel %vm1007, %v351, 0.0
        %v1026 = vsel %vm1008, %v352, 0.0
        %v1027 = vadd.f32 %v1023, %v1024
        %v1028 = vadd.f32 %v1027, %v1025
        %v1029 = vadd.f32 %v1028, %v1026
        %v1030 = vrot.slane %v1029, 4
        %v1031 = vadd.f32 %v1029, %v1030
        %v1032 = vrot.slane %v1031, 2
        %v1033 = vadd.f32 %v1031, %v1032
        %v1034 = vrot.slane %v1033, 1
        %v1035 = vadd.f32 %v1033, %v1034
        %1036 = vst [vmem:[%s262 + $0x57] sm:$0x1] %v1035
        %vm1037 = vcmp.ge.f32.partialorder %v349, 0.038663536
        %vm1038 = vcmp.ge.f32.partialorder %v350, 0.038663536
        %vm1039 = vcmp.ge.f32.partialorder %v351, 0.038663536
        %vm1040 = vcmp.ge.f32.partialorder %v352, 0.038663536
        %v1041 = vsel %vm1037, 1.0, 0.0
        %v1042 = vsel %vm1038, 1.0, 0.0
        %v1043 = vsel %vm1039, 1.0, 0.0
        %v1044 = vsel %vm1040, 1.0, 0.0
        %v1045 = vadd.f32 %v1041, %v1042
        %v1046 = vadd.f32 %v1045, %v1043
        %v1047 = vadd.f32 %v1046, %v1044
        %v1048 = vrot.slane %v1047, 4
        %v1049 = vadd.f32 %v1047, %v1048
        %v1050 = vrot.slane %v1049, 2
        %v1051 = vadd.f32 %v1049, %v1050
        %v1052 = vrot.slane %v1051, 1
        %v1053 = vadd.f32 %v1051, %v1052
        %1054 = vst [vmem:[%s262 + $0x18] sm:$0x1] %v1053
        %v1055 = vsel %vm1037, %v349, 0.0
        %v1056 = vsel %vm1038, %v350, 0.0
        %v1057 = vsel %vm1039, %v351, 0.0
        %v1058 = vsel %vm1040, %v352, 0.0
        %v1059 = vadd.f32 %v1055, %v1056
        %v1060 = vadd.f32 %v1059, %v1057
        %v1061 = vadd.f32 %v1060, %v1058
        %v1062 = vrot.slane %v1061, 4
        %v1063 = vadd.f32 %v1061, %v1062
        %v1064 = vrot.slane %v1063, 2
        %v1065 = vadd.f32 %v1063, %v1064
        %v1066 = vrot.slane %v1065, 1
        %v1067 = vadd.f32 %v1065, %v1066
        %1068 = vst [vmem:[%s262 + $0x58] sm:$0x1] %v1067
        %vm1069 = vcmp.ge.f32.partialorder %v349, 0.046415888
        %vm1070 = vcmp.ge.f32.partialorder %v350, 0.046415888
        %vm1071 = vcmp.ge.f32.partialorder %v351, 0.046415888
        %vm1072 = vcmp.ge.f32.partialorder %v352, 0.046415888
        %v1073 = vsel %vm1069, 1.0, 0.0
        %v1074 = vsel %vm1070, 1.0, 0.0
        %v1075 = vsel %vm1071, 1.0, 0.0
        %v1076 = vsel %vm1072, 1.0, 0.0
        %v1077 = vadd.f32 %v1073, %v1074
        %v1078 = vadd.f32 %v1077, %v1075
        %v1079 = vadd.f32 %v1078, %v1076
        %v1080 = vrot.slane %v1079, 4
        %v1081 = vadd.f32 %v1079, %v1080
        %v1082 = vrot.slane %v1081, 2
        %v1083 = vadd.f32 %v1081, %v1082
        %v1084 = vrot.slane %v1083, 1
        %v1085 = vadd.f32 %v1083, %v1084
        %1086 = vst [vmem:[%s262 + $0x19] sm:$0x1] %v1085
        %v1087 = vsel %vm1069, %v349, 0.0
        %v1088 = vsel %vm1070, %v350, 0.0
        %v1089 = vsel %vm1071, %v351, 0.0
        %v1090 = vsel %vm1072, %v352, 0.0
        %v1091 = vadd.f32 %v1087, %v1088
        %v1092 = vadd.f32 %v1091, %v1089
        %v1093 = vadd.f32 %v1092, %v1090
        %v1094 = vrot.slane %v1093, 4
        %v1095 = vadd.f32 %v1093, %v1094
        %v1096 = vrot.slane %v1095, 2
        %v1097 = vadd.f32 %v1095, %v1096
        %v1098 = vrot.slane %v1097, 1
        %v1099 = vadd.f32 %v1097, %v1098
        %1100 = vst [vmem:[%s262 + $0x59] sm:$0x1] %v1099
        %vm1101 = vcmp.ge.f32.partialorder %v349, 0.055722646
        %vm1102 = vcmp.ge.f32.partialorder %v350, 0.055722646
        %vm1103 = vcmp.ge.f32.partialorder %v351, 0.055722646
        %vm1104 = vcmp.ge.f32.partialorder %v352, 0.055722646
        %v1105 = vsel %vm1101, 1.0, 0.0
        %v1106 = vsel %vm1102, 1.0, 0.0
        %v1107 = vsel %vm1103, 1.0, 0.0
        %v1108 = vsel %vm1104, 1.0, 0.0
        %v1109 = vadd.f32 %v1105, %v1106
        %v1110 = vadd.f32 %v1109, %v1107
        %v1111 = vadd.f32 %v1110, %v1108
        %v1112 = vrot.slane %v1111, 4
        %v1113 = vadd.f32 %v1111, %v1112
        %v1114 = vrot.slane %v1113, 2
        %v1115 = vadd.f32 %v1113, %v1114
        %v1116 = vrot.slane %v1115, 1
        %v1117 = vadd.f32 %v1115, %v1116
        %1118 = vst [vmem:[%s262 + $0x1a] sm:$0x1] %v1117
        %v1119 = vsel %vm1101, %v349, 0.0
        %v1120 = vsel %vm1102, %v350, 0.0
        %v1121 = vsel %vm1103, %v351, 0.0
        %v1122 = vsel %vm1104, %v352, 0.0
        %v1123 = vadd.f32 %v1119, %v1120
        %v1124 = vadd.f32 %v1123, %v1121
        %v1125 = vadd.f32 %v1124, %v1122
        %v1126 = vrot.slane %v1125, 4
        %v1127 = vadd.f32 %v1125, %v1126
        %v1128 = vrot.slane %v1127, 2
        %v1129 = vadd.f32 %v1127, %v1128
        %v1130 = vrot.slane %v1129, 1
        %v1131 = vadd.f32 %v1129, %v1130
        %1132 = vst [vmem:[%s262 + $0x5a] sm:$0x1] %v1131
        %vm1133 = vcmp.ge.f32.partialorder %v349, 0.066895485
        %vm1134 = vcmp.ge.f32.partialorder %v350, 0.066895485
        %vm1135 = vcmp.ge.f32.partialorder %v351, 0.066895485
        %vm1136 = vcmp.ge.f32.partialorder %v352, 0.066895485
        %v1137 = vsel %vm1133, 1.0, 0.0
        %v1138 = vsel %vm1134, 1.0, 0.0
        %v1139 = vsel %vm1135, 1.0, 0.0
        %v1140 = vsel %vm1136, 1.0, 0.0
        %v1141 = vadd.f32 %v1137, %v1138
        %v1142 = vadd.f32 %v1141, %v1139
        %v1143 = vadd.f32 %v1142, %v1140
        %v1144 = vrot.slane %v1143, 4
        %v1145 = vadd.f32 %v1143, %v1144
        %v1146 = vrot.slane %v1145, 2
        %v1147 = vadd.f32 %v1145, %v1146
        %v1148 = vrot.slane %v1147, 1
        %v1149 = vadd.f32 %v1147, %v1148
        %1150 = vst [vmem:[%s262 + $0x1b] sm:$0x1] %v1149
        %v1151 = vsel %vm1133, %v349, 0.0
        %v1152 = vsel %vm1134, %v350, 0.0
        %v1153 = vsel %vm1135, %v351, 0.0
        %v1154 = vsel %vm1136, %v352, 0.0
        %v1155 = vadd.f32 %v1151, %v1152
        %v1156 = vadd.f32 %v1155, %v1153
        %v1157 = vadd.f32 %v1156, %v1154
        %v1158 = vrot.slane %v1157, 4
        %v1159 = vadd.f32 %v1157, %v1158
        %v1160 = vrot.slane %v1159, 2
        %v1161 = vadd.f32 %v1159, %v1160
        %v1162 = vrot.slane %v1161, 1
        %v1163 = vadd.f32 %v1161, %v1162
        %1164 = vst [vmem:[%s262 + $0x5b] sm:$0x1] %v1163
        %vm1165 = vcmp.ge.f32.partialorder %v349, 0.08030857
        %vm1166 = vcmp.ge.f32.partialorder %v350, 0.08030857
        %vm1167 = vcmp.ge.f32.partialorder %v351, 0.08030857
        %vm1168 = vcmp.ge.f32.partialorder %v352, 0.08030857
        %v1169 = vsel %vm1165, 1.0, 0.0
        %v1170 = vsel %vm1166, 1.0, 0.0
        %v1171 = vsel %vm1167, 1.0, 0.0
        %v1172 = vsel %vm1168, 1.0, 0.0
        %v1173 = vadd.f32 %v1169, %v1170
        %v1174 = vadd.f32 %v1173, %v1171
        %v1175 = vadd.f32 %v1174, %v1172
        %v1176 = vrot.slane %v1175, 4
        %v1177 = vadd.f32 %v1175, %v1176
        %v1178 = vrot.slane %v1177, 2
        %v1179 = vadd.f32 %v1177, %v1178
        %v1180 = vrot.slane %v1179, 1
        %v1181 = vadd.f32 %v1179, %v1180
        %1182 = vst [vmem:[%s262 + $0x1c] sm:$0x1] %v1181
        %v1183 = vsel %vm1165, %v349, 0.0
        %v1184 = vsel %vm1166, %v350, 0.0
        %v1185 = vsel %vm1167, %v351, 0.0
        %v1186 = vsel %vm1168, %v352, 0.0
        %v1187 = vadd.f32 %v1183, %v1184
        %v1188 = vadd.f32 %v1187, %v1185
        %v1189 = vadd.f32 %v1188, %v1186
        %v1190 = vrot.slane %v1189, 4
        %v1191 = vadd.f32 %v1189, %v1190
        %v1192 = vrot.slane %v1191, 2
        %v1193 = vadd.f32 %v1191, %v1192
        %v1194 = vrot.slane %v1193, 1
        %v1195 = vadd.f32 %v1193, %v1194
        %1196 = vst [vmem:[%s262 + $0x5c] sm:$0x1] %v1195
        %vm1197 = vcmp.ge.f32.partialorder %v349, 0.09641109
        %vm1198 = vcmp.ge.f32.partialorder %v350, 0.09641109
        %vm1199 = vcmp.ge.f32.partialorder %v351, 0.09641109
        %vm1200 = vcmp.ge.f32.partialorder %v352, 0.09641109
        %v1201 = vsel %vm1197, 1.0, 0.0
        %v1202 = vsel %vm1198, 1.0, 0.0
        %v1203 = vsel %vm1199, 1.0, 0.0
        %v1204 = vsel %vm1200, 1.0, 0.0
        %v1205 = vadd.f32 %v1201, %v1202
        %v1206 = vadd.f32 %v1205, %v1203
        %v1207 = vadd.f32 %v1206, %v1204
        %v1208 = vrot.slane %v1207, 4
        %v1209 = vadd.f32 %v1207, %v1208
        %v1210 = vrot.slane %v1209, 2
        %v1211 = vadd.f32 %v1209, %v1210
        %v1212 = vrot.slane %v1211, 1
        %v1213 = vadd.f32 %v1211, %v1212
        %1214 = vst [vmem:[%s262 + $0x1d] sm:$0x1] %v1213
        %v1215 = vsel %vm1197, %v349, 0.0
        %v1216 = vsel %vm1198, %v350, 0.0
        %v1217 = vsel %vm1199, %v351, 0.0
        %v1218 = vsel %vm1200, %v352, 0.0
        %v1219 = vadd.f32 %v1215, %v1216
        %v1220 = vadd.f32 %v1219, %v1217
        %v1221 = vadd.f32 %v1220, %v1218
        %v1222 = vrot.slane %v1221, 4
        %v1223 = vadd.f32 %v1221, %v1222
        %v1224 = vrot.slane %v1223, 2
        %v1225 = vadd.f32 %v1223, %v1224
        %v1226 = vrot.slane %v1225, 1
        %v1227 = vadd.f32 %v1225, %v1226
        %1228 = vst [vmem:[%s262 + $0x5d] sm:$0x1] %v1227
        %vm1229 = vcmp.ge.f32.partialorder %v349, 0.11574229
        %vm1230 = vcmp.ge.f32.partialorder %v350, 0.11574229
        %vm1231 = vcmp.ge.f32.partialorder %v351, 0.11574229
        %vm1232 = vcmp.ge.f32.partialorder %v352, 0.11574229
        %v1233 = vsel %vm1229, 1.0, 0.0
        %v1234 = vsel %vm1230, 1.0, 0.0
        %v1235 = vsel %vm1231, 1.0, 0.0
        %v1236 = vsel %vm1232, 1.0, 0.0
        %v1237 = vadd.f32 %v1233, %v1234
        %v1238 = vadd.f32 %v1237, %v1235
        %v1239 = vadd.f32 %v1238, %v1236
        %v1240 = vrot.slane %v1239, 4
        %v1241 = vadd.f32 %v1239, %v1240
        %v1242 = vrot.slane %v1241, 2
        %v1243 = vadd.f32 %v1241, %v1242
        %v1244 = vrot.slane %v1243, 1
        %v1245 = vadd.f32 %v1243, %v1244
        %1246 = vst [vmem:[%s262 + $0x1e] sm:$0x1] %v1245
        %v1247 = vsel %vm1229, %v349, 0.0
        %v1248 = vsel %vm1230, %v350, 0.0
        %v1249 = vsel %vm1231, %v351, 0.0
        %v1250 = vsel %vm1232, %v352, 0.0
        %v1251 = vadd.f32 %v1247, %v1248
        %v1252 = vadd.f32 %v1251, %v1249
        %v1253 = vadd.f32 %v1252, %v1250
        %v1254 = vrot.slane %v1253, 4
        %v1255 = vadd.f32 %v1253, %v1254
        %v1256 = vrot.slane %v1255, 2
        %v1257 = vadd.f32 %v1255, %v1256
        %v1258 = vrot.slane %v1257, 1
        %v1259 = vadd.f32 %v1257, %v1258
        %1260 = vst [vmem:[%s262 + $0x5e] sm:$0x1] %v1259
        %vm1261 = vcmp.ge.f32.partialorder %v349, 0.13894954
        %vm1262 = vcmp.ge.f32.partialorder %v350, 0.13894954
        %vm1263 = vcmp.ge.f32.partialorder %v351, 0.13894954
        %vm1264 = vcmp.ge.f32.partialorder %v352, 0.13894954
        %v1265 = vsel %vm1261, 1.0, 0.0
        %v1266 = vsel %vm1262, 1.0, 0.0
        %v1267 = vsel %vm1263, 1.0, 0.0
        %v1268 = vsel %vm1264, 1.0, 0.0
        %v1269 = vadd.f32 %v1265, %v1266
        %v1270 = vadd.f32 %v1269, %v1267
        %v1271 = vadd.f32 %v1270, %v1268
        %v1272 = vrot.slane %v1271, 4
        %v1273 = vadd.f32 %v1271, %v1272
        %v1274 = vrot.slane %v1273, 2
        %v1275 = vadd.f32 %v1273, %v1274
        %v1276 = vrot.slane %v1275, 1
        %v1277 = vadd.f32 %v1275, %v1276
        %1278 = vst [vmem:[%s262 + $0x1f] sm:$0x1] %v1277
        %v1279 = vsel %vm1261, %v349, 0.0
        %v1280 = vsel %vm1262, %v350, 0.0
        %v1281 = vsel %vm1263, %v351, 0.0
        %v1282 = vsel %vm1264, %v352, 0.0
        %v1283 = vadd.f32 %v1279, %v1280
        %v1284 = vadd.f32 %v1283, %v1281
        %v1285 = vadd.f32 %v1284, %v1282
        %v1286 = vrot.slane %v1285, 4
        %v1287 = vadd.f32 %v1285, %v1286
        %v1288 = vrot.slane %v1287, 2
        %v1289 = vadd.f32 %v1287, %v1288
        %v1290 = vrot.slane %v1289, 1
        %v1291 = vadd.f32 %v1289, %v1290
        %1292 = vst [vmem:[%s262 + $0x5f] sm:$0x1] %v1291
        %vm1293 = vcmp.ge.f32.partialorder %v349, 0.16681005
        %vm1294 = vcmp.ge.f32.partialorder %v350, 0.16681005
        %vm1295 = vcmp.ge.f32.partialorder %v351, 0.16681005
        %vm1296 = vcmp.ge.f32.partialorder %v352, 0.16681005
        %v1297 = vsel %vm1293, 1.0, 0.0
        %v1298 = vsel %vm1294, 1.0, 0.0
        %v1299 = vsel %vm1295, 1.0, 0.0
        %v1300 = vsel %vm1296, 1.0, 0.0
        %v1301 = vadd.f32 %v1297, %v1298
        %v1302 = vadd.f32 %v1301, %v1299
        %v1303 = vadd.f32 %v1302, %v1300
        %v1304 = vrot.slane %v1303, 4
        %v1305 = vadd.f32 %v1303, %v1304
        %v1306 = vrot.slane %v1305, 2
        %v1307 = vadd.f32 %v1305, %v1306
        %v1308 = vrot.slane %v1307, 1
        %v1309 = vadd.f32 %v1307, %v1308
        %1310 = vst [vmem:[%s262 + $0x20] sm:$0x1] %v1309
        %v1311 = vsel %vm1293, %v349, 0.0
        %v1312 = vsel %vm1294, %v350, 0.0
        %v1313 = vsel %vm1295, %v351, 0.0
        %v1314 = vsel %vm1296, %v352, 0.0
        %v1315 = vadd.f32 %v1311, %v1312
        %v1316 = vadd.f32 %v1315, %v1313
        %v1317 = vadd.f32 %v1316, %v1314
        %v1318 = vrot.slane %v1317, 4
        %v1319 = vadd.f32 %v1317, %v1318
        %v1320 = vrot.slane %v1319, 2
        %v1321 = vadd.f32 %v1319, %v1320
        %v1322 = vrot.slane %v1321, 1
        %v1323 = vadd.f32 %v1321, %v1322
        %1324 = vst [vmem:[%s262 + $0x60] sm:$0x1] %v1323
        %vm1325 = vcmp.ge.f32.partialorder %v349, 0.20025681
        %vm1326 = vcmp.ge.f32.partialorder %v350, 0.20025681
        %vm1327 = vcmp.ge.f32.partialorder %v351, 0.20025681
        %vm1328 = vcmp.ge.f32.partialorder %v352, 0.20025681
        %v1329 = vsel %vm1325, 1.0, 0.0
        %v1330 = vsel %vm1326, 1.0, 0.0
        %v1331 = vsel %vm1327, 1.0, 0.0
        %v1332 = vsel %vm1328, 1.0, 0.0
        %v1333 = vadd.f32 %v1329, %v1330
        %v1334 = vadd.f32 %v1333, %v1331
        %v1335 = vadd.f32 %v1334, %v1332
        %v1336 = vrot.slane %v1335, 4
        %v1337 = vadd.f32 %v1335, %v1336
        %v1338 = vrot.slane %v1337, 2
        %v1339 = vadd.f32 %v1337, %v1338
        %v1340 = vrot.slane %v1339, 1
        %v1341 = vadd.f32 %v1339, %v1340
        %1342 = vst [vmem:[%s262 + $0x21] sm:$0x1] %v1341
        %v1343 = vsel %vm1325, %v349, 0.0
        %v1344 = vsel %vm1326, %v350, 0.0
        %v1345 = vsel %vm1327, %v351, 0.0
        %v1346 = vsel %vm1328, %v352, 0.0
        %v1347 = vadd.f32 %v1343, %v1344
        %v1348 = vadd.f32 %v1347, %v1345
        %v1349 = vadd.f32 %v1348, %v1346
        %v1350 = vrot.slane %v1349, 4
        %v1351 = vadd.f32 %v1349, %v1350
        %v1352 = vrot.slane %v1351, 2
        %v1353 = vadd.f32 %v1351, %v1352
        %v1354 = vrot.slane %v1353, 1
        %v1355 = vadd.f32 %v1353, %v1354
        %1356 = vst [vmem:[%s262 + $0x61] sm:$0x1] %v1355
        %vm1357 = vcmp.ge.f32.partialorder %v349, 0.24040993
        %vm1358 = vcmp.ge.f32.partialorder %v350, 0.24040993
        %vm1359 = vcmp.ge.f32.partialorder %v351, 0.24040993
        %vm1360 = vcmp.ge.f32.partialorder %v352, 0.24040993
        %v1361 = vsel %vm1357, 1.0, 0.0
        %v1362 = vsel %vm1358, 1.0, 0.0
        %v1363 = vsel %vm1359, 1.0, 0.0
        %v1364 = vsel %vm1360, 1.0, 0.0
        %v1365 = vadd.f32 %v1361, %v1362
        %v1366 = vadd.f32 %v1365, %v1363
        %v1367 = vadd.f32 %v1366, %v1364
        %v1368 = vrot.slane %v1367, 4
        %v1369 = vadd.f32 %v1367, %v1368
        %v1370 = vrot.slane %v1369, 2
        %v1371 = vadd.f32 %v1369, %v1370
        %v1372 = vrot.slane %v1371, 1
        %v1373 = vadd.f32 %v1371, %v1372
        %1374 = vst [vmem:[%s262 + $0x22] sm:$0x1] %v1373
        %v1375 = vsel %vm1357, %v349, 0.0
        %v1376 = vsel %vm1358, %v350, 0.0
        %v1377 = vsel %vm1359, %v351, 0.0
        %v1378 = vsel %vm1360, %v352, 0.0
        %v1379 = vadd.f32 %v1375, %v1376
        %v1380 = vadd.f32 %v1379, %v1377
        %v1381 = vadd.f32 %v1380, %v1378
        %v1382 = vrot.slane %v1381, 4
        %v1383 = vadd.f32 %v1381, %v1382
        %v1384 = vrot.slane %v1383, 2
        %v1385 = vadd.f32 %v1383, %v1384
        %v1386 = vrot.slane %v1385, 1
        %v1387 = vadd.f32 %v1385, %v1386
        %1388 = vst [vmem:[%s262 + $0x62] sm:$0x1] %v1387
        %vm1389 = vcmp.ge.f32.partialorder %v349, 0.28861403
        %vm1390 = vcmp.ge.f32.partialorder %v350, 0.28861403
        %vm1391 = vcmp.ge.f32.partialorder %v351, 0.28861403
        %vm1392 = vcmp.ge.f32.partialorder %v352, 0.28861403
        %v1393 = vsel %vm1389, 1.0, 0.0
        %v1394 = vsel %vm1390, 1.0, 0.0
        %v1395 = vsel %vm1391, 1.0, 0.0
        %v1396 = vsel %vm1392, 1.0, 0.0
        %v1397 = vadd.f32 %v1393, %v1394
        %v1398 = vadd.f32 %v1397, %v1395
        %v1399 = vadd.f32 %v1398, %v1396
        %v1400 = vrot.slane %v1399, 4
        %v1401 = vadd.f32 %v1399, %v1400
        %v1402 = vrot.slane %v1401, 2
        %v1403 = vadd.f32 %v1401, %v1402
        %v1404 = vrot.slane %v1403, 1
        %v1405 = vadd.f32 %v1403, %v1404
        %1406 = vst [vmem:[%s262 + $0x23] sm:$0x1] %v1405
        %v1407 = vsel %vm1389, %v349, 0.0
        %v1408 = vsel %vm1390, %v350, 0.0
        %v1409 = vsel %vm1391, %v351, 0.0
        %v1410 = vsel %vm1392, %v352, 0.0
        %v1411 = vadd.f32 %v1407, %v1408
        %v1412 = vadd.f32 %v1411, %v1409
        %v1413 = vadd.f32 %v1412, %v1410
        %v1414 = vrot.slane %v1413, 4
        %v1415 = vadd.f32 %v1413, %v1414
        %v1416 = vrot.slane %v1415, 2
        %v1417 = vadd.f32 %v1415, %v1416
        %v1418 = vrot.slane %v1417, 1
        %v1419 = vadd.f32 %v1417, %v1418
        %1420 = vst [vmem:[%s262 + $0x63] sm:$0x1] %v1419
        %vm1421 = vcmp.ge.f32.partialorder %v349, 0.3464835
        %vm1422 = vcmp.ge.f32.partialorder %v350, 0.3464835
        %vm1423 = vcmp.ge.f32.partialorder %v351, 0.3464835
        %vm1424 = vcmp.ge.f32.partialorder %v352, 0.3464835
        %v1425 = vsel %vm1421, 1.0, 0.0
        %v1426 = vsel %vm1422, 1.0, 0.0
        %v1427 = vsel %vm1423, 1.0, 0.0
        %v1428 = vsel %vm1424, 1.0, 0.0
        %v1429 = vadd.f32 %v1425, %v1426
        %v1430 = vadd.f32 %v1429, %v1427
        %v1431 = vadd.f32 %v1430, %v1428
        %v1432 = vrot.slane %v1431, 4
        %v1433 = vadd.f32 %v1431, %v1432
        %v1434 = vrot.slane %v1433, 2
        %v1435 = vadd.f32 %v1433, %v1434
        %v1436 = vrot.slane %v1435, 1
        %v1437 = vadd.f32 %v1435, %v1436
        %1438 = vst [vmem:[%s262 + $0x24] sm:$0x1] %v1437
        %v1439 = vsel %vm1421, %v349, 0.0
        %v1440 = vsel %vm1422, %v350, 0.0
        %v1441 = vsel %vm1423, %v351, 0.0
        %v1442 = vsel %vm1424, %v352, 0.0
        %v1443 = vadd.f32 %v1439, %v1440
        %v1444 = vadd.f32 %v1443, %v1441
        %v1445 = vadd.f32 %v1444, %v1442
        %v1446 = vrot.slane %v1445, 4
        %v1447 = vadd.f32 %v1445, %v1446
        %v1448 = vrot.slane %v1447, 2
        %v1449 = vadd.f32 %v1447, %v1448
        %v1450 = vrot.slane %v1449, 1
        %v1451 = vadd.f32 %v1449, %v1450
        %1452 = vst [vmem:[%s262 + $0x64] sm:$0x1] %v1451
        %vm1453 = vcmp.ge.f32.partialorder %v349, 0.41595623
        %vm1454 = vcmp.ge.f32.partialorder %v350, 0.41595623
        %vm1455 = vcmp.ge.f32.partialorder %v351, 0.41595623
        %vm1456 = vcmp.ge.f32.partialorder %v352, 0.41595623
        %v1457 = vsel %vm1453, 1.0, 0.0
        %v1458 = vsel %vm1454, 1.0, 0.0
        %v1459 = vsel %vm1455, 1.0, 0.0
        %v1460 = vsel %vm1456, 1.0, 0.0
        %v1461 = vadd.f32 %v1457, %v1458
        %v1462 = vadd.f32 %v1461, %v1459
        %v1463 = vadd.f32 %v1462, %v1460
        %v1464 = vrot.slane %v1463, 4
        %v1465 = vadd.f32 %v1463, %v1464
        %v1466 = vrot.slane %v1465, 2
        %v1467 = vadd.f32 %v1465, %v1466
        %v1468 = vrot.slane %v1467, 1
        %v1469 = vadd.f32 %v1467, %v1468
        %1470 = vst [vmem:[%s262 + $0x25] sm:$0x1] %v1469
        %v1471 = vsel %vm1453, %v349, 0.0
        %v1472 = vsel %vm1454, %v350, 0.0
        %v1473 = vsel %vm1455, %v351, 0.0
        %v1474 = vsel %vm1456, %v352, 0.0
        %v1475 = vadd.f32 %v1471, %v1472
        %v1476 = vadd.f32 %v1475, %v1473
        %v1477 = vadd.f32 %v1476, %v1474
        %v1478 = vrot.slane %v1477, 4
        %v1479 = vadd.f32 %v1477, %v1478
        %v1480 = vrot.slane %v1479, 2
        %v1481 = vadd.f32 %v1479, %v1480
        %v1482 = vrot.slane %v1481, 1
        %v1483 = vadd.f32 %v1481, %v1482
        %1484 = vst [vmem:[%s262 + $0x65] sm:$0x1] %v1483
        %vm1485 = vcmp.ge.f32.partialorder %v349, 0.4993588
        %vm1486 = vcmp.ge.f32.partialorder %v350, 0.4993588
        %vm1487 = vcmp.ge.f32.partialorder %v351, 0.4993588
        %vm1488 = vcmp.ge.f32.partialorder %v352, 0.4993588
        %v1489 = vsel %vm1485, 1.0, 0.0
        %v1490 = vsel %vm1486, 1.0, 0.0
        %v1491 = vsel %vm1487, 1.0, 0.0
        %v1492 = vsel %vm1488, 1.0, 0.0
        %v1493 = vadd.f32 %v1489, %v1490
        %v1494 = vadd.f32 %v1493, %v1491
        %v1495 = vadd.f32 %v1494, %v1492
        %v1496 = vrot.slane %v1495, 4
        %v1497 = vadd.f32 %v1495, %v1496
        %v1498 = vrot.slane %v1497, 2
        %v1499 = vadd.f32 %v1497, %v1498
        %v1500 = vrot.slane %v1499, 1
        %v1501 = vadd.f32 %v1499, %v1500
        %1502 = vst [vmem:[%s262 + $0x26] sm:$0x1] %v1501
        %v1503 = vsel %vm1485, %v349, 0.0
        %v1504 = vsel %vm1486, %v350, 0.0
        %v1505 = vsel %vm1487, %v351, 0.0
        %v1506 = vsel %vm1488, %v352, 0.0
        %v1507 = vadd.f32 %v1503, %v1504
        %v1508 = vadd.f32 %v1507, %v1505
        %v1509 = vadd.f32 %v1508, %v1506
        %v1510 = vrot.slane %v1509, 4
        %v1511 = vadd.f32 %v1509, %v1510
        %v1512 = vrot.slane %v1511, 2
        %v1513 = vadd.f32 %v1511, %v1512
        %v1514 = vrot.slane %v1513, 1
        %v1515 = vadd.f32 %v1513, %v1514
        %1516 = vst [vmem:[%s262 + $0x66] sm:$0x1] %v1515
        %vm1517 = vcmp.ge.f32.partialorder %v349, 0.59948426
        %vm1518 = vcmp.ge.f32.partialorder %v350, 0.59948426
        %vm1519 = vcmp.ge.f32.partialorder %v351, 0.59948426
        %vm1520 = vcmp.ge.f32.partialorder %v352, 0.59948426
        %v1521 = vsel %vm1517, 1.0, 0.0
        %v1522 = vsel %vm1518, 1.0, 0.0
        %v1523 = vsel %vm1519, 1.0, 0.0
        %v1524 = vsel %vm1520, 1.0, 0.0
        %v1525 = vadd.f32 %v1521, %v1522
        %v1526 = vadd.f32 %v1525, %v1523
        %v1527 = vadd.f32 %v1526, %v1524
        %v1528 = vrot.slane %v1527, 4
        %v1529 = vadd.f32 %v1527, %v1528
        %v1530 = vrot.slane %v1529, 2
        %v1531 = vadd.f32 %v1529, %v1530
        %v1532 = vrot.slane %v1531, 1
        %v1533 = vadd.f32 %v1531, %v1532
        %1534 = vst [vmem:[%s262 + $0x27] sm:$0x1] %v1533
        %v1535 = vsel %vm1517, %v349, 0.0
        %v1536 = vsel %vm1518, %v350, 0.0
        %v1537 = vsel %vm1519, %v351, 0.0
        %v1538 = vsel %vm1520, %v352, 0.0
        %v1539 = vadd.f32 %v1535, %v1536
        %v1540 = vadd.f32 %v1539, %v1537
        %v1541 = vadd.f32 %v1540, %v1538
        %v1542 = vrot.slane %v1541, 4
        %v1543 = vadd.f32 %v1541, %v1542
        %v1544 = vrot.slane %v1543, 2
        %v1545 = vadd.f32 %v1543, %v1544
        %v1546 = vrot.slane %v1545, 1
        %v1547 = vadd.f32 %v1545, %v1546
        %1548 = vst [vmem:[%s262 + $0x67] sm:$0x1] %v1547
        %vm1549 = vcmp.ge.f32.partialorder %v349, 0.7196857
        %vm1550 = vcmp.ge.f32.partialorder %v350, 0.7196857
        %vm1551 = vcmp.ge.f32.partialorder %v351, 0.7196857
        %vm1552 = vcmp.ge.f32.partialorder %v352, 0.7196857
        %v1553 = vsel %vm1549, 1.0, 0.0
        %v1554 = vsel %vm1550, 1.0, 0.0
        %v1555 = vsel %vm1551, 1.0, 0.0
        %v1556 = vsel %vm1552, 1.0, 0.0
        %v1557 = vadd.f32 %v1553, %v1554
        %v1558 = vadd.f32 %v1557, %v1555
        %v1559 = vadd.f32 %v1558, %v1556
        %v1560 = vrot.slane %v1559, 4
        %v1561 = vadd.f32 %v1559, %v1560
        %v1562 = vrot.slane %v1561, 2
        %v1563 = vadd.f32 %v1561, %v1562
        %v1564 = vrot.slane %v1563, 1
        %v1565 = vadd.f32 %v1563, %v1564
        %1566 = vst [vmem:[%s262 + $0x28] sm:$0x1] %v1565
        %v1567 = vsel %vm1549, %v349, 0.0
        %v1568 = vsel %vm1550, %v350, 0.0
        %v1569 = vsel %vm1551, %v351, 0.0
        %v1570 = vsel %vm1552, %v352, 0.0
        %v1571 = vadd.f32 %v1567, %v1568
        %v1572 = vadd.f32 %v1571, %v1569
        %v1573 = vadd.f32 %v1572, %v1570
        %v1574 = vrot.slane %v1573, 4
        %v1575 = vadd.f32 %v1573, %v1574
        %v1576 = vrot.slane %v1575, 2
        %v1577 = vadd.f32 %v1575, %v1576
        %v1578 = vrot.slane %v1577, 1
        %v1579 = vadd.f32 %v1577, %v1578
        %1580 = vst [vmem:[%s262 + $0x68] sm:$0x1] %v1579
        %vm1581 = vcmp.ge.f32.partialorder %v349, 0.86398846
        %vm1582 = vcmp.ge.f32.partialorder %v350, 0.86398846
        %vm1583 = vcmp.ge.f32.partialorder %v351, 0.86398846
        %vm1584 = vcmp.ge.f32.partialorder %v352, 0.86398846
        %v1585 = vsel %vm1581, 1.0, 0.0
        %v1586 = vsel %vm1582, 1.0, 0.0
        %v1587 = vsel %vm1583, 1.0, 0.0
        %v1588 = vsel %vm1584, 1.0, 0.0
        %v1589 = vadd.f32 %v1585, %v1586
        %v1590 = vadd.f32 %v1589, %v1587
        %v1591 = vadd.f32 %v1590, %v1588
        %v1592 = vrot.slane %v1591, 4
        %v1593 = vadd.f32 %v1591, %v1592
        %v1594 = vrot.slane %v1593, 2
        %v1595 = vadd.f32 %v1593, %v1594
        %v1596 = vrot.slane %v1595, 1
        %v1597 = vadd.f32 %v1595, %v1596
        %1598 = vst [vmem:[%s262 + $0x29] sm:$0x1] %v1597
        %v1599 = vsel %vm1581, %v349, 0.0
        %v1600 = vsel %vm1582, %v350, 0.0
        %v1601 = vsel %vm1583, %v351, 0.0
        %v1602 = vsel %vm1584, %v352, 0.0
        %v1603 = vadd.f32 %v1599, %v1600
        %v1604 = vadd.f32 %v1603, %v1601
        %v1605 = vadd.f32 %v1604, %v1602
        %v1606 = vrot.slane %v1605, 4
        %v1607 = vadd.f32 %v1605, %v1606
        %v1608 = vrot.slane %v1607, 2
        %v1609 = vadd.f32 %v1607, %v1608
        %v1610 = vrot.slane %v1609, 1
        %v1611 = vadd.f32 %v1609, %v1610
        %1612 = vst [vmem:[%s262 + $0x69] sm:$0x1] %v1611
        %vm1613 = vcmp.ge.f32.partialorder %v349, 1.0372251
        %vm1614 = vcmp.ge.f32.partialorder %v350, 1.0372251
        %vm1615 = vcmp.ge.f32.partialorder %v351, 1.0372251
        %vm1616 = vcmp.ge.f32.partialorder %v352, 1.0372251
        %v1617 = vsel %vm1613, 1.0, 0.0
        %v1618 = vsel %vm1614, 1.0, 0.0
        %v1619 = vsel %vm1615, 1.0, 0.0
        %v1620 = vsel %vm1616, 1.0, 0.0
        %v1621 = vadd.f32 %v1617, %v1618
        %v1622 = vadd.f32 %v1621, %v1619
        %v1623 = vadd.f32 %v1622, %v1620
        %v1624 = vrot.slane %v1623, 4
        %v1625 = vadd.f32 %v1623, %v1624
        %v1626 = vrot.slane %v1625, 2
        %v1627 = vadd.f32 %v1625, %v1626
        %v1628 = vrot.slane %v1627, 1
        %v1629 = vadd.f32 %v1627, %v1628
        %1630 = vst [vmem:[%s262 + $0x2a] sm:$0x1] %v1629
        %v1631 = vsel %vm1613, %v349, 0.0
        %v1632 = vsel %vm1614, %v350, 0.0
        %v1633 = vsel %vm1615, %v351, 0.0
        %v1634 = vsel %vm1616, %v352, 0.0
        %v1635 = vadd.f32 %v1631, %v1632
        %v1636 = vadd.f32 %v1635, %v1633
        %v1637 = vadd.f32 %v1636, %v1634
        %v1638 = vrot.slane %v1637, 4
        %v1639 = vadd.f32 %v1637, %v1638
        %v1640 = vrot.slane %v1639, 2
        %v1641 = vadd.f32 %v1639, %v1640
        %v1642 = vrot.slane %v1641, 1
        %v1643 = vadd.f32 %v1641, %v1642
        %1644 = vst [vmem:[%s262 + $0x6a] sm:$0x1] %v1643
        %vm1645 = vcmp.ge.f32.partialorder %v349, 1.245197
        %vm1646 = vcmp.ge.f32.partialorder %v350, 1.245197
        %vm1647 = vcmp.ge.f32.partialorder %v351, 1.245197
        %vm1648 = vcmp.ge.f32.partialorder %v352, 1.245197
        %v1649 = vsel %vm1645, 1.0, 0.0
        %v1650 = vsel %vm1646, 1.0, 0.0
        %v1651 = vsel %vm1647, 1.0, 0.0
        %v1652 = vsel %vm1648, 1.0, 0.0
        %v1653 = vadd.f32 %v1649, %v1650
        %v1654 = vadd.f32 %v1653, %v1651
        %v1655 = vadd.f32 %v1654, %v1652
        %v1656 = vrot.slane %v1655, 4
        %v1657 = vadd.f32 %v1655, %v1656
        %v1658 = vrot.slane %v1657, 2
        %v1659 = vadd.f32 %v1657, %v1658
        %v1660 = vrot.slane %v1659, 1
        %v1661 = vadd.f32 %v1659, %v1660
        %1662 = vst [vmem:[%s262 + $0x2b] sm:$0x1] %v1661
        %v1663 = vsel %vm1645, %v349, 0.0
        %v1664 = vsel %vm1646, %v350, 0.0
        %v1665 = vsel %vm1647, %v351, 0.0
        %v1666 = vsel %vm1648, %v352, 0.0
        %v1667 = vadd.f32 %v1663, %v1664
        %v1668 = vadd.f32 %v1667, %v1665
        %v1669 = vadd.f32 %v1668, %v1666
        %v1670 = vrot.slane %v1669, 4
        %v1671 = vadd.f32 %v1669, %v1670
        %v1672 = vrot.slane %v1671, 2
        %v1673 = vadd.f32 %v1671, %v1672
        %v1674 = vrot.slane %v1673, 1
        %v1675 = vadd.f32 %v1673, %v1674
        %1676 = vst [vmem:[%s262 + $0x6b] sm:$0x1] %v1675
        %vm1677 = vcmp.ge.f32.partialorder %v349, 1.4948691
        %vm1678 = vcmp.ge.f32.partialorder %v350, 1.4948691
        %vm1679 = vcmp.ge.f32.partialorder %v351, 1.4948691
        %vm1680 = vcmp.ge.f32.partialorder %v352, 1.4948691
        %v1681 = vsel %vm1677, 1.0, 0.0
        %v1682 = vsel %vm1678, 1.0, 0.0
        %v1683 = vsel %vm1679, 1.0, 0.0
        %v1684 = vsel %vm1680, 1.0, 0.0
        %v1685 = vadd.f32 %v1681, %v1682
        %v1686 = vadd.f32 %v1685, %v1683
        %v1687 = vadd.f32 %v1686, %v1684
        %v1688 = vrot.slane %v1687, 4
        %v1689 = vadd.f32 %v1687, %v1688
        %v1690 = vrot.slane %v1689, 2
        %v1691 = vadd.f32 %v1689, %v1690
        %v1692 = vrot.slane %v1691, 1
        %v1693 = vadd.f32 %v1691, %v1692
        %1694 = vst [vmem:[%s262 + $0x2c] sm:$0x1] %v1693
        %v1695 = vsel %vm1677, %v349, 0.0
        %v1696 = vsel %vm1678, %v350, 0.0
        %v1697 = vsel %vm1679, %v351, 0.0
        %v1698 = vsel %vm1680, %v352, 0.0
        %v1699 = vadd.f32 %v1695, %v1696
        %v1700 = vadd.f32 %v1699, %v1697
        %v1701 = vadd.f32 %v1700, %v1698
        %v1702 = vrot.slane %v1701, 4
        %v1703 = vadd.f32 %v1701, %v1702
        %v1704 = vrot.slane %v1703, 2
        %v1705 = vadd.f32 %v1703, %v1704
        %v1706 = vrot.slane %v1705, 1
        %v1707 = vadd.f32 %v1705, %v1706
        %1708 = vst [vmem:[%s262 + $0x6c] sm:$0x1] %v1707
        %vm1709 = vcmp.ge.f32.partialorder %v349, 1.7946024
        %vm1710 = vcmp.ge.f32.partialorder %v350, 1.7946024
        %vm1711 = vcmp.ge.f32.partialorder %v351, 1.7946024
        %vm1712 = vcmp.ge.f32.partialorder %v352, 1.7946024
        %v1713 = vsel %vm1709, 1.0, 0.0
        %v1714 = vsel %vm1710, 1.0, 0.0
        %v1715 = vsel %vm1711, 1.0, 0.0
        %v1716 = vsel %vm1712, 1.0, 0.0
        %v1717 = vadd.f32 %v1713, %v1714
        %v1718 = vadd.f32 %v1717, %v1715
        %v1719 = vadd.f32 %v1718, %v1716
        %v1720 = vrot.slane %v1719, 4
        %v1721 = vadd.f32 %v1719, %v1720
        %v1722 = vrot.slane %v1721, 2
        %v1723 = vadd.f32 %v1721, %v1722
        %v1724 = vrot.slane %v1723, 1
        %v1725 = vadd.f32 %v1723, %v1724
        %1726 = vst [vmem:[%s262 + $0x2d] sm:$0x1] %v1725
        %v1727 = vsel %vm1709, %v349, 0.0
        %v1728 = vsel %vm1710, %v350, 0.0
        %v1729 = vsel %vm1711, %v351, 0.0
        %v1730 = vsel %vm1712, %v352, 0.0
        %v1731 = vadd.f32 %v1727, %v1728
        %v1732 = vadd.f32 %v1731, %v1729
        %v1733 = vadd.f32 %v1732, %v1730
        %v1734 = vrot.slane %v1733, 4
        %v1735 = vadd.f32 %v1733, %v1734
        %v1736 = vrot.slane %v1735, 2
        %v1737 = vadd.f32 %v1735, %v1736
        %v1738 = vrot.slane %v1737, 1
        %v1739 = vadd.f32 %v1737, %v1738
        %1740 = vst [vmem:[%s262 + $0x6d] sm:$0x1] %v1739
        %vm1741 = vcmp.ge.f32.partialorder %v349, 2.1544347
        %vm1742 = vcmp.ge.f32.partialorder %v350, 2.1544347
        %vm1743 = vcmp.ge.f32.partialorder %v351, 2.1544347
        %vm1744 = vcmp.ge.f32.partialorder %v352, 2.1544347
        %v1745 = vsel %vm1741, 1.0, 0.0
        %v1746 = vsel %vm1742, 1.0, 0.0
        %v1747 = vsel %vm1743, 1.0, 0.0
        %v1748 = vsel %vm1744, 1.0, 0.0
        %v1749 = vadd.f32 %v1745, %v1746
        %v1750 = vadd.f32 %v1749, %v1747
        %v1751 = vadd.f32 %v1750, %v1748
        %v1752 = vrot.slane %v1751, 4
        %v1753 = vadd.f32 %v1751, %v1752
        %v1754 = vrot.slane %v1753, 2
        %v1755 = vadd.f32 %v1753, %v1754
        %v1756 = vrot.slane %v1755, 1
        %v1757 = vadd.f32 %v1755, %v1756
        %1758 = vst [vmem:[%s262 + $0x2e] sm:$0x1] %v1757
        %v1759 = vsel %vm1741, %v349, 0.0
        %v1760 = vsel %vm1742, %v350, 0.0
        %v1761 = vsel %vm1743, %v351, 0.0
        %v1762 = vsel %vm1744, %v352, 0.0
        %v1763 = vadd.f32 %v1759, %v1760
        %v1764 = vadd.f32 %v1763, %v1761
        %v1765 = vadd.f32 %v1764, %v1762
        %v1766 = vrot.slane %v1765, 4
        %v1767 = vadd.f32 %v1765, %v1766
        %v1768 = vrot.slane %v1767, 2
        %v1769 = vadd.f32 %v1767, %v1768
        %v1770 = vrot.slane %v1769, 1
        %v1771 = vadd.f32 %v1769, %v1770
        %1772 = vst [vmem:[%s262 + $0x6e] sm:$0x1] %v1771
        %vm1773 = vcmp.ge.f32.partialorder %v349, 2.5864162
        %vm1774 = vcmp.ge.f32.partialorder %v350, 2.5864162
        %vm1775 = vcmp.ge.f32.partialorder %v351, 2.5864162
        %vm1776 = vcmp.ge.f32.partialorder %v352, 2.5864162
        %v1777 = vsel %vm1773, 1.0, 0.0
        %v1778 = vsel %vm1774, 1.0, 0.0
        %v1779 = vsel %vm1775, 1.0, 0.0
        %v1780 = vsel %vm1776, 1.0, 0.0
        %v1781 = vadd.f32 %v1777, %v1778
        %v1782 = vadd.f32 %v1781, %v1779
        %v1783 = vadd.f32 %v1782, %v1780
        %v1784 = vrot.slane %v1783, 4
        %v1785 = vadd.f32 %v1783, %v1784
        %v1786 = vrot.slane %v1785, 2
        %v1787 = vadd.f32 %v1785, %v1786
        %v1788 = vrot.slane %v1787, 1
        %v1789 = vadd.f32 %v1787, %v1788
        %1790 = vst [vmem:[%s262 + $0x2f] sm:$0x1] %v1789
        %v1791 = vsel %vm1773, %v349, 0.0
        %v1792 = vsel %vm1774, %v350, 0.0
        %v1793 = vsel %vm1775, %v351, 0.0
        %v1794 = vsel %vm1776, %v352, 0.0
        %v1795 = vadd.f32 %v1791, %v1792
        %v1796 = vadd.f32 %v1795, %v1793
        %v1797 = vadd.f32 %v1796, %v1794
        %v1798 = vrot.slane %v1797, 4
        %v1799 = vadd.f32 %v1797, %v1798
        %v1800 = vrot.slane %v1799, 2
        %v1801 = vadd.f32 %v1799, %v1800
        %v1802 = vrot.slane %v1801, 1
        %v1803 = vadd.f32 %v1801, %v1802
        %1804 = vst [vmem:[%s262 + $0x6f] sm:$0x1] %v1803
        %vm1805 = vcmp.ge.f32.partialorder %v349, 3.1050136
        %vm1806 = vcmp.ge.f32.partialorder %v350, 3.1050136
        %vm1807 = vcmp.ge.f32.partialorder %v351, 3.1050136
        %vm1808 = vcmp.ge.f32.partialorder %v352, 3.1050136
        %v1809 = vsel %vm1805, 1.0, 0.0
        %v1810 = vsel %vm1806, 1.0, 0.0
        %v1811 = vsel %vm1807, 1.0, 0.0
        %v1812 = vsel %vm1808, 1.0, 0.0
        %v1813 = vadd.f32 %v1809, %v1810
        %v1814 = vadd.f32 %v1813, %v1811
        %v1815 = vadd.f32 %v1814, %v1812
        %v1816 = vrot.slane %v1815, 4
        %v1817 = vadd.f32 %v1815, %v1816
        %v1818 = vrot.slane %v1817, 2
        %v1819 = vadd.f32 %v1817, %v1818
        %v1820 = vrot.slane %v1819, 1
        %v1821 = vadd.f32 %v1819, %v1820
        %1822 = vst [vmem:[%s262 + $0x30] sm:$0x1] %v1821
        %v1823 = vsel %vm1805, %v349, 0.0
        %v1824 = vsel %vm1806, %v350, 0.0
        %v1825 = vsel %vm1807, %v351, 0.0
        %v1826 = vsel %vm1808, %v352, 0.0
        %v1827 = vadd.f32 %v1823, %v1824
        %v1828 = vadd.f32 %v1827, %v1825
        %v1829 = vadd.f32 %v1828, %v1826
        %v1830 = vrot.slane %v1829, 4
        %v1831 = vadd.f32 %v1829, %v1830
        %v1832 = vrot.slane %v1831, 2
        %v1833 = vadd.f32 %v1831, %v1832
        %v1834 = vrot.slane %v1833, 1
        %v1835 = vadd.f32 %v1833, %v1834
        %1836 = vst [vmem:[%s262 + $0x70] sm:$0x1] %v1835
        %vm1837 = vcmp.ge.f32.partialorder %v349, 3.7275937
        %vm1838 = vcmp.ge.f32.partialorder %v350, 3.7275937
        %vm1839 = vcmp.ge.f32.partialorder %v351, 3.7275937
        %vm1840 = vcmp.ge.f32.partialorder %v352, 3.7275937
        %v1841 = vsel %vm1837, 1.0, 0.0
        %v1842 = vsel %vm1838, 1.0, 0.0
        %v1843 = vsel %vm1839, 1.0, 0.0
        %v1844 = vsel %vm1840, 1.0, 0.0
        %v1845 = vadd.f32 %v1841, %v1842
        %v1846 = vadd.f32 %v1845, %v1843
        %v1847 = vadd.f32 %v1846, %v1844
        %v1848 = vrot.slane %v1847, 4
        %v1849 = vadd.f32 %v1847, %v1848
        %v1850 = vrot.slane %v1849, 2
        %v1851 = vadd.f32 %v1849, %v1850
        %v1852 = vrot.slane %v1851, 1
        %v1853 = vadd.f32 %v1851, %v1852
        %1854 = vst [vmem:[%s262 + $0x31] sm:$0x1] %v1853
        %v1855 = vsel %vm1837, %v349, 0.0
        %v1856 = vsel %vm1838, %v350, 0.0
        %v1857 = vsel %vm1839, %v351, 0.0
        %v1858 = vsel %vm1840, %v352, 0.0
        %v1859 = vadd.f32 %v1855, %v1856
        %v1860 = vadd.f32 %v1859, %v1857
        %v1861 = vadd.f32 %v1860, %v1858
        %v1862 = vrot.slane %v1861, 4
        %v1863 = vadd.f32 %v1861, %v1862
        %v1864 = vrot.slane %v1863, 2
        %v1865 = vadd.f32 %v1863, %v1864
        %v1866 = vrot.slane %v1865, 1
        %v1867 = vadd.f32 %v1865, %v1866
        %1868 = vst [vmem:[%s262 + $0x71] sm:$0x1] %v1867
        %vm1869 = vcmp.ge.f32.partialorder %v349, 4.475006
        %vm1870 = vcmp.ge.f32.partialorder %v350, 4.475006
        %vm1871 = vcmp.ge.f32.partialorder %v351, 4.475006
        %vm1872 = vcmp.ge.f32.partialorder %v352, 4.475006
        %v1873 = vsel %vm1869, 1.0, 0.0
        %v1874 = vsel %vm1870, 1.0, 0.0
        %v1875 = vsel %vm1871, 1.0, 0.0
        %v1876 = vsel %vm1872, 1.0, 0.0
        %v1877 = vadd.f32 %v1873, %v1874
        %v1878 = vadd.f32 %v1877, %v1875
        %v1879 = vadd.f32 %v1878, %v1876
        %v1880 = vrot.slane %v1879, 4
        %v1881 = vadd.f32 %v1879, %v1880
        %v1882 = vrot.slane %v1881, 2
        %v1883 = vadd.f32 %v1881, %v1882
        %v1884 = vrot.slane %v1883, 1
        %v1885 = vadd.f32 %v1883, %v1884
        %1886 = vst [vmem:[%s262 + $0x32] sm:$0x1] %v1885
        %v1887 = vsel %vm1869, %v349, 0.0
        %v1888 = vsel %vm1870, %v350, 0.0
        %v1889 = vsel %vm1871, %v351, 0.0
        %v1890 = vsel %vm1872, %v352, 0.0
        %v1891 = vadd.f32 %v1887, %v1888
        %v1892 = vadd.f32 %v1891, %v1889
        %v1893 = vadd.f32 %v1892, %v1890
        %v1894 = vrot.slane %v1893, 4
        %v1895 = vadd.f32 %v1893, %v1894
        %v1896 = vrot.slane %v1895, 2
        %v1897 = vadd.f32 %v1895, %v1896
        %v1898 = vrot.slane %v1897, 1
        %v1899 = vadd.f32 %v1897, %v1898
        %1900 = vst [vmem:[%s262 + $0x72] sm:$0x1] %v1899
        %vm1901 = vcmp.ge.f32.partialorder %v349, 5.372281
        %vm1902 = vcmp.ge.f32.partialorder %v350, 5.372281
        %vm1903 = vcmp.ge.f32.partialorder %v351, 5.372281
        %vm1904 = vcmp.ge.f32.partialorder %v352, 5.372281
        %v1905 = vsel %vm1901, 1.0, 0.0
        %v1906 = vsel %vm1902, 1.0, 0.0
        %v1907 = vsel %vm1903, 1.0, 0.0
        %v1908 = vsel %vm1904, 1.0, 0.0
        %v1909 = vadd.f32 %v1905, %v1906
        %v1910 = vadd.f32 %v1909, %v1907
        %v1911 = vadd.f32 %v1910, %v1908
        %v1912 = vrot.slane %v1911, 4
        %v1913 = vadd.f32 %v1911, %v1912
        %v1914 = vrot.slane %v1913, 2
        %v1915 = vadd.f32 %v1913, %v1914
        %v1916 = vrot.slane %v1915, 1
        %v1917 = vadd.f32 %v1915, %v1916
        %1918 = vst [vmem:[%s262 + $0x33] sm:$0x1] %v1917
        %v1919 = vsel %vm1901, %v349, 0.0
        %v1920 = vsel %vm1902, %v350, 0.0
        %v1921 = vsel %vm1903, %v351, 0.0
        %v1922 = vsel %vm1904, %v352, 0.0
        %v1923 = vadd.f32 %v1919, %v1920
        %v1924 = vadd.f32 %v1923, %v1921
        %v1925 = vadd.f32 %v1924, %v1922
        %v1926 = vrot.slane %v1925, 4
        %v1927 = vadd.f32 %v1925, %v1926
        %v1928 = vrot.slane %v1927, 2
        %v1929 = vadd.f32 %v1927, %v1928
        %v1930 = vrot.slane %v1929, 1
        %v1931 = vadd.f32 %v1929, %v1930
        %1932 = vst [vmem:[%s262 + $0x73] sm:$0x1] %v1931
        %vm1933 = vcmp.ge.f32.partialorder %v349, 6.4494667
        %vm1934 = vcmp.ge.f32.partialorder %v350, 6.4494667
        %vm1935 = vcmp.ge.f32.partialorder %v351, 6.4494667
        %vm1936 = vcmp.ge.f32.partialorder %v352, 6.4494667
        %v1937 = vsel %vm1933, 1.0, 0.0
        %v1938 = vsel %vm1934, 1.0, 0.0
        %v1939 = vsel %vm1935, 1.0, 0.0
        %v1940 = vsel %vm1936, 1.0, 0.0
        %v1941 = vadd.f32 %v1937, %v1938
        %v1942 = vadd.f32 %v1941, %v1939
        %v1943 = vadd.f32 %v1942, %v1940
        %v1944 = vrot.slane %v1943, 4
        %v1945 = vadd.f32 %v1943, %v1944
        %v1946 = vrot.slane %v1945, 2
        %v1947 = vadd.f32 %v1945, %v1946
        %v1948 = vrot.slane %v1947, 1
        %v1949 = vadd.f32 %v1947, %v1948
        %1950 = vst [vmem:[%s262 + $0x34] sm:$0x1] %v1949
        %v1951 = vsel %vm1933, %v349, 0.0
        %v1952 = vsel %vm1934, %v350, 0.0
        %v1953 = vsel %vm1935, %v351, 0.0
        %v1954 = vsel %vm1936, %v352, 0.0
        %v1955 = vadd.f32 %v1951, %v1952
        %v1956 = vadd.f32 %v1955, %v1953
        %v1957 = vadd.f32 %v1956, %v1954
        %v1958 = vrot.slane %v1957, 4
        %v1959 = vadd.f32 %v1957, %v1958
        %v1960 = vrot.slane %v1959, 2
        %v1961 = vadd.f32 %v1959, %v1960
        %v1962 = vrot.slane %v1961, 1
        %v1963 = vadd.f32 %v1961, %v1962
        %1964 = vst [vmem:[%s262 + $0x74] sm:$0x1] %v1963
        %vm1965 = vcmp.ge.f32.partialorder %v349, 7.7426367
        %vm1966 = vcmp.ge.f32.partialorder %v350, 7.7426367
        %vm1967 = vcmp.ge.f32.partialorder %v351, 7.7426367
        %vm1968 = vcmp.ge.f32.partialorder %v352, 7.7426367
        %v1969 = vsel %vm1965, 1.0, 0.0
        %v1970 = vsel %vm1966, 1.0, 0.0
        %v1971 = vsel %vm1967, 1.0, 0.0
        %v1972 = vsel %vm1968, 1.0, 0.0
        %v1973 = vadd.f32 %v1969, %v1970
        %v1974 = vadd.f32 %v1973, %v1971
        %v1975 = vadd.f32 %v1974, %v1972
        %v1976 = vrot.slane %v1975, 4
        %v1977 = vadd.f32 %v1975, %v1976
        %v1978 = vrot.slane %v1977, 2
        %v1979 = vadd.f32 %v1977, %v1978
        %v1980 = vrot.slane %v1979, 1
        %v1981 = vadd.f32 %v1979, %v1980
        %1982 = vst [vmem:[%s262 + $0x35] sm:$0x1] %v1981
        %v1983 = vsel %vm1965, %v349, 0.0
        %v1984 = vsel %vm1966, %v350, 0.0
        %v1985 = vsel %vm1967, %v351, 0.0
        %v1986 = vsel %vm1968, %v352, 0.0
        %v1987 = vadd.f32 %v1983, %v1984
        %v1988 = vadd.f32 %v1987, %v1985
        %v1989 = vadd.f32 %v1988, %v1986
        %v1990 = vrot.slane %v1989, 4
        %v1991 = vadd.f32 %v1989, %v1990
        %v1992 = vrot.slane %v1991, 2
        %v1993 = vadd.f32 %v1991, %v1992
        %v1994 = vrot.slane %v1993, 1
        %v1995 = vadd.f32 %v1993, %v1994
        %1996 = vst [vmem:[%s262 + $0x75] sm:$0x1] %v1995
        %vm1997 = vcmp.ge.f32.partialorder %v349, 9.295098
        %vm1998 = vcmp.ge.f32.partialorder %v350, 9.295098
        %vm1999 = vcmp.ge.f32.partialorder %v351, 9.295098
        %vm2000 = vcmp.ge.f32.partialorder %v352, 9.295098
        %v2001 = vsel %vm1997, 1.0, 0.0
        %v2002 = vsel %vm1998, 1.0, 0.0
        %v2003 = vsel %vm1999, 1.0, 0.0
        %v2004 = vsel %vm2000, 1.0, 0.0
        %v2005 = vadd.f32 %v2001, %v2002
        %v2006 = vadd.f32 %v2005, %v2003
        %v2007 = vadd.f32 %v2006, %v2004
        %v2008 = vrot.slane %v2007, 4
        %v2009 = vadd.f32 %v2007, %v2008
        %v2010 = vrot.slane %v2009, 2
        %v2011 = vadd.f32 %v2009, %v2010
        %v2012 = vrot.slane %v2011, 1
        %v2013 = vadd.f32 %v2011, %v2012
        %2014 = vst [vmem:[%s262 + $0x36] sm:$0x1] %v2013
        %v2015 = vsel %vm1997, %v349, 0.0
        %v2016 = vsel %vm1998, %v350, 0.0
        %v2017 = vsel %vm1999, %v351, 0.0
        %v2018 = vsel %vm2000, %v352, 0.0
        %v2019 = vadd.f32 %v2015, %v2016
        %v2020 = vadd.f32 %v2019, %v2017
        %v2021 = vadd.f32 %v2020, %v2018
        %v2022 = vrot.slane %v2021, 4
        %v2023 = vadd.f32 %v2021, %v2022
        %v2024 = vrot.slane %v2023, 2
        %v2025 = vadd.f32 %v2023, %v2024
        %v2026 = vrot.slane %v2025, 1
        %v2027 = vadd.f32 %v2025, %v2026
        %2028 = vst [vmem:[%s262 + $0x76] sm:$0x1] %v2027
        %vm2029 = vcmp.ge.f32.partialorder %v349, 11.15884
        %vm2030 = vcmp.ge.f32.partialorder %v350, 11.15884
        %vm2031 = vcmp.ge.f32.partialorder %v351, 11.15884
        %vm2032 = vcmp.ge.f32.partialorder %v352, 11.15884
        %v2033 = vsel %vm2029, 1.0, 0.0
        %v2034 = vsel %vm2030, 1.0, 0.0
        %v2035 = vsel %vm2031, 1.0, 0.0
        %v2036 = vsel %vm2032, 1.0, 0.0
        %v2037 = vadd.f32 %v2033, %v2034
        %v2038 = vadd.f32 %v2037, %v2035
        %v2039 = vadd.f32 %v2038, %v2036
        %v2040 = vrot.slane %v2039, 4
        %v2041 = vadd.f32 %v2039, %v2040
        %v2042 = vrot.slane %v2041, 2
        %v2043 = vadd.f32 %v2041, %v2042
        %v2044 = vrot.slane %v2043, 1
        %v2045 = vadd.f32 %v2043, %v2044
        %2046 = vst [vmem:[%s262 + $0x37] sm:$0x1] %v2045
        %v2047 = vsel %vm2029, %v349, 0.0
        %v2048 = vsel %vm2030, %v350, 0.0
        %v2049 = vsel %vm2031, %v351, 0.0
        %v2050 = vsel %vm2032, %v352, 0.0
        %v2051 = vadd.f32 %v2047, %v2048
        %v2052 = vadd.f32 %v2051, %v2049
        %v2053 = vadd.f32 %v2052, %v2050
        %v2054 = vrot.slane %v2053, 4
        %v2055 = vadd.f32 %v2053, %v2054
        %v2056 = vrot.slane %v2055, 2
        %v2057 = vadd.f32 %v2055, %v2056
        %v2058 = vrot.slane %v2057, 1
        %v2059 = vadd.f32 %v2057, %v2058
        %2060 = vst [vmem:[%s262 + $0x77] sm:$0x1] %v2059
        %vm2061 = vcmp.ge.f32.partialorder %v349, 13.396277
        %vm2062 = vcmp.ge.f32.partialorder %v350, 13.396277
        %vm2063 = vcmp.ge.f32.partialorder %v351, 13.396277
        %vm2064 = vcmp.ge.f32.partialorder %v352, 13.396277
        %v2065 = vsel %vm2061, 1.0, 0.0
        %v2066 = vsel %vm2062, 1.0, 0.0
        %v2067 = vsel %vm2063, 1.0, 0.0
        %v2068 = vsel %vm2064, 1.0, 0.0
        %v2069 = vadd.f32 %v2065, %v2066
        %v2070 = vadd.f32 %v2069, %v2067
        %v2071 = vadd.f32 %v2070, %v2068
        %v2072 = vrot.slane %v2071, 4
        %v2073 = vadd.f32 %v2071, %v2072
        %v2074 = vrot.slane %v2073, 2
        %v2075 = vadd.f32 %v2073, %v2074
        %v2076 = vrot.slane %v2075, 1
        %v2077 = vadd.f32 %v2075, %v2076
        %2078 = vst [vmem:[%s262 + $0x38] sm:$0x1] %v2077
        %v2079 = vsel %vm2061, %v349, 0.0
        %v2080 = vsel %vm2062, %v350, 0.0
        %v2081 = vsel %vm2063, %v351, 0.0
        %v2082 = vsel %vm2064, %v352, 0.0
        %v2083 = vadd.f32 %v2079, %v2080
        %v2084 = vadd.f32 %v2083, %v2081
        %v2085 = vadd.f32 %v2084, %v2082
        %v2086 = vrot.slane %v2085, 4
        %v2087 = vadd.f32 %v2085, %v2086
        %v2088 = vrot.slane %v2087, 2
        %v2089 = vadd.f32 %v2087, %v2088
        %v2090 = vrot.slane %v2089, 1
        %v2091 = vadd.f32 %v2089, %v2090
        %2092 = vst [vmem:[%s262 + $0x78] sm:$0x1] %v2091
        %vm2093 = vcmp.ge.f32.partialorder %v349, 16.082338
        %vm2094 = vcmp.ge.f32.partialorder %v350, 16.082338
        %vm2095 = vcmp.ge.f32.partialorder %v351, 16.082338
        %vm2096 = vcmp.ge.f32.partialorder %v352, 16.082338
        %v2097 = vsel %vm2093, 1.0, 0.0
        %v2098 = vsel %vm2094, 1.0, 0.0
        %v2099 = vsel %vm2095, 1.0, 0.0
        %v2100 = vsel %vm2096, 1.0, 0.0
        %v2101 = vadd.f32 %v2097, %v2098
        %v2102 = vadd.f32 %v2101, %v2099
        %v2103 = vadd.f32 %v2102, %v2100
        %v2104 = vrot.slane %v2103, 4
        %v2105 = vadd.f32 %v2103, %v2104
        %v2106 = vrot.slane %v2105, 2
        %v2107 = vadd.f32 %v2105, %v2106
        %v2108 = vrot.slane %v2107, 1
        %v2109 = vadd.f32 %v2107, %v2108
        %2110 = vst [vmem:[%s262 + $0x39] sm:$0x1] %v2109
        %v2111 = vsel %vm2093, %v349, 0.0
        %v2112 = vsel %vm2094, %v350, 0.0
        %v2113 = vsel %vm2095, %v351, 0.0
        %v2114 = vsel %vm2096, %v352, 0.0
        %v2115 = vadd.f32 %v2111, %v2112
        %v2116 = vadd.f32 %v2115, %v2113
        %v2117 = vadd.f32 %v2116, %v2114
        %v2118 = vrot.slane %v2117, 4
        %v2119 = vadd.f32 %v2117, %v2118
        %v2120 = vrot.slane %v2119, 2
        %v2121 = vadd.f32 %v2119, %v2120
        %v2122 = vrot.slane %v2121, 1
        %v2123 = vadd.f32 %v2121, %v2122
        %2124 = vst [vmem:[%s262 + $0x79] sm:$0x1] %v2123
        %vm2125 = vcmp.ge.f32.partialorder %v349, 19.306978
        %vm2126 = vcmp.ge.f32.partialorder %v350, 19.306978
        %vm2127 = vcmp.ge.f32.partialorder %v351, 19.306978
        %vm2128 = vcmp.ge.f32.partialorder %v352, 19.306978
        %v2129 = vsel %vm2125, 1.0, 0.0
        %v2130 = vsel %vm2126, 1.0, 0.0
        %v2131 = vsel %vm2127, 1.0, 0.0
        %v2132 = vsel %vm2128, 1.0, 0.0
        %v2133 = vadd.f32 %v2129, %v2130
        %v2134 = vadd.f32 %v2133, %v2131
        %v2135 = vadd.f32 %v2134, %v2132
        %v2136 = vrot.slane %v2135, 4
        %v2137 = vadd.f32 %v2135, %v2136
        %v2138 = vrot.slane %v2137, 2
        %v2139 = vadd.f32 %v2137, %v2138
        %v2140 = vrot.slane %v2139, 1
        %v2141 = vadd.f32 %v2139, %v2140
        %2142 = vst [vmem:[%s262 + $0x3a] sm:$0x1] %v2141
        %v2143 = vsel %vm2125, %v349, 0.0
        %v2144 = vsel %vm2126, %v350, 0.0
        %v2145 = vsel %vm2127, %v351, 0.0
        %v2146 = vsel %vm2128, %v352, 0.0
        %v2147 = vadd.f32 %v2143, %v2144
        %v2148 = vadd.f32 %v2147, %v2145
        %v2149 = vadd.f32 %v2148, %v2146
        %v2150 = vrot.slane %v2149, 4
        %v2151 = vadd.f32 %v2149, %v2150
        %v2152 = vrot.slane %v2151, 2
        %v2153 = vadd.f32 %v2151, %v2152
        %v2154 = vrot.slane %v2153, 1
        %v2155 = vadd.f32 %v2153, %v2154
        %2156 = vst [vmem:[%s262 + $0x7a] sm:$0x1] %v2155
        %vm2157 = vcmp.ge.f32.partialorder %v349, 23.178183
        %vm2158 = vcmp.ge.f32.partialorder %v350, 23.178183
        %vm2159 = vcmp.ge.f32.partialorder %v351, 23.178183
        %vm2160 = vcmp.ge.f32.partialorder %v352, 23.178183
        %v2161 = vsel %vm2157, 1.0, 0.0
        %v2162 = vsel %vm2158, 1.0, 0.0
        %v2163 = vsel %vm2159, 1.0, 0.0
        %v2164 = vsel %vm2160, 1.0, 0.0
        %v2165 = vadd.f32 %v2161, %v2162
        %v2166 = vadd.f32 %v2165, %v2163
        %v2167 = vadd.f32 %v2166, %v2164
        %v2168 = vrot.slane %v2167, 4
        %v2169 = vadd.f32 %v2167, %v2168
        %v2170 = vrot.slane %v2169, 2
        %v2171 = vadd.f32 %v2169, %v2170
        %v2172 = vrot.slane %v2171, 1
        %v2173 = vadd.f32 %v2171, %v2172
        %2174 = vst [vmem:[%s262 + $0x3b] sm:$0x1] %v2173
        %v2175 = vsel %vm2157, %v349, 0.0
        %v2176 = vsel %vm2158, %v350, 0.0
        %v2177 = vsel %vm2159, %v351, 0.0
        %v2178 = vsel %vm2160, %v352, 0.0
        %v2179 = vadd.f32 %v2175, %v2176
        %v2180 = vadd.f32 %v2179, %v2177
        %v2181 = vadd.f32 %v2180, %v2178
        %v2182 = vrot.slane %v2181, 4
        %v2183 = vadd.f32 %v2181, %v2182
        %v2184 = vrot.slane %v2183, 2
        %v2185 = vadd.f32 %v2183, %v2184
        %v2186 = vrot.slane %v2185, 1
        %v2187 = vadd.f32 %v2185, %v2186
        %2188 = vst [vmem:[%s262 + $0x7b] sm:$0x1] %v2187
        %vm2189 = vcmp.ge.f32.partialorder %v349, 27.825594
        %vm2190 = vcmp.ge.f32.partialorder %v350, 27.825594
        %vm2191 = vcmp.ge.f32.partialorder %v351, 27.825594
        %vm2192 = vcmp.ge.f32.partialorder %v352, 27.825594
        %v2193 = vsel %vm2189, 1.0, 0.0
        %v2194 = vsel %vm2190, 1.0, 0.0
        %v2195 = vsel %vm2191, 1.0, 0.0
        %v2196 = vsel %vm2192, 1.0, 0.0
        %v2197 = vadd.f32 %v2193, %v2194
        %v2198 = vadd.f32 %v2197, %v2195
        %v2199 = vadd.f32 %v2198, %v2196
        %v2200 = vrot.slane %v2199, 4
        %v2201 = vadd.f32 %v2199, %v2200
        %v2202 = vrot.slane %v2201, 2
        %v2203 = vadd.f32 %v2201, %v2202
        %v2204 = vrot.slane %v2203, 1
        %v2205 = vadd.f32 %v2203, %v2204
        %2206 = vst [vmem:[%s262 + $0x3c] sm:$0x1] %v2205
        %v2207 = vsel %vm2189, %v349, 0.0
        %v2208 = vsel %vm2190, %v350, 0.0
        %v2209 = vsel %vm2191, %v351, 0.0
        %v2210 = vsel %vm2192, %v352, 0.0
        %v2211 = vadd.f32 %v2207, %v2208
        %v2212 = vadd.f32 %v2211, %v2209
        %v2213 = vadd.f32 %v2212, %v2210
        %v2214 = vrot.slane %v2213, 4
        %v2215 = vadd.f32 %v2213, %v2214
        %v2216 = vrot.slane %v2215, 2
        %v2217 = vadd.f32 %v2215, %v2216
        %v2218 = vrot.slane %v2217, 1
        %v2219 = vadd.f32 %v2217, %v2218
        %2220 = vst [vmem:[%s262 + $0x7c] sm:$0x1] %v2219
        %vm2221 = vcmp.ge.f32.partialorder %v349, 33.40485
        %vm2222 = vcmp.ge.f32.partialorder %v350, 33.40485
        %vm2223 = vcmp.ge.f32.partialorder %v351, 33.40485
        %vm2224 = vcmp.ge.f32.partialorder %v352, 33.40485
        %v2225 = vsel %vm2221, 1.0, 0.0
        %v2226 = vsel %vm2222, 1.0, 0.0
        %v2227 = vsel %vm2223, 1.0, 0.0
        %v2228 = vsel %vm2224, 1.0, 0.0
        %v2229 = vadd.f32 %v2225, %v2226
        %v2230 = vadd.f32 %v2229, %v2227
        %v2231 = vadd.f32 %v2230, %v2228
        %v2232 = vrot.slane %v2231, 4
        %v2233 = vadd.f32 %v2231, %v2232
        %v2234 = vrot.slane %v2233, 2
        %v2235 = vadd.f32 %v2233, %v2234
        %v2236 = vrot.slane %v2235, 1
        %v2237 = vadd.f32 %v2235, %v2236
        %2238 = vst [vmem:[%s262 + $0x3d] sm:$0x1] %v2237
        %v2239 = vsel %vm2221, %v349, 0.0
        %v2240 = vsel %vm2222, %v350, 0.0
        %v2241 = vsel %vm2223, %v351, 0.0
        %v2242 = vsel %vm2224, %v352, 0.0
        %v2243 = vadd.f32 %v2239, %v2240
        %v2244 = vadd.f32 %v2243, %v2241
        %v2245 = vadd.f32 %v2244, %v2242
        %v2246 = vrot.slane %v2245, 4
        %v2247 = vadd.f32 %v2245, %v2246
        %v2248 = vrot.slane %v2247, 2
        %v2249 = vadd.f32 %v2247, %v2248
        %v2250 = vrot.slane %v2249, 1
        %v2251 = vadd.f32 %v2249, %v2250
        %2252 = vst [vmem:[%s262 + $0x7d] sm:$0x1] %v2251
        %vm2253 = vcmp.ge.f32.partialorder %v349, 40.10279
        %vm2254 = vcmp.ge.f32.partialorder %v350, 40.10279
        %vm2255 = vcmp.ge.f32.partialorder %v351, 40.10279
        %vm2256 = vcmp.ge.f32.partialorder %v352, 40.10279
        %v2257 = vsel %vm2253, 1.0, 0.0
        %v2258 = vsel %vm2254, 1.0, 0.0
        %v2259 = vsel %vm2255, 1.0, 0.0
        %v2260 = vsel %vm2256, 1.0, 0.0
        %v2261 = vadd.f32 %v2257, %v2258
        %v2262 = vadd.f32 %v2261, %v2259
        %v2263 = vadd.f32 %v2262, %v2260
        %v2264 = vrot.slane %v2263, 4
        %v2265 = vadd.f32 %v2263, %v2264
        %v2266 = vrot.slane %v2265, 2
        %v2267 = vadd.f32 %v2265, %v2266
        %v2268 = vrot.slane %v2267, 1
        %v2269 = vadd.f32 %v2267, %v2268
        %2270 = vst [vmem:[%s262 + $0x3e] sm:$0x1] %v2269
        %v2271 = vsel %vm2253, %v349, 0.0
        %v2272 = vsel %vm2254, %v350, 0.0
        %v2273 = vsel %vm2255, %v351, 0.0
        %v2274 = vsel %vm2256, %v352, 0.0
        %v2275 = vadd.f32 %v2271, %v2272
        %v2276 = vadd.f32 %v2275, %v2273
        %v2277 = vadd.f32 %v2276, %v2274
        %v2278 = vrot.slane %v2277, 4
        %v2279 = vadd.f32 %v2277, %v2278
        %v2280 = vrot.slane %v2279, 2
        %v2281 = vadd.f32 %v2279, %v2280
        %v2282 = vrot.slane %v2281, 1
        %v2283 = vadd.f32 %v2281, %v2282
        %2284 = vst [vmem:[%s262 + $0x7e] sm:$0x1] %v2283
        %vm2285 = vcmp.ge.f32.partialorder %v349, 48.143723
        %vm2286 = vcmp.ge.f32.partialorder %v350, 48.143723
        %vm2287 = vcmp.ge.f32.partialorder %v351, 48.143723
        %vm2288 = vcmp.ge.f32.partialorder %v352, 48.143723
        %v2289 = vsel %vm2285, 1.0, 0.0
        %v2290 = vsel %vm2286, 1.0, 0.0
        %v2291 = vsel %vm2287, 1.0, 0.0
        %v2292 = vsel %vm2288, 1.0, 0.0
        %v2293 = vadd.f32 %v2289, %v2290
        %v2294 = vadd.f32 %v2293, %v2291
        %v2295 = vadd.f32 %v2294, %v2292
        %v2296 = vrot.slane %v2295, 4
        %v2297 = vadd.f32 %v2295, %v2296
        %v2298 = vrot.slane %v2297, 2
        %v2299 = vadd.f32 %v2297, %v2298
        %v2300 = vrot.slane %v2299, 1
        %v2301 = vadd.f32 %v2299, %v2300
        %2302 = vst [vmem:[%s262 + $0x3f] sm:$0x1] %v2301
        %v2303 = vsel %vm2285, %v349, 0.0
        %v2304 = vsel %vm2286, %v350, 0.0
        %v2305 = vsel %vm2287, %v351, 0.0
        %v2306 = vsel %vm2288, %v352, 0.0
        %v2307 = vadd.f32 %v2303, %v2304
        %v2308 = vadd.f32 %v2307, %v2305
        %v2309 = vadd.f32 %v2308, %v2306
        %v2310 = vrot.slane %v2309, 4
        %v2311 = vadd.f32 %v2309, %v2310
        %v2312 = vrot.slane %v2311, 2
        %v2313 = vadd.f32 %v2311, %v2312
        %v2314 = vrot.slane %v2313, 1
        %v2315 = vadd.f32 %v2313, %v2314
        %2316 = vst [vmem:[%s262 + $0x7f] sm:$0x1] %v2315
        %vm2317 = vcmp.ge.f32.partialorder %v349, 57.79693
        %vm2318 = vcmp.ge.f32.partialorder %v350, 57.79693
        %vm2319 = vcmp.ge.f32.partialorder %v351, 57.79693
        %vm2320 = vcmp.ge.f32.partialorder %v352, 57.79693
        %v2321 = vsel %vm2317, 1.0, 0.0
        %v2322 = vsel %vm2318, 1.0, 0.0
        %v2323 = vsel %vm2319, 1.0, 0.0
        %v2324 = vsel %vm2320, 1.0, 0.0
        %v2325 = vadd.f32 %v2321, %v2322
        %v2326 = vadd.f32 %v2325, %v2323
        %v2327 = vadd.f32 %v2326, %v2324
        %v2328 = vrot.slane %v2327, 4
        %v2329 = vadd.f32 %v2327, %v2328
        %v2330 = vrot.slane %v2329, 2
        %v2331 = vadd.f32 %v2329, %v2330
        %v2332 = vrot.slane %v2331, 1
        %v2333 = vadd.f32 %v2331, %v2332
        %2334 = vst [vmem:[%s262 + $0x40] sm:$0x1] %v2333
        %v2335 = vsel %vm2317, %v349, 0.0
        %v2336 = vsel %vm2318, %v350, 0.0
        %v2337 = vsel %vm2319, %v351, 0.0
        %v2338 = vsel %vm2320, %v352, 0.0
        %v2339 = vadd.f32 %v2335, %v2336
        %v2340 = vadd.f32 %v2339, %v2337
        %v2341 = vadd.f32 %v2340, %v2338
        %v2342 = vrot.slane %v2341, 4
        %v2343 = vadd.f32 %v2341, %v2342
        %v2344 = vrot.slane %v2343, 2
        %v2345 = vadd.f32 %v2343, %v2344
        %v2346 = vrot.slane %v2345, 1
        %v2347 = vadd.f32 %v2345, %v2346
        %2348 = vst [vmem:[%s262 + $0x80] sm:$0x1] %v2347
        %vm2349 = vcmp.ge.f32.partialorder %v349, 69.38568
        %vm2350 = vcmp.ge.f32.partialorder %v350, 69.38568
        %vm2351 = vcmp.ge.f32.partialorder %v351, 69.38568
        %vm2352 = vcmp.ge.f32.partialorder %v352, 69.38568
        %v2353 = vsel %vm2349, 1.0, 0.0
        %v2354 = vsel %vm2350, 1.0, 0.0
        %v2355 = vsel %vm2351, 1.0, 0.0
        %v2356 = vsel %vm2352, 1.0, 0.0
        %v2357 = vadd.f32 %v2353, %v2354
        %v2358 = vadd.f32 %v2357, %v2355
        %v2359 = vadd.f32 %v2358, %v2356
        %v2360 = vrot.slane %v2359, 4
        %v2361 = vadd.f32 %v2359, %v2360
        %v2362 = vrot.slane %v2361, 2
        %v2363 = vadd.f32 %v2361, %v2362
        %v2364 = vrot.slane %v2363, 1
        %v2365 = vadd.f32 %v2363, %v2364
        %2366 = vst [vmem:[%s262 + $0x41] sm:$0x1] %v2365
        %v2367 = vsel %vm2349, %v349, 0.0
        %v2368 = vsel %vm2350, %v350, 0.0
        %v2369 = vsel %vm2351, %v351, 0.0
        %v2370 = vsel %vm2352, %v352, 0.0
        %v2371 = vadd.f32 %v2367, %v2368
        %v2372 = vadd.f32 %v2371, %v2369
        %v2373 = vadd.f32 %v2372, %v2370
        %v2374 = vrot.slane %v2373, 4
        %v2375 = vadd.f32 %v2373, %v2374
        %v2376 = vrot.slane %v2375, 2
        %v2377 = vadd.f32 %v2375, %v2376
        %v2378 = vrot.slane %v2377, 1
        %v2379 = vadd.f32 %v2377, %v2378
        %2380 = vst [vmem:[%s262 + $0x81] sm:$0x1] %v2379
        %vm2381 = vcmp.ge.f32.partialorder %v349, 83.298065
        %vm2382 = vcmp.ge.f32.partialorder %v350, 83.298065
        %vm2383 = vcmp.ge.f32.partialorder %v351, 83.298065
        %vm2384 = vcmp.ge.f32.partialorder %v352, 83.298065
        %v2385 = vsel %vm2381, 1.0, 0.0
        %v2386 = vsel %vm2382, 1.0, 0.0
        %v2387 = vsel %vm2383, 1.0, 0.0
        %v2388 = vsel %vm2384, 1.0, 0.0
        %v2389 = vadd.f32 %v2385, %v2386
        %v2390 = vadd.f32 %v2389, %v2387
        %v2391 = vadd.f32 %v2390, %v2388
        %v2392 = vrot.slane %v2391, 4
        %v2393 = vadd.f32 %v2391, %v2392
        %v2394 = vrot.slane %v2393, 2
        %v2395 = vadd.f32 %v2393, %v2394
        %v2396 = vrot.slane %v2395, 1
        %v2397 = vadd.f32 %v2395, %v2396
        %2398 = vst [vmem:[%s262 + $0x42] sm:$0x1] %v2397
        %v2399 = vsel %vm2381, %v349, 0.0
        %v2400 = vsel %vm2382, %v350, 0.0
        %v2401 = vsel %vm2383, %v351, 0.0
        %v2402 = vsel %vm2384, %v352, 0.0
        %v2403 = vadd.f32 %v2399, %v2400
        %v2404 = vadd.f32 %v2403, %v2401
        %v2405 = vadd.f32 %v2404, %v2402
        %v2406 = vrot.slane %v2405, 4
        %v2407 = vadd.f32 %v2405, %v2406
        %v2408 = vrot.slane %v2407, 2
        %v2409 = vadd.f32 %v2407, %v2408
        %v2410 = vrot.slane %v2409, 1
        %v2411 = vadd.f32 %v2409, %v2410
        %2412 = vst [vmem:[%s262 + $0x82] sm:$0x1] %v2411
        %vm2413 = vcmp.ge.f32.partialorder %v349, 100.0
        %vm2414 = vcmp.ge.f32.partialorder %v350, 100.0
        %vm2415 = vcmp.ge.f32.partialorder %v351, 100.0
        %vm2416 = vcmp.ge.f32.partialorder %v352, 100.0
        %v2417 = vsel %vm2413, 1.0, 0.0
        %v2418 = vsel %vm2414, 1.0, 0.0
        %v2419 = vsel %vm2415, 1.0, 0.0
        %v2420 = vsel %vm2416, 1.0, 0.0
        %v2421 = vadd.f32 %v2417, %v2418
        %v2422 = vadd.f32 %v2421, %v2419
        %v2423 = vadd.f32 %v2422, %v2420
        %v2424 = vrot.slane %v2423, 4
        %v2425 = vadd.f32 %v2423, %v2424
        %v2426 = vrot.slane %v2425, 2
        %v2427 = vadd.f32 %v2425, %v2426
        %v2428 = vrot.slane %v2427, 1
        %v2429 = vadd.f32 %v2427, %v2428
        %2430 = vst [vmem:[%s262 + $0x43] sm:$0x1] %v2429
        %v2431 = vsel %vm2413, %v349, 0.0
        %v2432 = vsel %vm2414, %v350, 0.0
        %v2433 = vsel %vm2415, %v351, 0.0
        %v2434 = vsel %vm2416, %v352, 0.0
        %v2435 = vadd.f32 %v2431, %v2432
        %v2436 = vadd.f32 %v2435, %v2433
        %v2437 = vadd.f32 %v2436, %v2434
        %v2438 = vrot.slane %v2437, 4
        %v2439 = vadd.f32 %v2437, %v2438
        %v2440 = vrot.slane %v2439, 2
        %v2441 = vadd.f32 %v2439, %v2440
        %v2442 = vrot.slane %v2441, 1
        %v2443 = vadd.f32 %v2441, %v2442
        %2444 = vst [vmem:[%s262 + $0x83] sm:$0x1] %v2443
        %p2445 = scmp.lt.s32.totalorder %s20, 3
        %s2446 = scalar_select %p2445, %s20, 3
        %s2447 = smul.addr %s2446, 17
        %s2448 = smul.addr %s2447, 8
        %s2449 = scalar_lea.vmem %s3, %s2448
        // Predicated region
        $region45: #{balance_cross_entropy_loss.1} parent=31 // pred_check
          %p2450 = pneg %p116
        $region46: #{balance_cross_entropy_loss.1} parent=31 // pred_check_branch
          %2452 = sbr.rel (%p2450) target = $region48
        $region47: #{balance_cross_entropy_loss.1} parent=31 // pred_region
          _
        $region48: #{balance_cross_entropy_loss.1} parent=31 // pred_fallthru
          _
      $region32: #{balance_cross_entropy_loss.1} parent=5 // pred_fallthru
        _
      %p2453 = scmp.le.s32.totalorder 2, %s15
      // Predicated region
      $region49: #{balance_cross_entropy_loss.1} parent=5 // pred_check
        %p2454 = pneg %p2453
      $region50: #{balance_cross_entropy_loss.1} parent=5 // pred_check_branch
        %2456 = sbr.rel (%p2454) target = $region52
      $region51: #{balance_cross_entropy_loss.1} parent=5 // pred_region
        %s2457 = ssub.s32 %s15, 2
        // Predicated region
        $region53: #{balance_cross_entropy_loss.1} parent=51 // pred_check
          %p2458 = pneg %p122
        $region54: #{balance_cross_entropy_loss.1} parent=51 // pred_check_branch
          %2460 = sbr.rel (%p2458) target = $region56
        $region55: #{balance_cross_entropy_loss.1} parent=51 // pred_region
          %p2461 = scmp.lt.s32.totalorder %s21, 3
          %s2462 = scalar_select %p2461, %s21, 3
          %s2463 = smul.addr %s2462, 17
          %s2464 = smul.addr %s2463, 8
          %s2465 = scalar_lea.vmem %s3, %s2464
        $region56: #{balance_cross_entropy_loss.1} parent=51 // pred_fallthru
          _
      $region52: #{balance_cross_entropy_loss.1} parent=5 // pred_fallthru
        _
    $region6: #{balance_cross_entropy_loss.1} parent=1 // loop_footer
      %s19 = sadd.s32 1, %s15
    $region7: #{balance_cross_entropy_loss.1} parent=1 // loop_footer_branch
      %14 = sbr.rel target = $region3
    $region8: #{balance_cross_entropy_loss.1} parent=1 // loop_exit
      _
    %2466 = vsyncpa [#allocation3], 1
    %s2467 = scalar_lea.sflag [#allocation3], 1
    %2468 = vsyncpa %s2467, 1
    %2469 = vsyncpa [#allocation5], 1
    %s2470 = scalar_lea.sflag [#allocation5], 1
    %2471 = vsyncpa %s2470, 1

</llo_original>
